<compile_context>
chip_gen: v7x
topology: tpu7x:2x2x1
jax: 0.10.0
libtpu: 0.0.40
codegen_flags: <defaults>
</compile_context>

<pallas_src>
import functools

import jax
import jax.numpy as jnp
from jax import lax
from jax.experimental import pallas as pl
from jax.experimental.pallas import tpu as pltpu

BN_EPS = 1e-5      # PyTorch BatchNorm2d default eps
LANE = 128         # TPU lane width: keep stored last dims multiples of this


def _round_up(x, m):
    return (x + m - 1) // m * m


# ---------------------------------------------------------------------------
# The single fused Pallas kernel
# ---------------------------------------------------------------------------
def _disc_kernel(*refs, plan, batch, num_outputs):
    """Whole Discriminator forward in one kernel.

    refs = (x, <per-layer operands...>, f_enc_out[, f_dec_out])

    Per-layer operands (order fixed by `plan`):
      W                       (in_feat, out_feat) bf16  -- conv folded to matmul
      [P, PT, gamma_b, beta_b]                          -- only for BN layers
         P  (HWC, C) bf16 : per-channel pooling (channel sums via the MXU)
         PT (C, HWC) bf16 : broadcast per-channel values back to HWC layout
         gamma_b / beta_b (1, HWC) f32 : affine params pre-broadcast on host
    """
    out_refs = refs[-num_outputs:]
    in_refs = refs[:-num_outputs]

    idx = 0
    a = in_refs[idx][...]                         # (B, in_feat) bf16
    idx += 1
    for lyr in plan:
        w = in_refs[idx][...]
        idx += 1
        # conv / conv-transpose layer == one MXU matmul (bf16 in, f32 accum)
        y = jnp.dot(a, w, preferred_element_type=jnp.float32)

        if lyr["bn"]:
            p = in_refs[idx][...]
            pt = in_refs[idx + 1][...]
            gamma_b = in_refs[idx + 2][...]
            beta_b = in_refs[idx + 3][...]
            idx += 4
            inv_n = 1.0 / float(batch * lyr["hw"])
            # per-channel mean over (N, H, W)  (training-mode BatchNorm2d)
            s1 = jnp.sum(jnp.dot(y.astype(jnp.bfloat16), p,
                                 preferred_element_type=jnp.float32),
                         axis=0, keepdims=True)                      # (1, C)
            mean_b = jnp.dot((s1 * inv_n).astype(jnp.bfloat16), pt,
                             preferred_element_type=jnp.float32)     # (1, HWC)
            d = y - mean_b
            # biased variance, as PyTorch uses for normalization in training
            s2 = jnp.sum(jnp.dot((d * d).astype(jnp.bfloat16), p,
                                 preferred_element_type=jnp.float32),
                         axis=0, keepdims=True)                      # (1, C)
            inv_std = lax.rsqrt(s2 * inv_n + BN_EPS)
            inv_b = jnp.dot(inv_std.astype(jnp.bfloat16), pt,
                            preferred_element_type=jnp.float32)      # (1, HWC)
            y = d * inv_b * gamma_b + beta_b

        act = lyr["act"]
        if act == "leaky":
            y = jnp.where(y > 0, y, 0.2 * y)       # LeakyReLU(0.2)
        elif act == "relu":
            y = jnp.maximum(y, 0.0)
        elif act == "tanh":
            y = jnp.tanh(y)

        if lyr["emit"] is not None:
            o = out_refs[lyr["emit"]]
            o[...] = y.astype(o.dtype)

        a = y.astype(jnp.bfloat16)                 # feed next layer's matmul


# ---------------------------------------------------------------------------
# Host-side: faithful layer structure + parameter init (PyTorch init scheme)
# ---------------------------------------------------------------------------
def make_layer_defs(cfg):
    """Re-create the Encoder / Decoder layer structure of the PyTorch module."""
    isize, nc = cfg["input_size"], cfg["n_channel"]
    ndf, ngf = cfg["ndf"], cfg["ngf"]
    k_enc, k_dec = cfg["output_disc"], cfg["z_dim"]
    assert isize % 16 == 0, "isize has to be a multiple of 16"

    enc = [dict(kind="conv", cin=nc, cout=ndf, k=4, s=2, p=1, bn=False, act="leaky")]
    csize, cndf = isize // 2, ndf
    while csize > 4:
        enc.append(dict(kind="conv", cin=cndf, cout=2 * cndf, k=4, s=2, p=1,
                        bn=True, act="leaky"))
        cndf, csize = 2 * cndf, csize // 2
    enc.append(dict(kind="conv", cin=cndf, cout=k_enc, k=4, s=1, p=0,
                    bn=False, act="none"))

    cngf, tisize = ngf // 2, 4
    while tisize != isize:
        cngf, tisize = 2 * cngf, 2 * tisize
    dec = [dict(kind="convT", cin=k_dec, cout=cngf, k=4, s=1, p=0,
                bn=True, act="relu")]
    csize = 4
    while csize < isize // 2:
        dec.append(dict(kind="convT", cin=cngf, cout=cngf // 2, k=4, s=2, p=1,
                        bn=True, act="relu"))
        cngf, csize = cngf // 2, 2 * csize
    dec.append(dict(kind="convT", cin=cngf, cout=nc, k=4, s=2, p=1,
                    bn=False, act="tanh"))
    return enc, dec


def init_params(key, cfg):
    """Conv weights ~ N(0, 0.02); BN gamma ~ N(1, 0.02), beta = 0."""
    enc_defs, dec_defs = make_layer_defs(cfg)
    params = {"enc": [], "dec": []}
    for name, defs in (("enc", enc_defs), ("dec", dec_defs)):
        for d in defs:
            key, kw, kg = jax.random.split(key, 3)
            if d["kind"] == "conv":
                wshape = (d["cout"], d["cin"], d["k"], d["k"])      # Conv2d
            else:
                wshape = (d["cin"], d["cout"], d["k"], d["k"])      # ConvTranspose2d
            w = 0.02 * jax.random.normal(kw, wshape, jnp.float32)
            if d["bn"]:
                gamma = 1.0 + 0.02 * jax.random.normal(kg, (d["cout"],), jnp.float32)
                beta = jnp.zeros((d["cout"],), jnp.float32)
            else:
                gamma = beta = None
            params[name].append(dict(w=w, gamma=gamma, beta=beta))
    return params


# ---------------------------------------------------------------------------
# Host-side: fold each conv layer into a dense matmul over HWC-flat activations
# ---------------------------------------------------------------------------
def _unroll_conv(w, ih, iw, s, p, transposed):
    """Return W_eff (IH*IW*Cin, OH*OW*Cout) with  y_flat = x_flat @ W_eff ."""
    if transposed:
        cin, cout, k, _ = w.shape
        # ConvTranspose2d == conv with lhs dilation, flipped kernel, swapped io
        w_conv = jnp.flip(w, axis=(2, 3)).transpose(1, 0, 2, 3)      # (Cout,Cin,K,K)
        lhs_dil, strides, pad = (s, s), (1, 1), k - 1 - p
        oh, ow = (ih - 1) * s - 2 * p + k, (iw - 1) * s - 2 * p + k
    else:
        cout, cin, k, _ = w.shape
        w_conv = w
        lhs_dil, strides, pad = (1, 1), (s, s), p
        oh = (ih + 2 * p - k) // s + 1
        ow = (iw + 2 * p - k) // s + 1
    w_hwio = w_conv.transpose(2, 3, 1, 0)                            # (K,K,Cin,Cout)

    def flat_conv(x_flat):
        x = x_flat.reshape(1, ih, iw, cin)
        y = lax.conv_general_dilated(
            x, w_hwio, window_strides=strides,
            padding=[(pad, pad), (pad, pad)], lhs_dilation=lhs_dil,
            dimension_numbers=("NHWC", "HWIO", "NHWC"),
            precision=lax.Precision.HIGHEST)
        return y.reshape(-1)

    eye = jnp.eye(ih * iw * cin, dtype=jnp.float32)
    w_eff = jax.vmap(flat_conv)(eye)        # each entry is exactly one weight
    return w_eff, (oh, ow, cout)


def build_kernel_operands(params, cfg):
    """Build the static plan + flat operand list consumed by the fused kernel."""
    enc_defs, dec_defs = make_layer_defs(cfg)
    isize = cfg["input_size"]
    zp = _round_up(max(cfg["output_disc"], 1), LANE)   # lane-dense latent width
    plan, ops = [], []

    def add_layer(d, p, ih, iw, pad_in=0, pad_out=0, emit=None):
        w_eff, (oh, ow, cout) = _unroll_conv(
            p["w"], ih, iw, d["s"], d["p"], transposed=(d["kind"] == "convT"))
        if pad_in:
            w_eff = jnp.pad(w_eff, ((0, pad_in), (0, 0)))
        if pad_out:
            w_eff = jnp.pad(w_eff, ((0, 0), (0, pad_out)))
        ops.append(w_eff.astype(jnp.bfloat16))
        if d["bn"]:
            hwc = oh * ow * cout
            pool = (jnp.arange(hwc)[:, None] % cout
                    == jnp.arange(cout)[None, :])
            ops.append(pool.astype(jnp.bfloat16))                    # P  (HWC,C)
            ops.append(pool.T.astype(jnp.bfloat16))                  # PT (C,HWC)
            ops.append(jnp.tile(p["gamma"], oh * ow)[None, :].astype(jnp.float32))
            ops.append(jnp.tile(p["beta"], oh * ow)[None, :].astype(jnp.float32))
        plan.append(dict(bn=d["bn"], act=d["act"], hw=oh * ow, emit=emit))
        return oh, ow

    # ---- Encoder ----
    h = w = isize
    for li, (d, p) in enumerate(zip(enc_defs, params["enc"])):
        last = li == len(enc_defs) - 1
        h, w = add_layer(d, p, h, w,
                         pad_out=(zp - d["cout"]) if last else 0,
                         emit=0 if last else None)
    n_outputs = 1

    # ---- Decoder (optional) ----
    if cfg["output_decoder"]:
        assert cfg["z_dim"] == cfg["output_disc"], \
            "decoder path requires z_dim == output_disc"
        h = w = 1
        for li, (d, p) in enumerate(zip(dec_defs, params["dec"])):
            first = li == 0
            last = li == len(dec_defs) - 1
            h, w = add_layer(d, p, h, w,
                             pad_in=(zp - d["cin"]) if first else 0,
                             emit=1 if last else None)
        n_outputs = 2

    return tuple(plan), tuple(ops), zp, n_outputs


# ---------------------------------------------------------------------------
# Forward wrapper: one pallas_call for the whole module
# ---------------------------------------------------------------------------
def discriminator_forward(x_nchw, plan, operands, cfg, zp, n_outputs):
    b = x_nchw.shape[0]
    isize, nc = cfg["input_size"], cfg["n_channel"]

    # NCHW -> HWC-flattened rows (channels-last keeps C on the lane axis)
    x_flat = jnp.transpose(x_nchw, (0, 2, 3, 1)).reshape(b, -1).astype(jnp.bfloat16)

    out_shapes = [jax.ShapeDtypeStruct((b, zp), jnp.float32)]
    if n_outputs == 2:
        out_shapes.append(jax.ShapeDtypeStruct((b, isize * isize * nc), jnp.float32))

    kernel = functools.partial(_disc_kernel, plan=plan, batch=b,
                               num_outputs=n_outputs)
    vmem = pl.BlockSpec(memory_space=pltpu.MemorySpace.VMEM)
    outs = pl.pallas_call(
        kernel,
        out_shape=tuple(out_shapes),
        in_specs=[vmem] * (1 + len(operands)),
        out_specs=tuple([vmem] * n_outputs),
    )(x_flat, *operands)

    f_enc = outs[0][:, :cfg["output_disc"]]
    if n_outputs == 1:
        return f_enc
    f_dec = outs[1].reshape(b, isize, isize, nc).transpose(0, 3, 1, 2)
    return f_enc, f_dec


# ---------------------------------------------------------------------------
if __name__ == "__main__":
    cfg = dict(input_size=16, n_channel=4, z_dim=16, output_disc=16,
               ndf=8, ngf=8, output_decoder=True)
    B = 2

    key = jax.random.PRNGKey(0)
    kx, kp = jax.random.split(key)
    x = jax.random.normal(kx, (B, cfg["n_channel"], cfg["input_size"],
                               cfg["input_size"]), jnp.float32)
    params = init_params(kp, cfg)

    # Full path: encoder + decoder in one fused Pallas kernel
    plan, ops, zp, n_out = build_kernel_operands(params, cfg)
    f_enc, f_dec = discriminator_forward(x, plan, ops, cfg, zp, n_out)
    jax.block_until_ready((f_enc, f_dec))

    assert f_enc.shape == (B, cfg["output_disc"]), f_enc.shape
    assert f_dec.shape == (B, cfg["n_channel"], cfg["input_size"],
                           cfg["input_size"]), f_dec.shape
    assert bool(jnp.all(jnp.isfinite(f_enc))) and bool(jnp.all(jnp.isfinite(f_dec)))

    # Encoder-only path (output_decoder=False) must agree with the fused run.
    cfg2 = dict(cfg, output_decoder=False)
    plan2, ops2, zp2, n_out2 = build_kernel_operands(params, cfg2)
    f_enc_only = discriminator_forward(x, plan2, ops2, cfg2, zp2, n_out2)
    jax.block_until_ready(f_enc_only)
    assert f_enc_only.shape == (B, cfg["output_disc"]), f_enc_only.shape
    assert bool(jnp.allclose(f_enc_only, f_enc, atol=5e-2, rtol=5e-2))

    print("KERNEL_OK")
</pallas_src>

<mosaic_0001>
module attributes {stable_mosaic.version = 11 : i64} {
  func.func @_disc_kernel(%arg0: memref<2x1024xbf16, #tpu.memory_space<vmem>>, %arg1: memref<1024x512xbf16, #tpu.memory_space<vmem>>, %arg2: memref<512x256xbf16, #tpu.memory_space<vmem>>, %arg3: memref<256x16xbf16, #tpu.memory_space<vmem>>, %arg4: memref<16x256xbf16, #tpu.memory_space<vmem>>, %arg5: memref<1x256xf32, #tpu.memory_space<vmem>>, %arg6: memref<1x256xf32, #tpu.memory_space<vmem>>, %arg7: memref<256x128xbf16, #tpu.memory_space<vmem>>, %arg8: memref<128x256xbf16, #tpu.memory_space<vmem>>, %arg9: memref<256x16xbf16, #tpu.memory_space<vmem>>, %arg10: memref<16x256xbf16, #tpu.memory_space<vmem>>, %arg11: memref<1x256xf32, #tpu.memory_space<vmem>>, %arg12: memref<1x256xf32, #tpu.memory_space<vmem>>, %arg13: memref<256x512xbf16, #tpu.memory_space<vmem>>, %arg14: memref<512x8xbf16, #tpu.memory_space<vmem>>, %arg15: memref<8x512xbf16, #tpu.memory_space<vmem>>, %arg16: memref<1x512xf32, #tpu.memory_space<vmem>>, %arg17: memref<1x512xf32, #tpu.memory_space<vmem>>, %arg18: memref<512x1024xbf16, #tpu.memory_space<vmem>>, %arg19: memref<2x128xf32, #tpu.memory_space<vmem>>, %arg20: memref<2x1024xf32, #tpu.memory_space<vmem>>) attributes {dimension_semantics = [], scalar_prefetch = 0 : i64, scratch_operands = 0 : i64, tpu.core_type = #tpu.core_type<tc>} {
    %c0 = arith.constant 0 : index
    %c0_0 = arith.constant 0 : index
    %0 = vector.load %arg0[%c0, %c0_0] : memref<2x1024xbf16, #tpu.memory_space<vmem>>, vector<2x1024xbf16>
    %c0_1 = arith.constant 0 : index
    %c0_2 = arith.constant 0 : index
    %1 = vector.load %arg1[%c0_1, %c0_2] : memref<1024x512xbf16, #tpu.memory_space<vmem>>, vector<1024x512xbf16>
    %cst = arith.constant dense<0.000000e+00> : vector<2x512xf32>
    %2 = tpu.matmul %0, %1, %cst {dimension_numbers = #tpu.dot_dimension_numbers<[1], [0], [0], [1], [0, 0, 1, 1], [], []>} : vector<2x1024xbf16>, vector<1024x512xbf16>, vector<2x512xf32> -> vector<2x512xf32>
    %cst_3 = arith.constant 0.000000e+00 : f32
    %3 = vector.broadcast %cst_3 : f32 to vector<2x512xf32>
    %4 = arith.cmpf ogt, %2, %3 : vector<2x512xf32>
    %cst_4 = arith.constant 2.000000e-01 : f32
    %5 = vector.broadcast %cst_4 : f32 to vector<2x512xf32>
    %6 = arith.mulf %5, %2 : vector<2x512xf32>
    %7 = arith.select %4, %2, %6 : vector<2x512xi1>, vector<2x512xf32>
    %8 = arith.truncf %7 : vector<2x512xf32> to vector<2x512xbf16>
    %c0_5 = arith.constant 0 : index
    %c0_6 = arith.constant 0 : index
    %9 = vector.load %arg2[%c0_5, %c0_6] : memref<512x256xbf16, #tpu.memory_space<vmem>>, vector<512x256xbf16>
    %cst_7 = arith.constant dense<0.000000e+00> : vector<2x256xf32>
    %10 = tpu.matmul %8, %9, %cst_7 {dimension_numbers = #tpu.dot_dimension_numbers<[1], [0], [0], [1], [0, 0, 1, 1], [], []>} : vector<2x512xbf16>, vector<512x256xbf16>, vector<2x256xf32> -> vector<2x256xf32>
    %c0_8 = arith.constant 0 : index
    %c0_9 = arith.constant 0 : index
    %11 = vector.load %arg3[%c0_8, %c0_9] : memref<256x16xbf16, #tpu.memory_space<vmem>>, vector<256x16xbf16>
    %c0_10 = arith.constant 0 : index
    %c0_11 = arith.constant 0 : index
    %12 = vector.load %arg4[%c0_10, %c0_11] : memref<16x256xbf16, #tpu.memory_space<vmem>>, vector<16x256xbf16>
    %c0_12 = arith.constant 0 : index
    %c0_13 = arith.constant 0 : index
    %13 = vector.load %arg5[%c0_12, %c0_13] : memref<1x256xf32, #tpu.memory_space<vmem>>, vector<1x256xf32>
    %c0_14 = arith.constant 0 : index
    %c0_15 = arith.constant 0 : index
    %14 = vector.load %arg6[%c0_14, %c0_15] : memref<1x256xf32, #tpu.memory_space<vmem>>, vector<1x256xf32>
    %15 = arith.truncf %10 : vector<2x256xf32> to vector<2x256xbf16>
    %cst_16 = arith.constant dense<0.000000e+00> : vector<2x16xf32>
    %16 = tpu.matmul %15, %11, %cst_16 {dimension_numbers = #tpu.dot_dimension_numbers<[1], [0], [0], [1], [0, 0, 1, 1], [], []>} : vector<2x256xbf16>, vector<256x16xbf16>, vector<2x16xf32> -> vector<2x16xf32>
    %cst_17 = arith.constant dense<0.000000e+00> : vector<16xf32>
    %17 = vector.multi_reduction <add>, %16, %cst_17 [0] : vector<2x16xf32> to vector<16xf32>
    %18 = vector.shape_cast %17 : vector<16xf32> to vector<1x16xf32>
    %cst_18 = arith.constant 3.125000e-02 : f32
    %19 = vector.broadcast %cst_18 : f32 to vector<1x16xf32>
    %20 = arith.mulf %18, %19 : vector<1x16xf32>
    %21 = arith.truncf %20 : vector<1x16xf32> to vector<1x16xbf16>
    %cst_19 = arith.constant dense<0.000000e+00> : vector<1x256xf32>
    %22 = tpu.matmul %21, %12, %cst_19 {dimension_numbers = #tpu.dot_dimension_numbers<[1], [0], [0], [1], [0, 0, 1, 1], [], []>} : vector<1x16xbf16>, vector<16x256xbf16>, vector<1x256xf32> -> vector<1x256xf32>
    %23 = vector.broadcast %22 : vector<1x256xf32> to vector<2x256xf32>
    %24 = arith.subf %10, %23 : vector<2x256xf32>
    %25 = arith.mulf %24, %24 : vector<2x256xf32>
    %26 = arith.truncf %25 : vector<2x256xf32> to vector<2x256xbf16>
    %cst_20 = arith.constant dense<0.000000e+00> : vector<2x16xf32>
    %27 = tpu.matmul %26, %11, %cst_20 {dimension_numbers = #tpu.dot_dimension_numbers<[1], [0], [0], [1], [0, 0, 1, 1], [], []>} : vector<2x256xbf16>, vector<256x16xbf16>, vector<2x16xf32> -> vector<2x16xf32>
    %cst_21 = arith.constant dense<0.000000e+00> : vector<16xf32>
    %28 = vector.multi_reduction <add>, %27, %cst_21 [0] : vector<2x16xf32> to vector<16xf32>
    %29 = vector.shape_cast %28 : vector<16xf32> to vector<1x16xf32>
    %cst_22 = arith.constant 3.125000e-02 : f32
    %30 = vector.broadcast %cst_22 : f32 to vector<1x16xf32>
    %31 = arith.mulf %29, %30 : vector<1x16xf32>
    %cst_23 = arith.constant 9.99999974E-6 : f32
    %32 = vector.broadcast %cst_23 : f32 to vector<1x16xf32>
    %33 = arith.addf %31, %32 : vector<1x16xf32>
    %34 = math.rsqrt %33 : vector<1x16xf32>
    %35 = arith.truncf %34 : vector<1x16xf32> to vector<1x16xbf16>
    %cst_24 = arith.constant dense<0.000000e+00> : vector<1x256xf32>
    %36 = tpu.matmul %35, %12, %cst_24 {dimension_numbers = #tpu.dot_dimension_numbers<[1], [0], [0], [1], [0, 0, 1, 1], [], []>} : vector<1x16xbf16>, vector<16x256xbf16>, vector<1x256xf32> -> vector<1x256xf32>
    %37 = vector.broadcast %36 : vector<1x256xf32> to vector<2x256xf32>
    %38 = arith.mulf %24, %37 : vector<2x256xf32>
    %39 = vector.broadcast %13 : vector<1x256xf32> to vector<2x256xf32>
    %40 = arith.mulf %38, %39 : vector<2x256xf32>
    %41 = vector.broadcast %14 : vector<1x256xf32> to vector<2x256xf32>
    %42 = arith.addf %40, %41 : vector<2x256xf32>
    %cst_25 = arith.constant 0.000000e+00 : f32
    %43 = vector.broadcast %cst_25 : f32 to vector<2x256xf32>
    %44 = arith.cmpf ogt, %42, %43 : vector<2x256xf32>
    %cst_26 = arith.constant 2.000000e-01 : f32
    %45 = vector.broadcast %cst_26 : f32 to vector<2x256xf32>
    %46 = arith.mulf %45, %42 : vector<2x256xf32>
    %47 = arith.select %44, %42, %46 : vector<2x256xi1>, vector<2x256xf32>
    %48 = arith.truncf %47 : vector<2x256xf32> to vector<2x256xbf16>
    %c0_27 = arith.constant 0 : index
    %c0_28 = arith.constant 0 : index
    %49 = vector.load %arg7[%c0_27, %c0_28] : memref<256x128xbf16, #tpu.memory_space<vmem>>, vector<256x128xbf16>
    %cst_29 = arith.constant dense<0.000000e+00> : vector<2x128xf32>
    %50 = tpu.matmul %48, %49, %cst_29 {dimension_numbers = #tpu.dot_dimension_numbers<[1], [0], [0], [1], [0, 0, 1, 1], [], []>} : vector<2x256xbf16>, vector<256x128xbf16>, vector<2x128xf32> -> vector<2x128xf32>
    %c0_30 = arith.constant 0 : index
    %c0_31 = arith.constant 0 : index
    %51 = vector.load %arg19[%c0_30, %c0_31] : memref<2x128xf32, #tpu.memory_space<vmem>>, vector<2x128xf32>
    tpu.vector_store %arg19[%c0_30, %c0_31], %50 {strides = array<i32>} : memref<2x128xf32, #tpu.memory_space<vmem>>, vector<2x128xf32>,
    %52 = arith.truncf %50 : vector<2x128xf32> to vector<2x128xbf16>
    %c0_32 = arith.constant 0 : index
    %c0_33 = arith.constant 0 : index
    %53 = vector.load %arg8[%c0_32, %c0_33] : memref<128x256xbf16, #tpu.memory_space<vmem>>, vector<128x256xbf16>
    %cst_34 = arith.constant dense<0.000000e+00> : vector<2x256xf32>
    %54 = tpu.matmul %52, %53, %cst_34 {dimension_numbers = #tpu.dot_dimension_numbers<[1], [0], [0], [1], [0, 0, 1, 1], [], []>} : vector<2x128xbf16>, vector<128x256xbf16>, vector<2x256xf32> -> vector<2x256xf32>
    %c0_35 = arith.constant 0 : index
    %c0_36 = arith.constant 0 : index
    %55 = vector.load %arg9[%c0_35, %c0_36] : memref<256x16xbf16, #tpu.memory_space<vmem>>, vector<256x16xbf16>
    %c0_37 = arith.constant 0 : index
    %c0_38 = arith.constant 0 : index
    %56 = vector.load %arg10[%c0_37, %c0_38] : memref<16x256xbf16, #tpu.memory_space<vmem>>, vector<16x256xbf16>
    %c0_39 = arith.constant 0 : index
    %c0_40 = arith.constant 0 : index
    %57 = vector.load %arg11[%c0_39, %c0_40] : memref<1x256xf32, #tpu.memory_space<vmem>>, vector<1x256xf32>
    %c0_41 = arith.constant 0 : index
    %c0_42 = arith.constant 0 : index
    %58 = vector.load %arg12[%c0_41, %c0_42] : memref<1x256xf32, #tpu.memory_space<vmem>>, vector<1x256xf32>
    %59 = arith.truncf %54 : vector<2x256xf32> to vector<2x256xbf16>
    %cst_43 = arith.constant dense<0.000000e+00> : vector<2x16xf32>
    %60 = tpu.matmul %59, %55, %cst_43 {dimension_numbers = #tpu.dot_dimension_numbers<[1], [0], [0], [1], [0, 0, 1, 1], [], []>} : vector<2x256xbf16>, vector<256x16xbf16>, vector<2x16xf32> -> vector<2x16xf32>
    %cst_44 = arith.constant dense<0.000000e+00> : vector<16xf32>
    %61 = vector.multi_reduction <add>, %60, %cst_44 [0] : vector<2x16xf32> to vector<16xf32>
    %62 = vector.shape_cast %61 : vector<16xf32> to vector<1x16xf32>
    %cst_45 = arith.constant 3.125000e-02 : f32
    %63 = vector.broadcast %cst_45 : f32 to vector<1x16xf32>
    %64 = arith.mulf %62, %63 : vector<1x16xf32>
    %65 = arith.truncf %64 : vector<1x16xf32> to vector<1x16xbf16>
    %cst_46 = arith.constant dense<0.000000e+00> : vector<1x256xf32>
    %66 = tpu.matmul %65, %56, %cst_46 {dimension_numbers = #tpu.dot_dimension_numbers<[1], [0], [0], [1], [0, 0, 1, 1], [], []>} : vector<1x16xbf16>, vector<16x256xbf16>, vector<1x256xf32> -> vector<1x256xf32>
    %67 = vector.broadcast %66 : vector<1x256xf32> to vector<2x256xf32>
    %68 = arith.subf %54, %67 : vector<2x256xf32>
    %69 = arith.mulf %68, %68 : vector<2x256xf32>
    %70 = arith.truncf %69 : vector<2x256xf32> to vector<2x256xbf16>
    %cst_47 = arith.constant dense<0.000000e+00> : vector<2x16xf32>
    %71 = tpu.matmul %70, %55, %cst_47 {dimension_numbers = #tpu.dot_dimension_numbers<[1], [0], [0], [1], [0, 0, 1, 1], [], []>} : vector<2x256xbf16>, vector<256x16xbf16>, vector<2x16xf32> -> vector<2x16xf32>
    %cst_48 = arith.constant dense<0.000000e+00> : vector<16xf32>
    %72 = vector.multi_reduction <add>, %71, %cst_48 [0] : vector<2x16xf32> to vector<16xf32>
    %73 = vector.shape_cast %72 : vector<16xf32> to vector<1x16xf32>
    %cst_49 = arith.constant 3.125000e-02 : f32
    %74 = vector.broadcast %cst_49 : f32 to vector<1x16xf32>
    %75 = arith.mulf %73, %74 : vector<1x16xf32>
    %cst_50 = arith.constant 9.99999974E-6 : f32
    %76 = vector.broadcast %cst_50 : f32 to vector<1x16xf32>
    %77 = arith.addf %75, %76 : vector<1x16xf32>
    %78 = math.rsqrt %77 : vector<1x16xf32>
    %79 = arith.truncf %78 : vector<1x16xf32> to vector<1x16xbf16>
    %cst_51 = arith.constant dense<0.000000e+00> : vector<1x256xf32>
    %80 = tpu.matmul %79, %56, %cst_51 {dimension_numbers = #tpu.dot_dimension_numbers<[1], [0], [0], [1], [0, 0, 1, 1], [], []>} : vector<1x16xbf16>, vector<16x256xbf16>, vector<1x256xf32> -> vector<1x256xf32>
    %81 = vector.broadcast %80 : vector<1x256xf32> to vector<2x256xf32>
    %82 = arith.mulf %68, %81 : vector<2x256xf32>
    %83 = vector.broadcast %57 : vector<1x256xf32> to vector<2x256xf32>
    %84 = arith.mulf %82, %83 : vector<2x256xf32>
    %85 = vector.broadcast %58 : vector<1x256xf32> to vector<2x256xf32>
    %86 = arith.addf %84, %85 : vector<2x256xf32>
    %cst_52 = arith.constant 0.000000e+00 : f32
    %87 = vector.broadcast %cst_52 : f32 to vector<2x256xf32>
    %88 = arith.maximumf %86, %87 : vector<2x256xf32>
    %89 = arith.truncf %88 : vector<2x256xf32> to vector<2x256xbf16>
    %c0_53 = arith.constant 0 : index
    %c0_54 = arith.constant 0 : index
    %90 = vector.load %arg13[%c0_53, %c0_54] : memref<256x512xbf16, #tpu.memory_space<vmem>>, vector<256x512xbf16>
    %cst_55 = arith.constant dense<0.000000e+00> : vector<2x512xf32>
    %91 = tpu.matmul %89, %90, %cst_55 {dimension_numbers = #tpu.dot_dimension_numbers<[1], [0], [0], [1], [0, 0, 1, 1], [], []>} : vector<2x256xbf16>, vector<256x512xbf16>, vector<2x512xf32> -> vector<2x512xf32>
    %c0_56 = arith.constant 0 : index
    %c0_57 = arith.constant 0 : index
    %92 = vector.load %arg14[%c0_56, %c0_57] : memref<512x8xbf16, #tpu.memory_space<vmem>>, vector<512x8xbf16>
    %c0_58 = arith.constant 0 : index
    %c0_59 = arith.constant 0 : index
    %93 = vector.load %arg15[%c0_58, %c0_59] : memref<8x512xbf16, #tpu.memory_space<vmem>>, vector<8x512xbf16>
    %c0_60 = arith.constant 0 : index
    %c0_61 = arith.constant 0 : index
    %94 = vector.load %arg16[%c0_60, %c0_61] : memref<1x512xf32, #tpu.memory_space<vmem>>, vector<1x512xf32>
    %c0_62 = arith.constant 0 : index
    %c0_63 = arith.constant 0 : index
    %95 = vector.load %arg17[%c0_62, %c0_63] : memref<1x512xf32, #tpu.memory_space<vmem>>, vector<1x512xf32>
    %96 = arith.truncf %91 : vector<2x512xf32> to vector<2x512xbf16>
    %cst_64 = arith.constant dense<0.000000e+00> : vector<2x8xf32>
    %97 = tpu.matmul %96, %92, %cst_64 {dimension_numbers = #tpu.dot_dimension_numbers<[1], [0], [0], [1], [0, 0, 1, 1], [], []>} : vector<2x512xbf16>, vector<512x8xbf16>, vector<2x8xf32> -> vector<2x8xf32>
    %cst_65 = arith.constant dense<0.000000e+00> : vector<8xf32>
    %98 = vector.multi_reduction <add>, %97, %cst_65 [0] : vector<2x8xf32> to vector<8xf32>
    %99 = vector.shape_cast %98 : vector<8xf32> to vector<1x8xf32>
    %cst_66 = arith.constant 7.812500e-03 : f32
    %100 = vector.broadcast %cst_66 : f32 to vector<1x8xf32>
    %101 = arith.mulf %99, %100 : vector<1x8xf32>
    %102 = arith.truncf %101 : vector<1x8xf32> to vector<1x8xbf16>
    %cst_67 = arith.constant dense<0.000000e+00> : vector<1x512xf32>
    %103 = tpu.matmul %102, %93, %cst_67 {dimension_numbers = #tpu.dot_dimension_numbers<[1], [0], [0], [1], [0, 0, 1, 1], [], []>} : vector<1x8xbf16>, vector<8x512xbf16>, vector<1x512xf32> -> vector<1x512xf32>
    %104 = vector.broadcast %103 : vector<1x512xf32> to vector<2x512xf32>
    %105 = arith.subf %91, %104 : vector<2x512xf32>
    %106 = arith.mulf %105, %105 : vector<2x512xf32>
    %107 = arith.truncf %106 : vector<2x512xf32> to vector<2x512xbf16>
    %cst_68 = arith.constant dense<0.000000e+00> : vector<2x8xf32>
    %108 = tpu.matmul %107, %92, %cst_68 {dimension_numbers = #tpu.dot_dimension_numbers<[1], [0], [0], [1], [0, 0, 1, 1], [], []>} : vector<2x512xbf16>, vector<512x8xbf16>, vector<2x8xf32> -> vector<2x8xf32>
    %cst_69 = arith.constant dense<0.000000e+00> : vector<8xf32>
    %109 = vector.multi_reduction <add>, %108, %cst_69 [0] : vector<2x8xf32> to vector<8xf32>
    %110 = vector.shape_cast %109 : vector<8xf32> to vector<1x8xf32>
    %cst_70 = arith.constant 7.812500e-03 : f32
    %111 = vector.broadcast %cst_70 : f32 to vector<1x8xf32>
    %112 = arith.mulf %110, %111 : vector<1x8xf32>
    %cst_71 = arith.constant 9.99999974E-6 : f32
    %113 = vector.broadcast %cst_71 : f32 to vector<1x8xf32>
    %114 = arith.addf %112, %113 : vector<1x8xf32>
    %115 = math.rsqrt %114 : vector<1x8xf32>
    %116 = arith.truncf %115 : vector<1x8xf32> to vector<1x8xbf16>
    %cst_72 = arith.constant dense<0.000000e+00> : vector<1x512xf32>
    %117 = tpu.matmul %116, %93, %cst_72 {dimension_numbers = #tpu.dot_dimension_numbers<[1], [0], [0], [1], [0, 0, 1, 1], [], []>} : vector<1x8xbf16>, vector<8x512xbf16>, vector<1x512xf32> -> vector<1x512xf32>
    %118 = vector.broadcast %117 : vector<1x512xf32> to vector<2x512xf32>
    %119 = arith.mulf %105, %118 : vector<2x512xf32>
    %120 = vector.broadcast %94 : vector<1x512xf32> to vector<2x512xf32>
    %121 = arith.mulf %119, %120 : vector<2x512xf32>
    %122 = vector.broadcast %95 : vector<1x512xf32> to vector<2x512xf32>
    %123 = arith.addf %121, %122 : vector<2x512xf32>
    %cst_73 = arith.constant 0.000000e+00 : f32
    %124 = vector.broadcast %cst_73 : f32 to vector<2x512xf32>
    %125 = arith.maximumf %123, %124 : vector<2x512xf32>
    %126 = arith.truncf %125 : vector<2x512xf32> to vector<2x512xbf16>
    %c0_74 = arith.constant 0 : index
    %c0_75 = arith.constant 0 : index
    %127 = vector.load %arg18[%c0_74, %c0_75] : memref<512x1024xbf16, #tpu.memory_space<vmem>>, vector<512x1024xbf16>
    %cst_76 = arith.constant dense<0.000000e+00> : vector<2x1024xf32>
    %128 = tpu.matmul %126, %127, %cst_76 {dimension_numbers = #tpu.dot_dimension_numbers<[1], [0], [0], [1], [0, 0, 1, 1], [], []>} : vector<2x512xbf16>, vector<512x1024xbf16>, vector<2x1024xf32> -> vector<2x1024xf32>
    %129 = math.tanh %128 : vector<2x1024xf32>
    %c0_77 = arith.constant 0 : index
    %c0_78 = arith.constant 0 : index
    %130 = vector.load %arg20[%c0_77, %c0_78] : memref<2x1024xf32, #tpu.memory_space<vmem>>, vector<2x1024xf32>
    tpu.vector_store %arg20[%c0_77, %c0_78], %129 {strides = array<i32>} : memref<2x1024xf32, #tpu.memory_space<vmem>>, vector<2x1024xf32>,
    return
  }
}

</mosaic_0001>

<llo_original>
// kernel: tpu_custom_call.1
$region0: #{tpu_custom_call.1}
  #allocation0 [shape = 'u32[]', space=smem, size = 0x4, offset = 0x4, fixed_abs, tag = 'smem constant byte address 0x4 - core index']
  #allocation1 [shape = 'u32[144,128]{1,0:T(1,128)}', space=vmem, size = 0x12000, scoped, tag = 'internal scratch']
  %s0 = inlined_call_operand.hbm [shape: bf16[2,1024], index: 0, kind: input, shape index: {}]
  %s1 = inlined_call_operand.hbm [shape: bf16[1024,512], index: 1, kind: input, shape index: {}]
  %s2 = inlined_call_operand.vmem [shape: bf16[512,256], index: 2, kind: input, shape index: {}]
  %s3 = inlined_call_operand.vmem [shape: bf16[256,16], index: 3, kind: input, shape index: {}]
  %s4 = inlined_call_operand.vmem [shape: bf16[16,256], index: 4, kind: input, shape index: {}]
  %s5 = inlined_call_operand.hbm [shape: f32[1,256], index: 5, kind: input, shape index: {}]
  %s6 = inlined_call_operand.hbm [shape: f32[1,256], index: 6, kind: input, shape index: {}]
  %s7 = inlined_call_operand.hbm [shape: bf16[256,128], index: 7, kind: input, shape index: {}]
  %s8 = inlined_call_operand.hbm [shape: bf16[128,256], index: 8, kind: input, shape index: {}]
  %s9 = inlined_call_operand.vmem [shape: bf16[256,16], index: 9, kind: input, shape index: {}]
  %s10 = inlined_call_operand.vmem [shape: bf16[16,256], index: 10, kind: input, shape index: {}]
  %s11 = inlined_call_operand.hbm [shape: f32[1,256], index: 11, kind: input, shape index: {}]
  %s12 = inlined_call_operand.vmem [shape: f32[1,256], index: 12, kind: input, shape index: {}]
  %s13 = inlined_call_operand.hbm [shape: bf16[256,512], index: 13, kind: input, shape index: {}]
  %s14 = inlined_call_operand.vmem [shape: bf16[512,8], index: 14, kind: input, shape index: {}]
  %s15 = inlined_call_operand.vmem [shape: bf16[8,512], index: 15, kind: input, shape index: {}]
  %s16 = inlined_call_operand.vmem [shape: f32[1,512], index: 16, kind: input, shape index: {}]
  %s17 = inlined_call_operand.vmem [shape: f32[1,512], index: 17, kind: input, shape index: {}]
  %s18 = inlined_call_operand.hbm [shape: bf16[512,1024], index: 18, kind: input, shape index: {}]
  %s19 = inlined_call_operand.hbm [shape: f32[2,128], index: 19, kind: output, shape index: {0}]
  %s20 = inlined_call_operand.hbm [shape: f32[2,1024], index: 20, kind: output, shape index: {1}]
  %21 = xla_tuple %s19, %s20
  %s22 = sld [smem:[#allocation0]]
  $region130: #{tpu_custom_call.1} parent=0
    _
  %s24 = ssub.s32 1, %s22
  %s25 = scalar_select 0, %s24, %s22
  $region1: #{tpu_custom_call.1} parent=0
    #allocation2 [shape = 'u8[4096]{0}', space=vmem, size = 0x1000, scoped, tag = 'input window, operand 0, single buffered']
    #allocation3 [shape = 's32[1]{0}', space=sflag, size = 0x4, scoped, tag = 'scoped memory for tpu_custom_call.1']
    #allocation4 [shape = 's32[1]{0}', space=sflag, size = 0x4, scoped, tag = 'scoped memory for tpu_custom_call.1']
    #allocation5 [shape = 'u8[1048576]{0}', space=vmem, size = 0x100000, scoped, tag = 'input window, operand 1, single buffered']
    #allocation6 [shape = 's32[1]{0}', space=sflag, size = 0x4, scoped, tag = 'scoped memory for tpu_custom_call.1']
    #allocation7 [shape = 'u8[1024]{0}', space=vmem, size = 0x400, scoped, tag = 'input window, operand 5, single buffered']
    #allocation8 [shape = 'u8[1024]{0}', space=vmem, size = 0x400, scoped, tag = 'input window, operand 6, single buffered']
    #allocation9 [shape = 's32[1]{0}', space=sflag, size = 0x4, scoped, tag = 'scoped memory for tpu_custom_call.1']
    #allocation10 [shape = 'u8[65536]{0}', space=vmem, size = 0x10000, scoped, tag = 'input window, operand 7, single buffered']
    #allocation11 [shape = 'u8[65536]{0}', space=vmem, size = 0x10000, scoped, tag = 'input window, operand 8, single buffered']
    #allocation12 [shape = 's32[1]{0}', space=sflag, size = 0x4, scoped, tag = 'scoped memory for tpu_custom_call.1']
    #allocation13 [shape = 'u8[1024]{0}', space=vmem, size = 0x400, scoped, tag = 'input window, operand 11, single buffered']
    #allocation14 [shape = 'u8[262144]{0}', space=vmem, size = 0x40000, scoped, tag = 'input window, operand 13, single buffered']
    #allocation15 [shape = 's32[1]{0}', space=sflag, size = 0x4, scoped, tag = 'scoped memory for tpu_custom_call.1']
    #allocation16 [shape = 'u8[1048576]{0}', space=vmem, size = 0x100000, scoped, tag = 'input window, operand 18, single buffered']
    #allocation17 [shape = 'u8[1024]{0}', space=vmem, size = 0x400, scoped, tag = 'output window, operand 0, single buffered']
    #allocation18 [shape = 'u8[8192]{0}', space=vmem, size = 0x2000, scoped, tag = 'output window, operand 1, single buffered']
    #allocation19 [shape = 's32[1]{0}', space=sflag, size = 0x4, scoped, tag = 'scoped memory for tpu_custom_call.1']
    %26 = vsyncpa [#allocation3], 0
    %27 = vsyncpa [#allocation6], 0
    %28 = vsyncpa [#allocation9], 0
    %29 = vsyncpa [#allocation12], 0
    %30 = vsyncpa [#allocation15], 0
    %31 = vsyncpa [#allocation4], 0
    %32 = vsyncpa [#allocation19], 0
    // Predicated region
    $region2: #{tpu_custom_call.1} parent=1 // pred_check
      _
    $region3: #{tpu_custom_call.1} parent=1 // pred_check_branch
      %34 = sbr.rel (0) target = $region5
    $region4: #{tpu_custom_call.1} parent=1 // pred_region
      %s36 = ssub.s32 128, 128
      %37 = vsyncadd [#allocation3], %s36
      %s39 = sshll.u32 [#allocation2], 4
      %s40 = int_to_ptr.vmem [resolvable:$true] %s39
      %42 = dma.hbm_to_vmem [thread:$0]  %s0, 128, %s40, [#allocation3]
    $region5: #{tpu_custom_call.1} parent=1 // pred_fallthru
      _
    // Predicated region
    $region6: #{tpu_custom_call.1} parent=1 // pred_check
      _
    $region7: #{tpu_custom_call.1} parent=1 // pred_check_branch
      %44 = sbr.rel (0) target = $region9
    $region8: #{tpu_custom_call.1} parent=1 // pred_region
      %s46 = ssub.s32 32768, 32768
      %47 = vsyncadd [#allocation6], %s46
      %s48 = sshll.u32 [#allocation5], 4
      %s49 = int_to_ptr.vmem [resolvable:$true] %s48
      %54 = dma.hbm_to_vmem [thread:$0]  %s1, 32768, %s49, [#allocation6], 256, 256, 16
    $region9: #{tpu_custom_call.1} parent=1 // pred_fallthru
      _
    // Predicated region
    $region10: #{tpu_custom_call.1} parent=1 // pred_check
      _
    $region11: #{tpu_custom_call.1} parent=1 // pred_check_branch
      %56 = sbr.rel (0) target = $region13
    $region12: #{tpu_custom_call.1} parent=1 // pred_region
      _
    $region13: #{tpu_custom_call.1} parent=1 // pred_fallthru
      _
    // Predicated region
    $region14: #{tpu_custom_call.1} parent=1 // pred_check
      _
    $region15: #{tpu_custom_call.1} parent=1 // pred_check_branch
      %58 = sbr.rel (0) target = $region17
    $region16: #{tpu_custom_call.1} parent=1 // pred_region
      _
    $region17: #{tpu_custom_call.1} parent=1 // pred_fallthru
      _
    // Predicated region
    $region18: #{tpu_custom_call.1} parent=1 // pred_check
      _
    $region19: #{tpu_custom_call.1} parent=1 // pred_check_branch
      %60 = sbr.rel (0) target = $region21
    $region20: #{tpu_custom_call.1} parent=1 // pred_region
      _
    $region21: #{tpu_custom_call.1} parent=1 // pred_fallthru
      _
    // Predicated region
    $region22: #{tpu_custom_call.1} parent=1 // pred_check
      _
    $region23: #{tpu_custom_call.1} parent=1 // pred_check_branch
      %62 = sbr.rel (0) target = $region25
    $region24: #{tpu_custom_call.1} parent=1 // pred_region
      %s64 = ssub.s32 32, 32
      %65 = vsyncadd [#allocation6], %s64
      %s67 = sshll.u32 [#allocation7], 4
      %s68 = int_to_ptr.vmem [resolvable:$true] %s67
      %70 = dma.hbm_to_vmem [thread:$0]  %s5, 32, %s68, [#allocation6]
    $region25: #{tpu_custom_call.1} parent=1 // pred_fallthru
      _
    // Predicated region
    $region26: #{tpu_custom_call.1} parent=1 // pred_check
      _
    $region27: #{tpu_custom_call.1} parent=1 // pred_check_branch
      %72 = sbr.rel (0) target = $region29
    $region28: #{tpu_custom_call.1} parent=1 // pred_region
      %s74 = ssub.s32 32, 32
      %75 = vsyncadd [#allocation9], %s74
      %s77 = sshll.u32 [#allocation8], 4
      %s78 = int_to_ptr.vmem [resolvable:$true] %s77
      %80 = dma.hbm_to_vmem [thread:$0]  %s6, 32, %s78, [#allocation9]
    $region29: #{tpu_custom_call.1} parent=1 // pred_fallthru
      _
    // Predicated region
    $region30: #{tpu_custom_call.1} parent=1 // pred_check
      _
    $region31: #{tpu_custom_call.1} parent=1 // pred_check_branch
      %82 = sbr.rel (0) target = $region33
    $region32: #{tpu_custom_call.1} parent=1 // pred_region
      %s84 = ssub.s32 2048, 2048
      %85 = vsyncadd [#allocation9], %s84
      %s86 = sshll.u32 [#allocation10], 4
      %s87 = int_to_ptr.vmem [resolvable:$true] %s86
      %92 = dma.hbm_to_vmem [thread:$0]  %s7, 2048, %s87, [#allocation9], 64, 64, 4
    $region33: #{tpu_custom_call.1} parent=1 // pred_fallthru
      _
    // Predicated region
    $region34: #{tpu_custom_call.1} parent=1 // pred_check
      _
    $region35: #{tpu_custom_call.1} parent=1 // pred_check_branch
      %94 = sbr.rel (0) target = $region37
    $region36: #{tpu_custom_call.1} parent=1 // pred_region
      %s96 = ssub.s32 2048, 2048
      %97 = vsyncadd [#allocation12], %s96
      %s98 = sshll.u32 [#allocation11], 4
      %s99 = int_to_ptr.vmem [resolvable:$true] %s98
      %104 = dma.hbm_to_vmem [thread:$0]  %s8, 2048, %s99, [#allocation12], 128, 128, 8
    $region37: #{tpu_custom_call.1} parent=1 // pred_fallthru
      _
    // Predicated region
    $region38: #{tpu_custom_call.1} parent=1 // pred_check
      _
    $region39: #{tpu_custom_call.1} parent=1 // pred_check_branch
      %106 = sbr.rel (0) target = $region41
    $region40: #{tpu_custom_call.1} parent=1 // pred_region
      _
    $region41: #{tpu_custom_call.1} parent=1 // pred_fallthru
      _
    // Predicated region
    $region42: #{tpu_custom_call.1} parent=1 // pred_check
      _
    $region43: #{tpu_custom_call.1} parent=1 // pred_check_branch
      %108 = sbr.rel (0) target = $region45
    $region44: #{tpu_custom_call.1} parent=1 // pred_region
      _
    $region45: #{tpu_custom_call.1} parent=1 // pred_fallthru
      _
    // Predicated region
    $region46: #{tpu_custom_call.1} parent=1 // pred_check
      _
    $region47: #{tpu_custom_call.1} parent=1 // pred_check_branch
      %110 = sbr.rel (0) target = $region49
    $region48: #{tpu_custom_call.1} parent=1 // pred_region
      %s112 = ssub.s32 32, 32
      %113 = vsyncadd [#allocation12], %s112
      %s115 = sshll.u32 [#allocation13], 4
      %s116 = int_to_ptr.vmem [resolvable:$true] %s115
      %118 = dma.hbm_to_vmem [thread:$0]  %s11, 32, %s116, [#allocation12]
    $region49: #{tpu_custom_call.1} parent=1 // pred_fallthru
      _
    // Predicated region
    $region50: #{tpu_custom_call.1} parent=1 // pred_check
      _
    $region51: #{tpu_custom_call.1} parent=1 // pred_check_branch
      %120 = sbr.rel (0) target = $region53
    $region52: #{tpu_custom_call.1} parent=1 // pred_region
      _
    $region53: #{tpu_custom_call.1} parent=1 // pred_fallthru
      _
    // Predicated region
    $region54: #{tpu_custom_call.1} parent=1 // pred_check
      _
    $region55: #{tpu_custom_call.1} parent=1 // pred_check_branch
      %122 = sbr.rel (0) target = $region57
    $region56: #{tpu_custom_call.1} parent=1 // pred_region
      %s124 = ssub.s32 8192, 8192
      %125 = vsyncadd [#allocation15], %s124
      %s126 = sshll.u32 [#allocation14], 4
      %s127 = int_to_ptr.vmem [resolvable:$true] %s126
      %132 = dma.hbm_to_vmem [thread:$0]  %s13, 8192, %s127, [#allocation15], 256, 256, 16
    $region57: #{tpu_custom_call.1} parent=1 // pred_fallthru
      _
    // Predicated region
    $region58: #{tpu_custom_call.1} parent=1 // pred_check
      _
    $region59: #{tpu_custom_call.1} parent=1 // pred_check_branch
      %134 = sbr.rel (0) target = $region61
    $region60: #{tpu_custom_call.1} parent=1 // pred_region
      _
    $region61: #{tpu_custom_call.1} parent=1 // pred_fallthru
      _
    // Predicated region
    $region62: #{tpu_custom_call.1} parent=1 // pred_check
      _
    $region63: #{tpu_custom_call.1} parent=1 // pred_check_branch
      %136 = sbr.rel (0) target = $region65
    $region64: #{tpu_custom_call.1} parent=1 // pred_region
      _
    $region65: #{tpu_custom_call.1} parent=1 // pred_fallthru
      _
    // Predicated region
    $region66: #{tpu_custom_call.1} parent=1 // pred_check
      _
    $region67: #{tpu_custom_call.1} parent=1 // pred_check_branch
      %138 = sbr.rel (0) target = $region69
    $region68: #{tpu_custom_call.1} parent=1 // pred_region
      _
    $region69: #{tpu_custom_call.1} parent=1 // pred_fallthru
      _
    // Predicated region
    $region70: #{tpu_custom_call.1} parent=1 // pred_check
      _
    $region71: #{tpu_custom_call.1} parent=1 // pred_check_branch
      %140 = sbr.rel (0) target = $region73
    $region72: #{tpu_custom_call.1} parent=1 // pred_region
      _
    $region73: #{tpu_custom_call.1} parent=1 // pred_fallthru
      _
    // Predicated region
    $region74: #{tpu_custom_call.1} parent=1 // pred_check
      _
    $region75: #{tpu_custom_call.1} parent=1 // pred_check_branch
      %142 = sbr.rel (0) target = $region77
    $region76: #{tpu_custom_call.1} parent=1 // pred_region
      %s144 = ssub.s32 32768, 32768
      %145 = vsyncadd [#allocation15], %s144
      %s146 = sshll.u32 [#allocation16], 4
      %s147 = int_to_ptr.vmem [resolvable:$true] %s146
      %152 = dma.hbm_to_vmem [thread:$0]  %s18, 32768, %s147, [#allocation15], 512, 512, 32
    $region77: #{tpu_custom_call.1} parent=1 // pred_fallthru
      _
    // Predicated region
    $region78: #{tpu_custom_call.1} parent=1 // pred_check
      _
    $region79: #{tpu_custom_call.1} parent=1 // pred_check_branch
      %154 = sbr.rel (0) target = $region81
    $region80: #{tpu_custom_call.1} parent=1 // pred_region
      %155 = dma.done [#allocation3], 128
    $region81: #{tpu_custom_call.1} parent=1 // pred_fallthru
      _
    // Predicated region
    $region82: #{tpu_custom_call.1} parent=1 // pred_check
      _
    $region83: #{tpu_custom_call.1} parent=1 // pred_check_branch
      %157 = sbr.rel (0) target = $region85
    $region84: #{tpu_custom_call.1} parent=1 // pred_region
      %158 = dma.done [#allocation6], 32768
    $region85: #{tpu_custom_call.1} parent=1 // pred_fallthru
      _
    // Predicated region
    $region86: #{tpu_custom_call.1} parent=1 // pred_check
      _
    $region87: #{tpu_custom_call.1} parent=1 // pred_check_branch
      %160 = sbr.rel (0) target = $region89
    $region88: #{tpu_custom_call.1} parent=1 // pred_region
      %161 = dma.done [#allocation6], 32
    $region89: #{tpu_custom_call.1} parent=1 // pred_fallthru
      _
    // Predicated region
    $region90: #{tpu_custom_call.1} parent=1 // pred_check
      _
    $region91: #{tpu_custom_call.1} parent=1 // pred_check_branch
      %163 = sbr.rel (0) target = $region93
    $region92: #{tpu_custom_call.1} parent=1 // pred_region
      %164 = dma.done [#allocation9], 32
    $region93: #{tpu_custom_call.1} parent=1 // pred_fallthru
      _
    // Predicated region
    $region94: #{tpu_custom_call.1} parent=1 // pred_check
      _
    $region95: #{tpu_custom_call.1} parent=1 // pred_check_branch
      %166 = sbr.rel (0) target = $region97
    $region96: #{tpu_custom_call.1} parent=1 // pred_region
      %167 = dma.done [#allocation9], 2048
    $region97: #{tpu_custom_call.1} parent=1 // pred_fallthru
      _
    // Predicated region
    $region98: #{tpu_custom_call.1} parent=1 // pred_check
      _
    $region99: #{tpu_custom_call.1} parent=1 // pred_check_branch
      %169 = sbr.rel (0) target = $region101
    $region100: #{tpu_custom_call.1} parent=1 // pred_region
      %170 = dma.done [#allocation12], 2048
    $region101: #{tpu_custom_call.1} parent=1 // pred_fallthru
      _
    // Predicated region
    $region102: #{tpu_custom_call.1} parent=1 // pred_check
      _
    $region103: #{tpu_custom_call.1} parent=1 // pred_check_branch
      %172 = sbr.rel (0) target = $region105
    $region104: #{tpu_custom_call.1} parent=1 // pred_region
      %173 = dma.done [#allocation12], 32
    $region105: #{tpu_custom_call.1} parent=1 // pred_fallthru
      _
    // Predicated region
    $region106: #{tpu_custom_call.1} parent=1 // pred_check
      _
    $region107: #{tpu_custom_call.1} parent=1 // pred_check_branch
      %175 = sbr.rel (0) target = $region109
    $region108: #{tpu_custom_call.1} parent=1 // pred_region
      %176 = dma.done [#allocation15], 8192
    $region109: #{tpu_custom_call.1} parent=1 // pred_fallthru
      _
    // Predicated region
    $region110: #{tpu_custom_call.1} parent=1 // pred_check
      _
    $region111: #{tpu_custom_call.1} parent=1 // pred_check_branch
      %178 = sbr.rel (0) target = $region113
    $region112: #{tpu_custom_call.1} parent=1 // pred_region
      %179 = dma.done [#allocation15], 32768
    $region113: #{tpu_custom_call.1} parent=1 // pred_fallthru
      _
    %v181 = vld [vmem:[#allocation2] sm:$0xff]
    %v182 = vld [vmem:[#allocation5] sm:$0xff]
    %v183 = vld [vmem:[#allocation5 + $0x8] sm:$0xff]
    %v184 = vld [vmem:[#allocation5 + $0x10] sm:$0xff]
    %v185 = vld [vmem:[#allocation5 + $0x18] sm:$0xff]
    %v186 = vld [vmem:[#allocation5 + $0x20] sm:$0xff]
    %v187 = vld [vmem:[#allocation5 + $0x28] sm:$0xff]
    %v188 = vld [vmem:[#allocation5 + $0x30] sm:$0xff]
    %v189 = vld [vmem:[#allocation5 + $0x38] sm:$0xff]
    %v190 = vld [vmem:[#allocation5 + $0x40] sm:$0xff]
    %v191 = vld [vmem:[#allocation5 + $0x48] sm:$0xff]
    %v192 = vld [vmem:[#allocation5 + $0x50] sm:$0xff]
    %v193 = vld [vmem:[#allocation5 + $0x58] sm:$0xff]
    %v194 = vld [vmem:[#allocation5 + $0x60] sm:$0xff]
    %v195 = vld [vmem:[#allocation5 + $0x68] sm:$0xff]
    %v196 = vld [vmem:[#allocation5 + $0x70] sm:$0xff]
    %v197 = vld [vmem:[#allocation5 + $0x78] sm:$0xff]
    %v198 = vld [vmem:[#allocation5 + $0x80] sm:$0xff]
    %v199 = vld [vmem:[#allocation5 + $0x88] sm:$0xff]
    %v200 = vld [vmem:[#allocation5 + $0x90] sm:$0xff]
    %v201 = vld [vmem:[#allocation5 + $0x98] sm:$0xff]
    %v202 = vld [vmem:[#allocation5 + $0xa0] sm:$0xff]
    %v203 = vld [vmem:[#allocation5 + $0xa8] sm:$0xff]
    %v204 = vld [vmem:[#allocation5 + $0xb0] sm:$0xff]
    %v205 = vld [vmem:[#allocation5 + $0xb8] sm:$0xff]
    %v206 = vld [vmem:[#allocation5 + $0xc0] sm:$0xff]
    %v207 = vld [vmem:[#allocation5 + $0xc8] sm:$0xff]
    %v208 = vld [vmem:[#allocation5 + $0xd0] sm:$0xff]
    %v209 = vld [vmem:[#allocation5 + $0xd8] sm:$0xff]
    %v210 = vld [vmem:[#allocation5 + $0xe0] sm:$0xff]
    %v211 = vld [vmem:[#allocation5 + $0xe8] sm:$0xff]
    %v212 = vld [vmem:[#allocation5 + $0xf0] sm:$0xff]
    %v213 = vld [vmem:[#allocation5 + $0xf8] sm:$0xff]
    %v214 = vld [vmem:[#allocation5 + $0x100] sm:$0xff]
    %v215 = vld [vmem:[#allocation5 + $0x108] sm:$0xff]
    %v216 = vld [vmem:[#allocation5 + $0x110] sm:$0xff]
    %v217 = vld [vmem:[#allocation5 + $0x118] sm:$0xff]
    %v218 = vld [vmem:[#allocation5 + $0x120] sm:$0xff]
    %v219 = vld [vmem:[#allocation5 + $0x128] sm:$0xff]
    %v220 = vld [vmem:[#allocation5 + $0x130] sm:$0xff]
    %v221 = vld [vmem:[#allocation5 + $0x138] sm:$0xff]
    %v222 = vld [vmem:[#allocation5 + $0x140] sm:$0xff]
    %v223 = vld [vmem:[#allocation5 + $0x148] sm:$0xff]
    %v224 = vld [vmem:[#allocation5 + $0x150] sm:$0xff]
    %v225 = vld [vmem:[#allocation5 + $0x158] sm:$0xff]
    %v226 = vld [vmem:[#allocation5 + $0x160] sm:$0xff]
    %v227 = vld [vmem:[#allocation5 + $0x168] sm:$0xff]
    %v228 = vld [vmem:[#allocation5 + $0x170] sm:$0xff]
    %v229 = vld [vmem:[#allocation5 + $0x178] sm:$0xff]
    %v230 = vld [vmem:[#allocation5 + $0x180] sm:$0xff]
    %v231 = vld [vmem:[#allocation5 + $0x188] sm:$0xff]
    %v232 = vld [vmem:[#allocation5 + $0x190] sm:$0xff]
    %v233 = vld [vmem:[#allocation5 + $0x198] sm:$0xff]
    %v234 = vld [vmem:[#allocation5 + $0x1a0] sm:$0xff]
    %v235 = vld [vmem:[#allocation5 + $0x1a8] sm:$0xff]
    %v236 = vld [vmem:[#allocation5 + $0x1b0] sm:$0xff]
    %v237 = vld [vmem:[#allocation5 + $0x1b8] sm:$0xff]
    %v238 = vld [vmem:[#allocation5 + $0x1c0] sm:$0xff]
    %v239 = vld [vmem:[#allocation5 + $0x1c8] sm:$0xff]
    %v240 = vld [vmem:[#allocation5 + $0x1d0] sm:$0xff]
    %v241 = vld [vmem:[#allocation5 + $0x1d8] sm:$0xff]
    %v242 = vld [vmem:[#allocation5 + $0x1e0] sm:$0xff]
    %v243 = vld [vmem:[#allocation5 + $0x1e8] sm:$0xff]
    %v244 = vld [vmem:[#allocation5 + $0x1f0] sm:$0xff]
    %v245 = vld [vmem:[#allocation5 + $0x1f8] sm:$0xff]
    %v246 = vld [vmem:[#allocation5 + $0x200] sm:$0xff]
    %v247 = vld [vmem:[#allocation5 + $0x208] sm:$0xff]
    %v248 = vld [vmem:[#allocation5 + $0x210] sm:$0xff]
    %v249 = vld [vmem:[#allocation5 + $0x218] sm:$0xff]
    %v250 = vld [vmem:[#allocation5 + $0x220] sm:$0xff]
    %v251 = vld [vmem:[#allocation5 + $0x228] sm:$0xff]
    %v252 = vld [vmem:[#allocation5 + $0x230] sm:$0xff]
    %v253 = vld [vmem:[#allocation5 + $0x238] sm:$0xff]
    %v254 = vld [vmem:[#allocation5 + $0x240] sm:$0xff]
    %v255 = vld [vmem:[#allocation5 + $0x248] sm:$0xff]
    %v256 = vld [vmem:[#allocation5 + $0x250] sm:$0xff]
    %v257 = vld [vmem:[#allocation5 + $0x258] sm:$0xff]
    %v258 = vld [vmem:[#allocation5 + $0x260] sm:$0xff]
    %v259 = vld [vmem:[#allocation5 + $0x268] sm:$0xff]
    %v260 = vld [vmem:[#allocation5 + $0x270] sm:$0xff]
    %v261 = vld [vmem:[#allocation5 + $0x278] sm:$0xff]
    %v262 = vld [vmem:[#allocation5 + $0x280] sm:$0xff]
    %v263 = vld [vmem:[#allocation5 + $0x288] sm:$0xff]
    %v264 = vld [vmem:[#allocation5 + $0x290] sm:$0xff]
    %v265 = vld [vmem:[#allocation5 + $0x298] sm:$0xff]
    %v266 = vld [vmem:[#allocation5 + $0x2a0] sm:$0xff]
    %v267 = vld [vmem:[#allocation5 + $0x2a8] sm:$0xff]
    %v268 = vld [vmem:[#allocation5 + $0x2b0] sm:$0xff]
    %v269 = vld [vmem:[#allocation5 + $0x2b8] sm:$0xff]
    %v270 = vld [vmem:[#allocation5 + $0x2c0] sm:$0xff]
    %v271 = vld [vmem:[#allocation5 + $0x2c8] sm:$0xff]
    %v272 = vld [vmem:[#allocation5 + $0x2d0] sm:$0xff]
    %v273 = vld [vmem:[#allocation5 + $0x2d8] sm:$0xff]
    %v274 = vld [vmem:[#allocation5 + $0x2e0] sm:$0xff]
    %v275 = vld [vmem:[#allocation5 + $0x2e8] sm:$0xff]
    %v276 = vld [vmem:[#allocation5 + $0x2f0] sm:$0xff]
    %v277 = vld [vmem:[#allocation5 + $0x2f8] sm:$0xff]
    %v278 = vld [vmem:[#allocation5 + $0x300] sm:$0xff]
    %v279 = vld [vmem:[#allocation5 + $0x308] sm:$0xff]
    %v280 = vld [vmem:[#allocation5 + $0x310] sm:$0xff]
    %v281 = vld [vmem:[#allocation5 + $0x318] sm:$0xff]
    %v282 = vld [vmem:[#allocation5 + $0x320] sm:$0xff]
    %v283 = vld [vmem:[#allocation5 + $0x328] sm:$0xff]
    %v284 = vld [vmem:[#allocation5 + $0x330] sm:$0xff]
    %v285 = vld [vmem:[#allocation5 + $0x338] sm:$0xff]
    %v286 = vld [vmem:[#allocation5 + $0x340] sm:$0xff]
    %v287 = vld [vmem:[#allocation5 + $0x348] sm:$0xff]
    %v288 = vld [vmem:[#allocation5 + $0x350] sm:$0xff]
    %v289 = vld [vmem:[#allocation5 + $0x358] sm:$0xff]
    %v290 = vld [vmem:[#allocation5 + $0x360] sm:$0xff]
    %v291 = vld [vmem:[#allocation5 + $0x368] sm:$0xff]
    %v292 = vld [vmem:[#allocation5 + $0x370] sm:$0xff]
    %v293 = vld [vmem:[#allocation5 + $0x378] sm:$0xff]
    %v294 = vld [vmem:[#allocation5 + $0x380] sm:$0xff]
    %v295 = vld [vmem:[#allocation5 + $0x388] sm:$0xff]
    %v296 = vld [vmem:[#allocation5 + $0x390] sm:$0xff]
    %v297 = vld [vmem:[#allocation5 + $0x398] sm:$0xff]
    %v298 = vld [vmem:[#allocation5 + $0x3a0] sm:$0xff]
    %v299 = vld [vmem:[#allocation5 + $0x3a8] sm:$0xff]
    %v300 = vld [vmem:[#allocation5 + $0x3b0] sm:$0xff]
    %v301 = vld [vmem:[#allocation5 + $0x3b8] sm:$0xff]
    %v302 = vld [vmem:[#allocation5 + $0x3c0] sm:$0xff]
    %v303 = vld [vmem:[#allocation5 + $0x3c8] sm:$0xff]
    %v304 = vld [vmem:[#allocation5 + $0x3d0] sm:$0xff]
    %v305 = vld [vmem:[#allocation5 + $0x3d8] sm:$0xff]
    %v306 = vld [vmem:[#allocation5 + $0x3e0] sm:$0xff]
    %v307 = vld [vmem:[#allocation5 + $0x3e8] sm:$0xff]
    %v308 = vld [vmem:[#allocation5 + $0x3f0] sm:$0xff]
    %v309 = vld [vmem:[#allocation5 + $0x3f8] sm:$0xff]
    %v310 = vld [vmem:[#allocation5 + $0x400] sm:$0xff]
    %v311 = vld [vmem:[#allocation5 + $0x408] sm:$0xff]
    %v312 = vld [vmem:[#allocation5 + $0x410] sm:$0xff]
    %v313 = vld [vmem:[#allocation5 + $0x418] sm:$0xff]
    %v314 = vld [vmem:[#allocation5 + $0x420] sm:$0xff]
    %v315 = vld [vmem:[#allocation5 + $0x428] sm:$0xff]
    %v316 = vld [vmem:[#allocation5 + $0x430] sm:$0xff]
    %v317 = vld [vmem:[#allocation5 + $0x438] sm:$0xff]
    %v318 = vld [vmem:[#allocation5 + $0x440] sm:$0xff]
    %v319 = vld [vmem:[#allocation5 + $0x448] sm:$0xff]
    %v320 = vld [vmem:[#allocation5 + $0x450] sm:$0xff]
    %v321 = vld [vmem:[#allocation5 + $0x458] sm:$0xff]
    %v322 = vld [vmem:[#allocation5 + $0x460] sm:$0xff]
    %v323 = vld [vmem:[#allocation5 + $0x468] sm:$0xff]
    %v324 = vld [vmem:[#allocation5 + $0x470] sm:$0xff]
    %v325 = vld [vmem:[#allocation5 + $0x478] sm:$0xff]
    %v326 = vld [vmem:[#allocation5 + $0x480] sm:$0xff]
    %v327 = vld [vmem:[#allocation5 + $0x488] sm:$0xff]
    %v328 = vld [vmem:[#allocation5 + $0x490] sm:$0xff]
    %v329 = vld [vmem:[#allocation5 + $0x498] sm:$0xff]
    %v330 = vld [vmem:[#allocation5 + $0x4a0] sm:$0xff]
    %v331 = vld [vmem:[#allocation5 + $0x4a8] sm:$0xff]
    %v332 = vld [vmem:[#allocation5 + $0x4b0] sm:$0xff]
    %v333 = vld [vmem:[#allocation5 + $0x4b8] sm:$0xff]
    %v334 = vld [vmem:[#allocation5 + $0x4c0] sm:$0xff]
    %v335 = vld [vmem:[#allocation5 + $0x4c8] sm:$0xff]
    %v336 = vld [vmem:[#allocation5 + $0x4d0] sm:$0xff]
    %v337 = vld [vmem:[#allocation5 + $0x4d8] sm:$0xff]
    %v338 = vld [vmem:[#allocation5 + $0x4e0] sm:$0xff]
    %v339 = vld [vmem:[#allocation5 + $0x4e8] sm:$0xff]
    %v340 = vld [vmem:[#allocation5 + $0x4f0] sm:$0xff]
    %v341 = vld [vmem:[#allocation5 + $0x4f8] sm:$0xff]
    %v342 = vld [vmem:[#allocation5 + $0x500] sm:$0xff]
    %v343 = vld [vmem:[#allocation5 + $0x508] sm:$0xff]
    %v344 = vld [vmem:[#allocation5 + $0x510] sm:$0xff]
    %v345 = vld [vmem:[#allocation5 + $0x518] sm:$0xff]
    %v346 = vld [vmem:[#allocation5 + $0x520] sm:$0xff]
    %v347 = vld [vmem:[#allocation5 + $0x528] sm:$0xff]
    %v348 = vld [vmem:[#allocation5 + $0x530] sm:$0xff]
    %v349 = vld [vmem:[#allocation5 + $0x538] sm:$0xff]
    %v350 = vld [vmem:[#allocation5 + $0x540] sm:$0xff]
    %v351 = vld [vmem:[#allocation5 + $0x548] sm:$0xff]
    %v352 = vld [vmem:[#allocation5 + $0x550] sm:$0xff]
    %v353 = vld [vmem:[#allocation5 + $0x558] sm:$0xff]
    %v354 = vld [vmem:[#allocation5 + $0x560] sm:$0xff]
    %v355 = vld [vmem:[#allocation5 + $0x568] sm:$0xff]
    %v356 = vld [vmem:[#allocation5 + $0x570] sm:$0xff]
    %v357 = vld [vmem:[#allocation5 + $0x578] sm:$0xff]
    %v358 = vld [vmem:[#allocation5 + $0x580] sm:$0xff]
    %v359 = vld [vmem:[#allocation5 + $0x588] sm:$0xff]
    %v360 = vld [vmem:[#allocation5 + $0x590] sm:$0xff]
    %v361 = vld [vmem:[#allocation5 + $0x598] sm:$0xff]
    %v362 = vld [vmem:[#allocation5 + $0x5a0] sm:$0xff]
    %v363 = vld [vmem:[#allocation5 + $0x5a8] sm:$0xff]
    %v364 = vld [vmem:[#allocation5 + $0x5b0] sm:$0xff]
    %v365 = vld [vmem:[#allocation5 + $0x5b8] sm:$0xff]
    %v366 = vld [vmem:[#allocation5 + $0x5c0] sm:$0xff]
    %v367 = vld [vmem:[#allocation5 + $0x5c8] sm:$0xff]
    %v368 = vld [vmem:[#allocation5 + $0x5d0] sm:$0xff]
    %v369 = vld [vmem:[#allocation5 + $0x5d8] sm:$0xff]
    %v370 = vld [vmem:[#allocation5 + $0x5e0] sm:$0xff]
    %v371 = vld [vmem:[#allocation5 + $0x5e8] sm:$0xff]
    %v372 = vld [vmem:[#allocation5 + $0x5f0] sm:$0xff]
    %v373 = vld [vmem:[#allocation5 + $0x5f8] sm:$0xff]
    %v374 = vld [vmem:[#allocation5 + $0x600] sm:$0xff]
    %v375 = vld [vmem:[#allocation5 + $0x608] sm:$0xff]
    %v376 = vld [vmem:[#allocation5 + $0x610] sm:$0xff]
    %v377 = vld [vmem:[#allocation5 + $0x618] sm:$0xff]
    %v378 = vld [vmem:[#allocation5 + $0x620] sm:$0xff]
    %v379 = vld [vmem:[#allocation5 + $0x628] sm:$0xff]
    %v380 = vld [vmem:[#allocation5 + $0x630] sm:$0xff]
    %v381 = vld [vmem:[#allocation5 + $0x638] sm:$0xff]
    %v382 = vld [vmem:[#allocation5 + $0x640] sm:$0xff]
    %v383 = vld [vmem:[#allocation5 + $0x648] sm:$0xff]
    %v384 = vld [vmem:[#allocation5 + $0x650] sm:$0xff]
    %v385 = vld [vmem:[#allocation5 + $0x658] sm:$0xff]
    %v386 = vld [vmem:[#allocation5 + $0x660] sm:$0xff]
    %v387 = vld [vmem:[#allocation5 + $0x668] sm:$0xff]
    %v388 = vld [vmem:[#allocation5 + $0x670] sm:$0xff]
    %v389 = vld [vmem:[#allocation5 + $0x678] sm:$0xff]
    %v390 = vld [vmem:[#allocation5 + $0x680] sm:$0xff]
    %v391 = vld [vmem:[#allocation5 + $0x688] sm:$0xff]
    %v392 = vld [vmem:[#allocation5 + $0x690] sm:$0xff]
    %v393 = vld [vmem:[#allocation5 + $0x698] sm:$0xff]
    %v394 = vld [vmem:[#allocation5 + $0x6a0] sm:$0xff]
    %v395 = vld [vmem:[#allocation5 + $0x6a8] sm:$0xff]
    %v396 = vld [vmem:[#allocation5 + $0x6b0] sm:$0xff]
    %v397 = vld [vmem:[#allocation5 + $0x6b8] sm:$0xff]
    %v398 = vld [vmem:[#allocation5 + $0x6c0] sm:$0xff]
    %v399 = vld [vmem:[#allocation5 + $0x6c8] sm:$0xff]
    %v400 = vld [vmem:[#allocation5 + $0x6d0] sm:$0xff]
    %v401 = vld [vmem:[#allocation5 + $0x6d8] sm:$0xff]
    %v402 = vld [vmem:[#allocation5 + $0x6e0] sm:$0xff]
    %v403 = vld [vmem:[#allocation5 + $0x6e8] sm:$0xff]
    %v404 = vld [vmem:[#allocation5 + $0x6f0] sm:$0xff]
    %v405 = vld [vmem:[#allocation5 + $0x6f8] sm:$0xff]
    %v406 = vld [vmem:[#allocation5 + $0x700] sm:$0xff]
    %v407 = vld [vmem:[#allocation5 + $0x708] sm:$0xff]
    %v408 = vld [vmem:[#allocation5 + $0x710] sm:$0xff]
    %v409 = vld [vmem:[#allocation5 + $0x718] sm:$0xff]
    %v410 = vld [vmem:[#allocation5 + $0x720] sm:$0xff]
    %v411 = vld [vmem:[#allocation5 + $0x728] sm:$0xff]
    %v412 = vld [vmem:[#allocation5 + $0x730] sm:$0xff]
    %v413 = vld [vmem:[#allocation5 + $0x738] sm:$0xff]
    %v414 = vld [vmem:[#allocation5 + $0x740] sm:$0xff]
    %v415 = vld [vmem:[#allocation5 + $0x748] sm:$0xff]
    %v416 = vld [vmem:[#allocation5 + $0x750] sm:$0xff]
    %v417 = vld [vmem:[#allocation5 + $0x758] sm:$0xff]
    %v418 = vld [vmem:[#allocation5 + $0x760] sm:$0xff]
    %v419 = vld [vmem:[#allocation5 + $0x768] sm:$0xff]
    %v420 = vld [vmem:[#allocation5 + $0x770] sm:$0xff]
    %v421 = vld [vmem:[#allocation5 + $0x778] sm:$0xff]
    %v422 = vld [vmem:[#allocation5 + $0x780] sm:$0xff]
    %v423 = vld [vmem:[#allocation5 + $0x788] sm:$0xff]
    %v424 = vld [vmem:[#allocation5 + $0x790] sm:$0xff]
    %v425 = vld [vmem:[#allocation5 + $0x798] sm:$0xff]
    %v426 = vld [vmem:[#allocation5 + $0x7a0] sm:$0xff]
    %v427 = vld [vmem:[#allocation5 + $0x7a8] sm:$0xff]
    %v428 = vld [vmem:[#allocation5 + $0x7b0] sm:$0xff]
    %v429 = vld [vmem:[#allocation5 + $0x7b8] sm:$0xff]
    %v430 = vld [vmem:[#allocation5 + $0x7c0] sm:$0xff]
    %v431 = vld [vmem:[#allocation5 + $0x7c8] sm:$0xff]
    %v432 = vld [vmem:[#allocation5 + $0x7d0] sm:$0xff]
    %v433 = vld [vmem:[#allocation5 + $0x7d8] sm:$0xff]
    %v434 = vld [vmem:[#allocation5 + $0x7e0] sm:$0xff]
    %v435 = vld [vmem:[#allocation5 + $0x7e8] sm:$0xff]
    %v436 = vld [vmem:[#allocation5 + $0x7f0] sm:$0xff]
    %v437 = vld [vmem:[#allocation5 + $0x7f8] sm:$0xff]
    %v439 = vcombine.high %v181, %v181
    %v441 = vunpack.c.l.s4 1966171168
    %v442 = vunpack.c.0.s8 %v441
    %v443 = vlaneseq
    %v444 = vshrl.u32 %v443, 7
    %v445 = vsub.s32 %v442, %v444
    %v446 = vrot.slane %v181, %v445
    %v448 = vunpack.c.l.s4 1966171168
    %v449 = vunpack.c.0.s8 %v448
    %v450 = vlaneseq
    %v451 = vshrl.u32 %v450, 7
    %v452 = vsub.s32 %v449, %v451
    %v453 = vrot.slane %v439, %v452
    %v454 = vcombine.high %v446, %v446
    %v455 = vcombine.high %v453, %v453
    %v457 = vunpack.c.l.s4 1966171168
    %v458 = vunpack.c.0.s8 %v457
    %v459 = vlaneseq
    %v460 = vshrl.u32 %v459, 7
    %v461 = vsub.s32 %v458, %v460
    %v462 = vrot.slane %v446, %v461
    %v464 = vunpack.c.l.s4 1966171168
    %v465 = vunpack.c.0.s8 %v464
    %v466 = vlaneseq
    %v467 = vshrl.u32 %v466, 7
    %v468 = vsub.s32 %v465, %v467
    %v469 = vrot.slane %v453, %v468
    %v471 = vunpack.c.l.s4 1966171168
    %v472 = vunpack.c.0.s8 %v471
    %v473 = vlaneseq
    %v474 = vshrl.u32 %v473, 7
    %v475 = vsub.s32 %v472, %v474
    %v476 = vrot.slane %v454, %v475
    %v478 = vunpack.c.l.s4 1966171168
    %v479 = vunpack.c.0.s8 %v478
    %v480 = vlaneseq
    %v481 = vshrl.u32 %v480, 7
    %v482 = vsub.s32 %v479, %v481
    %v483 = vrot.slane %v455, %v482
    %v484 = vcombine.high %v462, %v462
    %v485 = vcombine.high %v469, %v469
    %v486 = vcombine.high %v476, %v476
    %v487 = vcombine.high %v483, %v483
    %v752 = vunpack.c.l.b16 %v182
    %v753 = vunpack.c.h.b16 %v182
    %v754 = vunpack.c.l.b16 %v183
    %v755 = vunpack.c.h.b16 %v183
    %v756 = vunpack.c.l.b16 %v184
    %v757 = vunpack.c.h.b16 %v184
    %v758 = vunpack.c.l.b16 %v185
    %v759 = vunpack.c.h.b16 %v185
    %v760 = vunpack.c.l.b16 %v186
    %v761 = vunpack.c.h.b16 %v186
    %v762 = vunpack.c.l.b16 %v187
    %v763 = vunpack.c.h.b16 %v187
    %v764 = vunpack.c.l.b16 %v188
    %v765 = vunpack.c.h.b16 %v188
    %v766 = vunpack.c.l.b16 %v189
    %v767 = vunpack.c.h.b16 %v189
    %v768 = vunpack.c.l.b16 %v190
    %v769 = vunpack.c.h.b16 %v190
    %v770 = vunpack.c.l.b16 %v191
    %v771 = vunpack.c.h.b16 %v191
    %v772 = vunpack.c.l.b16 %v192
    %v773 = vunpack.c.h.b16 %v192
    %v774 = vunpack.c.l.b16 %v193
    %v775 = vunpack.c.h.b16 %v193
    %v776 = vunpack.c.l.b16 %v194
    %v777 = vunpack.c.h.b16 %v194
    %v778 = vunpack.c.l.b16 %v195
    %v779 = vunpack.c.h.b16 %v195
    %v780 = vunpack.c.l.b16 %v196
    %v781 = vunpack.c.h.b16 %v196
    %v782 = vunpack.c.l.b16 %v197
    %v783 = vunpack.c.h.b16 %v197
    %v784 = vunpack.c.l.b16 %v198
    %v785 = vunpack.c.h.b16 %v198
    %v786 = vunpack.c.l.b16 %v199
    %v787 = vunpack.c.h.b16 %v199
    %v788 = vunpack.c.l.b16 %v200
    %v789 = vunpack.c.h.b16 %v200
    %v790 = vunpack.c.l.b16 %v201
    %v791 = vunpack.c.h.b16 %v201
    %v792 = vunpack.c.l.b16 %v202
    %v793 = vunpack.c.h.b16 %v202
    %v794 = vunpack.c.l.b16 %v203
    %v795 = vunpack.c.h.b16 %v203
    %v796 = vunpack.c.l.b16 %v204
    %v797 = vunpack.c.h.b16 %v204
    %v798 = vunpack.c.l.b16 %v205
    %v799 = vunpack.c.h.b16 %v205
    %v800 = vunpack.c.l.b16 %v206
    %v801 = vunpack.c.h.b16 %v206
    %v802 = vunpack.c.l.b16 %v207
    %v803 = vunpack.c.h.b16 %v207
    %v804 = vunpack.c.l.b16 %v208
    %v805 = vunpack.c.h.b16 %v208
    %v806 = vunpack.c.l.b16 %v209
    %v807 = vunpack.c.h.b16 %v209
    %v808 = vunpack.c.l.b16 %v210
    %v809 = vunpack.c.h.b16 %v210
    %v810 = vunpack.c.l.b16 %v211
    %v811 = vunpack.c.h.b16 %v211
    %v812 = vunpack.c.l.b16 %v212
    %v813 = vunpack.c.h.b16 %v212
    %v814 = vunpack.c.l.b16 %v213
    %v815 = vunpack.c.h.b16 %v213
    %v816 = vunpack.c.l.b16 %v214
    %v817 = vunpack.c.h.b16 %v214
    %v818 = vunpack.c.l.b16 %v215
    %v819 = vunpack.c.h.b16 %v215
    %v820 = vunpack.c.l.b16 %v216
    %v821 = vunpack.c.h.b16 %v216
    %v822 = vunpack.c.l.b16 %v217
    %v823 = vunpack.c.h.b16 %v217
    %v824 = vunpack.c.l.b16 %v218
    %v825 = vunpack.c.h.b16 %v218
    %v826 = vunpack.c.l.b16 %v219
    %v827 = vunpack.c.h.b16 %v219
    %v828 = vunpack.c.l.b16 %v220
    %v829 = vunpack.c.h.b16 %v220
    %v830 = vunpack.c.l.b16 %v221
    %v831 = vunpack.c.h.b16 %v221
    %v832 = vunpack.c.l.b16 %v222
    %v833 = vunpack.c.h.b16 %v222
    %v834 = vunpack.c.l.b16 %v223
    %v835 = vunpack.c.h.b16 %v223
    %v836 = vunpack.c.l.b16 %v224
    %v837 = vunpack.c.h.b16 %v224
    %v838 = vunpack.c.l.b16 %v225
    %v839 = vunpack.c.h.b16 %v225
    %v840 = vunpack.c.l.b16 %v226
    %v841 = vunpack.c.h.b16 %v226
    %v842 = vunpack.c.l.b16 %v227
    %v843 = vunpack.c.h.b16 %v227
    %v844 = vunpack.c.l.b16 %v228
    %v845 = vunpack.c.h.b16 %v228
    %v846 = vunpack.c.l.b16 %v229
    %v847 = vunpack.c.h.b16 %v229
    %v848 = vunpack.c.l.b16 %v230
    %v849 = vunpack.c.h.b16 %v230
    %v850 = vunpack.c.l.b16 %v231
    %v851 = vunpack.c.h.b16 %v231
    %v852 = vunpack.c.l.b16 %v232
    %v853 = vunpack.c.h.b16 %v232
    %v854 = vunpack.c.l.b16 %v233
    %v855 = vunpack.c.h.b16 %v233
    %v856 = vunpack.c.l.b16 %v234
    %v857 = vunpack.c.h.b16 %v234
    %v858 = vunpack.c.l.b16 %v235
    %v859 = vunpack.c.h.b16 %v235
    %v860 = vunpack.c.l.b16 %v236
    %v861 = vunpack.c.h.b16 %v236
    %v862 = vunpack.c.l.b16 %v237
    %v863 = vunpack.c.h.b16 %v237
    %v864 = vunpack.c.l.b16 %v238
    %v865 = vunpack.c.h.b16 %v238
    %v866 = vunpack.c.l.b16 %v239
    %v867 = vunpack.c.h.b16 %v239
    %v868 = vunpack.c.l.b16 %v240
    %v869 = vunpack.c.h.b16 %v240
    %v870 = vunpack.c.l.b16 %v241
    %v871 = vunpack.c.h.b16 %v241
    %v872 = vunpack.c.l.b16 %v242
    %v873 = vunpack.c.h.b16 %v242
    %v874 = vunpack.c.l.b16 %v243
    %v875 = vunpack.c.h.b16 %v243
    %v876 = vunpack.c.l.b16 %v244
    %v877 = vunpack.c.h.b16 %v244
    %v878 = vunpack.c.l.b16 %v245
    %v879 = vunpack.c.h.b16 %v245
    %v880 = vunpack.c.l.b16 %v246
    %v881 = vunpack.c.h.b16 %v246
    %v882 = vunpack.c.l.b16 %v247
    %v883 = vunpack.c.h.b16 %v247
    %v884 = vunpack.c.l.b16 %v248
    %v885 = vunpack.c.h.b16 %v248
    %v886 = vunpack.c.l.b16 %v249
    %v887 = vunpack.c.h.b16 %v249
    %v888 = vunpack.c.l.b16 %v250
    %v889 = vunpack.c.h.b16 %v250
    %v890 = vunpack.c.l.b16 %v251
    %v891 = vunpack.c.h.b16 %v251
    %v892 = vunpack.c.l.b16 %v252
    %v893 = vunpack.c.h.b16 %v252
    %v894 = vunpack.c.l.b16 %v253
    %v895 = vunpack.c.h.b16 %v253
    %v896 = vunpack.c.l.b16 %v254
    %v897 = vunpack.c.h.b16 %v254
    %v898 = vunpack.c.l.b16 %v255
    %v899 = vunpack.c.h.b16 %v255
    %v900 = vunpack.c.l.b16 %v256
    %v901 = vunpack.c.h.b16 %v256
    %v902 = vunpack.c.l.b16 %v257
    %v903 = vunpack.c.h.b16 %v257
    %v904 = vunpack.c.l.b16 %v258
    %v905 = vunpack.c.h.b16 %v258
    %v906 = vunpack.c.l.b16 %v259
    %v907 = vunpack.c.h.b16 %v259
    %v908 = vunpack.c.l.b16 %v260
    %v909 = vunpack.c.h.b16 %v260
    %v910 = vunpack.c.l.b16 %v261
    %v911 = vunpack.c.h.b16 %v261
    %v912 = vunpack.c.l.b16 %v262
    %v913 = vunpack.c.h.b16 %v262
    %v914 = vunpack.c.l.b16 %v263
    %v915 = vunpack.c.h.b16 %v263
    %v916 = vunpack.c.l.b16 %v264
    %v917 = vunpack.c.h.b16 %v264
    %v918 = vunpack.c.l.b16 %v265
    %v919 = vunpack.c.h.b16 %v265
    %v920 = vunpack.c.l.b16 %v266
    %v921 = vunpack.c.h.b16 %v266
    %v922 = vunpack.c.l.b16 %v267
    %v923 = vunpack.c.h.b16 %v267
    %v924 = vunpack.c.l.b16 %v268
    %v925 = vunpack.c.h.b16 %v268
    %v926 = vunpack.c.l.b16 %v269
    %v927 = vunpack.c.h.b16 %v269
    %v928 = vunpack.c.l.b16 %v270
    %v929 = vunpack.c.h.b16 %v270
    %v930 = vunpack.c.l.b16 %v271
    %v931 = vunpack.c.h.b16 %v271
    %v932 = vunpack.c.l.b16 %v272
    %v933 = vunpack.c.h.b16 %v272
    %v934 = vunpack.c.l.b16 %v273
    %v935 = vunpack.c.h.b16 %v273
    %v936 = vunpack.c.l.b16 %v274
    %v937 = vunpack.c.h.b16 %v274
    %v938 = vunpack.c.l.b16 %v275
    %v939 = vunpack.c.h.b16 %v275
    %v940 = vunpack.c.l.b16 %v276
    %v941 = vunpack.c.h.b16 %v276
    %v942 = vunpack.c.l.b16 %v277
    %v943 = vunpack.c.h.b16 %v277
    %v944 = vunpack.c.l.b16 %v278
    %v945 = vunpack.c.h.b16 %v278
    %v946 = vunpack.c.l.b16 %v279
    %v947 = vunpack.c.h.b16 %v279
    %v948 = vunpack.c.l.b16 %v280
    %v949 = vunpack.c.h.b16 %v280
    %v950 = vunpack.c.l.b16 %v281
    %v951 = vunpack.c.h.b16 %v281
    %v952 = vunpack.c.l.b16 %v282
    %v953 = vunpack.c.h.b16 %v282
    %v954 = vunpack.c.l.b16 %v283
    %v955 = vunpack.c.h.b16 %v283
    %v956 = vunpack.c.l.b16 %v284
    %v957 = vunpack.c.h.b16 %v284
    %v958 = vunpack.c.l.b16 %v285
    %v959 = vunpack.c.h.b16 %v285
    %v960 = vunpack.c.l.b16 %v286
    %v961 = vunpack.c.h.b16 %v286
    %v962 = vunpack.c.l.b16 %v287
    %v963 = vunpack.c.h.b16 %v287
    %v964 = vunpack.c.l.b16 %v288
    %v965 = vunpack.c.h.b16 %v288
    %v966 = vunpack.c.l.b16 %v289
    %v967 = vunpack.c.h.b16 %v289
    %v968 = vunpack.c.l.b16 %v290
    %v969 = vunpack.c.h.b16 %v290
    %v970 = vunpack.c.l.b16 %v291
    %v971 = vunpack.c.h.b16 %v291
    %v972 = vunpack.c.l.b16 %v292
    %v973 = vunpack.c.h.b16 %v292
    %v974 = vunpack.c.l.b16 %v293
    %v975 = vunpack.c.h.b16 %v293
    %v976 = vunpack.c.l.b16 %v294
    %v977 = vunpack.c.h.b16 %v294
    %v978 = vunpack.c.l.b16 %v295
    %v979 = vunpack.c.h.b16 %v295
    %v980 = vunpack.c.l.b16 %v296
    %v981 = vunpack.c.h.b16 %v296
    %v982 = vunpack.c.l.b16 %v297
    %v983 = vunpack.c.h.b16 %v297
    %v984 = vunpack.c.l.b16 %v298
    %v985 = vunpack.c.h.b16 %v298
    %v986 = vunpack.c.l.b16 %v299
    %v987 = vunpack.c.h.b16 %v299
    %v988 = vunpack.c.l.b16 %v300
    %v989 = vunpack.c.h.b16 %v300
    %v990 = vunpack.c.l.b16 %v301
    %v991 = vunpack.c.h.b16 %v301
    %v992 = vunpack.c.l.b16 %v302
    %v993 = vunpack.c.h.b16 %v302
    %v994 = vunpack.c.l.b16 %v303
    %v995 = vunpack.c.h.b16 %v303
    %v996 = vunpack.c.l.b16 %v304
    %v997 = vunpack.c.h.b16 %v304
    %v998 = vunpack.c.l.b16 %v305
    %v999 = vunpack.c.h.b16 %v305
    %v1000 = vunpack.c.l.b16 %v306
    %v1001 = vunpack.c.h.b16 %v306
    %v1002 = vunpack.c.l.b16 %v307
    %v1003 = vunpack.c.h.b16 %v307
    %v1004 = vunpack.c.l.b16 %v308
    %v1005 = vunpack.c.h.b16 %v308
    %v1006 = vunpack.c.l.b16 %v309
    %v1007 = vunpack.c.h.b16 %v309
    %v1008 = vunpack.c.l.b16 %v310
    %v1009 = vunpack.c.h.b16 %v310
    %v1010 = vunpack.c.l.b16 %v311
    %v1011 = vunpack.c.h.b16 %v311
    %v1012 = vunpack.c.l.b16 %v312
    %v1013 = vunpack.c.h.b16 %v312
    %v1014 = vunpack.c.l.b16 %v313
    %v1015 = vunpack.c.h.b16 %v313
    %v1016 = vunpack.c.l.b16 %v314
    %v1017 = vunpack.c.h.b16 %v314
    %v1018 = vunpack.c.l.b16 %v315
    %v1019 = vunpack.c.h.b16 %v315
    %v1020 = vunpack.c.l.b16 %v316
    %v1021 = vunpack.c.h.b16 %v316
    %v1022 = vunpack.c.l.b16 %v317
    %v1023 = vunpack.c.h.b16 %v317
    %v1024 = vunpack.c.l.b16 %v318
    %v1025 = vunpack.c.h.b16 %v318
    %v1026 = vunpack.c.l.b16 %v319
    %v1027 = vunpack.c.h.b16 %v319
    %v1028 = vunpack.c.l.b16 %v320
    %v1029 = vunpack.c.h.b16 %v320
    %v1030 = vunpack.c.l.b16 %v321
    %v1031 = vunpack.c.h.b16 %v321
    %v1032 = vunpack.c.l.b16 %v322
    %v1033 = vunpack.c.h.b16 %v322
    %v1034 = vunpack.c.l.b16 %v323
    %v1035 = vunpack.c.h.b16 %v323
    %v1036 = vunpack.c.l.b16 %v324
    %v1037 = vunpack.c.h.b16 %v324
    %v1038 = vunpack.c.l.b16 %v325
    %v1039 = vunpack.c.h.b16 %v325
    %v1040 = vunpack.c.l.b16 %v326
    %v1041 = vunpack.c.h.b16 %v326
    %v1042 = vunpack.c.l.b16 %v327
    %v1043 = vunpack.c.h.b16 %v327
    %v1044 = vunpack.c.l.b16 %v328
    %v1045 = vunpack.c.h.b16 %v328
    %v1046 = vunpack.c.l.b16 %v329
    %v1047 = vunpack.c.h.b16 %v329
    %v1048 = vunpack.c.l.b16 %v330
    %v1049 = vunpack.c.h.b16 %v330
    %v1050 = vunpack.c.l.b16 %v331
    %v1051 = vunpack.c.h.b16 %v331
    %v1052 = vunpack.c.l.b16 %v332
    %v1053 = vunpack.c.h.b16 %v332
    %v1054 = vunpack.c.l.b16 %v333
    %v1055 = vunpack.c.h.b16 %v333
    %v1056 = vunpack.c.l.b16 %v334
    %v1057 = vunpack.c.h.b16 %v334
    %v1058 = vunpack.c.l.b16 %v335
    %v1059 = vunpack.c.h.b16 %v335
    %v1060 = vunpack.c.l.b16 %v336
    %v1061 = vunpack.c.h.b16 %v336
    %v1062 = vunpack.c.l.b16 %v337
    %v1063 = vunpack.c.h.b16 %v337
    %v1064 = vunpack.c.l.b16 %v338
    %v1065 = vunpack.c.h.b16 %v338
    %v1066 = vunpack.c.l.b16 %v339
    %v1067 = vunpack.c.h.b16 %v339
    %v1068 = vunpack.c.l.b16 %v340
    %v1069 = vunpack.c.h.b16 %v340
    %v1070 = vunpack.c.l.b16 %v341
    %v1071 = vunpack.c.h.b16 %v341
    %v1072 = vunpack.c.l.b16 %v342
    %v1073 = vunpack.c.h.b16 %v342
    %v1074 = vunpack.c.l.b16 %v343
    %v1075 = vunpack.c.h.b16 %v343
    %v1076 = vunpack.c.l.b16 %v344
    %v1077 = vunpack.c.h.b16 %v344
    %v1078 = vunpack.c.l.b16 %v345
    %v1079 = vunpack.c.h.b16 %v345
    %v1080 = vunpack.c.l.b16 %v346
    %v1081 = vunpack.c.h.b16 %v346
    %v1082 = vunpack.c.l.b16 %v347
    %v1083 = vunpack.c.h.b16 %v347
    %v1084 = vunpack.c.l.b16 %v348
    %v1085 = vunpack.c.h.b16 %v348
    %v1086 = vunpack.c.l.b16 %v349
    %v1087 = vunpack.c.h.b16 %v349
    %v1088 = vunpack.c.l.b16 %v350
    %v1089 = vunpack.c.h.b16 %v350
    %v1090 = vunpack.c.l.b16 %v351
    %v1091 = vunpack.c.h.b16 %v351
    %v1092 = vunpack.c.l.b16 %v352
    %v1093 = vunpack.c.h.b16 %v352
    %v1094 = vunpack.c.l.b16 %v353
    %v1095 = vunpack.c.h.b16 %v353
    %v1096 = vunpack.c.l.b16 %v354
    %v1097 = vunpack.c.h.b16 %v354
    %v1098 = vunpack.c.l.b16 %v355
    %v1099 = vunpack.c.h.b16 %v355
    %v1100 = vunpack.c.l.b16 %v356
    %v1101 = vunpack.c.h.b16 %v356
    %v1102 = vunpack.c.l.b16 %v357
    %v1103 = vunpack.c.h.b16 %v357
    %v1104 = vunpack.c.l.b16 %v358
    %v1105 = vunpack.c.h.b16 %v358
    %v1106 = vunpack.c.l.b16 %v359
    %v1107 = vunpack.c.h.b16 %v359
    %v1108 = vunpack.c.l.b16 %v360
    %v1109 = vunpack.c.h.b16 %v360
    %v1110 = vunpack.c.l.b16 %v361
    %v1111 = vunpack.c.h.b16 %v361
    %v1112 = vunpack.c.l.b16 %v362
    %v1113 = vunpack.c.h.b16 %v362
    %v1114 = vunpack.c.l.b16 %v363
    %v1115 = vunpack.c.h.b16 %v363
    %v1116 = vunpack.c.l.b16 %v364
    %v1117 = vunpack.c.h.b16 %v364
    %v1118 = vunpack.c.l.b16 %v365
    %v1119 = vunpack.c.h.b16 %v365
    %v1120 = vunpack.c.l.b16 %v366
    %v1121 = vunpack.c.h.b16 %v366
    %v1122 = vunpack.c.l.b16 %v367
    %v1123 = vunpack.c.h.b16 %v367
    %v1124 = vunpack.c.l.b16 %v368
    %v1125 = vunpack.c.h.b16 %v368
    %v1126 = vunpack.c.l.b16 %v369
    %v1127 = vunpack.c.h.b16 %v369
    %v1128 = vunpack.c.l.b16 %v370
    %v1129 = vunpack.c.h.b16 %v370
    %v1130 = vunpack.c.l.b16 %v371
    %v1131 = vunpack.c.h.b16 %v371
    %v1132 = vunpack.c.l.b16 %v372
    %v1133 = vunpack.c.h.b16 %v372
    %v1134 = vunpack.c.l.b16 %v373
    %v1135 = vunpack.c.h.b16 %v373
    %v1136 = vunpack.c.l.b16 %v374
    %v1137 = vunpack.c.h.b16 %v374
    %v1138 = vunpack.c.l.b16 %v375
    %v1139 = vunpack.c.h.b16 %v375
    %v1140 = vunpack.c.l.b16 %v376
    %v1141 = vunpack.c.h.b16 %v376
    %v1142 = vunpack.c.l.b16 %v377
    %v1143 = vunpack.c.h.b16 %v377
    %v1144 = vunpack.c.l.b16 %v378
    %v1145 = vunpack.c.h.b16 %v378
    %v1146 = vunpack.c.l.b16 %v379
    %v1147 = vunpack.c.h.b16 %v379
    %v1148 = vunpack.c.l.b16 %v380
    %v1149 = vunpack.c.h.b16 %v380
    %v1150 = vunpack.c.l.b16 %v381
    %v1151 = vunpack.c.h.b16 %v381
    %v1152 = vunpack.c.l.b16 %v382
    %v1153 = vunpack.c.h.b16 %v382
    %v1154 = vunpack.c.l.b16 %v383
    %v1155 = vunpack.c.h.b16 %v383
    %v1156 = vunpack.c.l.b16 %v384
    %v1157 = vunpack.c.h.b16 %v384
    %v1158 = vunpack.c.l.b16 %v385
    %v1159 = vunpack.c.h.b16 %v385
    %v1160 = vunpack.c.l.b16 %v386
    %v1161 = vunpack.c.h.b16 %v386
    %v1162 = vunpack.c.l.b16 %v387
    %v1163 = vunpack.c.h.b16 %v387
    %v1164 = vunpack.c.l.b16 %v388
    %v1165 = vunpack.c.h.b16 %v388
    %v1166 = vunpack.c.l.b16 %v389
    %v1167 = vunpack.c.h.b16 %v389
    %v1168 = vunpack.c.l.b16 %v390
    %v1169 = vunpack.c.h.b16 %v390
    %v1170 = vunpack.c.l.b16 %v391
    %v1171 = vunpack.c.h.b16 %v391
    %v1172 = vunpack.c.l.b16 %v392
    %v1173 = vunpack.c.h.b16 %v392
    %v1174 = vunpack.c.l.b16 %v393
    %v1175 = vunpack.c.h.b16 %v393
    %v1176 = vunpack.c.l.b16 %v394
    %v1177 = vunpack.c.h.b16 %v394
    %v1178 = vunpack.c.l.b16 %v395
    %v1179 = vunpack.c.h.b16 %v395
    %v1180 = vunpack.c.l.b16 %v396
    %v1181 = vunpack.c.h.b16 %v396
    %v1182 = vunpack.c.l.b16 %v397
    %v1183 = vunpack.c.h.b16 %v397
    %v1184 = vunpack.c.l.b16 %v398
    %v1185 = vunpack.c.h.b16 %v398
    %v1186 = vunpack.c.l.b16 %v399
    %v1187 = vunpack.c.h.b16 %v399
    %v1188 = vunpack.c.l.b16 %v400
    %v1189 = vunpack.c.h.b16 %v400
    %v1190 = vunpack.c.l.b16 %v401
    %v1191 = vunpack.c.h.b16 %v401
    %v1192 = vunpack.c.l.b16 %v402
    %v1193 = vunpack.c.h.b16 %v402
    %v1194 = vunpack.c.l.b16 %v403
    %v1195 = vunpack.c.h.b16 %v403
    %v1196 = vunpack.c.l.b16 %v404
    %v1197 = vunpack.c.h.b16 %v404
    %v1198 = vunpack.c.l.b16 %v405
    %v1199 = vunpack.c.h.b16 %v405
    %v1200 = vunpack.c.l.b16 %v406
    %v1201 = vunpack.c.h.b16 %v406
    %v1202 = vunpack.c.l.b16 %v407
    %v1203 = vunpack.c.h.b16 %v407
    %v1204 = vunpack.c.l.b16 %v408
    %v1205 = vunpack.c.h.b16 %v408
    %v1206 = vunpack.c.l.b16 %v409
    %v1207 = vunpack.c.h.b16 %v409
    %v1208 = vunpack.c.l.b16 %v410
    %v1209 = vunpack.c.h.b16 %v410
    %v1210 = vunpack.c.l.b16 %v411
    %v1211 = vunpack.c.h.b16 %v411
    %v1212 = vunpack.c.l.b16 %v412
    %v1213 = vunpack.c.h.b16 %v412
    %v1214 = vunpack.c.l.b16 %v413
    %v1215 = vunpack.c.h.b16 %v413
    %v1216 = vunpack.c.l.b16 %v414
    %v1217 = vunpack.c.h.b16 %v414
    %v1218 = vunpack.c.l.b16 %v415
    %v1219 = vunpack.c.h.b16 %v415
    %v1220 = vunpack.c.l.b16 %v416
    %v1221 = vunpack.c.h.b16 %v416
    %v1222 = vunpack.c.l.b16 %v417
    %v1223 = vunpack.c.h.b16 %v417
    %v1224 = vunpack.c.l.b16 %v418
    %v1225 = vunpack.c.h.b16 %v418
    %v1226 = vunpack.c.l.b16 %v419
    %v1227 = vunpack.c.h.b16 %v419
    %v1228 = vunpack.c.l.b16 %v420
    %v1229 = vunpack.c.h.b16 %v420
    %v1230 = vunpack.c.l.b16 %v421
    %v1231 = vunpack.c.h.b16 %v421
    %v1232 = vunpack.c.l.b16 %v422
    %v1233 = vunpack.c.h.b16 %v422
    %v1234 = vunpack.c.l.b16 %v423
    %v1235 = vunpack.c.h.b16 %v423
    %v1236 = vunpack.c.l.b16 %v424
    %v1237 = vunpack.c.h.b16 %v424
    %v1238 = vunpack.c.l.b16 %v425
    %v1239 = vunpack.c.h.b16 %v425
    %v1240 = vunpack.c.l.b16 %v426
    %v1241 = vunpack.c.h.b16 %v426
    %v1242 = vunpack.c.l.b16 %v427
    %v1243 = vunpack.c.h.b16 %v427
    %v1244 = vunpack.c.l.b16 %v428
    %v1245 = vunpack.c.h.b16 %v428
    %v1246 = vunpack.c.l.b16 %v429
    %v1247 = vunpack.c.h.b16 %v429
    %v1248 = vunpack.c.l.b16 %v430
    %v1249 = vunpack.c.h.b16 %v430
    %v1250 = vunpack.c.l.b16 %v431
    %v1251 = vunpack.c.h.b16 %v431
    %v1252 = vunpack.c.l.b16 %v432
    %v1253 = vunpack.c.h.b16 %v432
    %v1254 = vunpack.c.l.b16 %v433
    %v1255 = vunpack.c.h.b16 %v433
    %v1256 = vunpack.c.l.b16 %v434
    %v1257 = vunpack.c.h.b16 %v434
    %v1258 = vunpack.c.l.b16 %v435
    %v1259 = vunpack.c.h.b16 %v435
    %v1260 = vunpack.c.l.b16 %v436
    %v1261 = vunpack.c.h.b16 %v436
    %v1262 = vunpack.c.l.b16 %v437
    %v1263 = vunpack.c.h.b16 %v437
    %v1264 = vpack.c.b16 %v756, %v752
    %v1265 = vpack.c.b16 %v757, %v753
    %v1266 = vpack.c.b16 %v758, %v754
    %v1267 = vpack.c.b16 %v759, %v755
    %v1268 = vpack.c.b16 %v764, %v760
    %v1269 = vpack.c.b16 %v765, %v761
    %v1270 = vpack.c.b16 %v766, %v762
    %v1271 = vpack.c.b16 %v767, %v763
    %v1272 = vpack.c.b16 %v772, %v768
    %v1273 = vpack.c.b16 %v773, %v769
    %v1274 = vpack.c.b16 %v774, %v770
    %v1275 = vpack.c.b16 %v775, %v771
    %v1276 = vpack.c.b16 %v780, %v776
    %v1277 = vpack.c.b16 %v781, %v777
    %v1278 = vpack.c.b16 %v782, %v778
    %v1279 = vpack.c.b16 %v783, %v779
    %v1280 = vpack.c.b16 %v788, %v784
    %v1281 = vpack.c.b16 %v789, %v785
    %v1282 = vpack.c.b16 %v790, %v786
    %v1283 = vpack.c.b16 %v791, %v787
    %v1284 = vpack.c.b16 %v796, %v792
    %v1285 = vpack.c.b16 %v797, %v793
    %v1286 = vpack.c.b16 %v798, %v794
    %v1287 = vpack.c.b16 %v799, %v795
    %v1288 = vpack.c.b16 %v804, %v800
    %v1289 = vpack.c.b16 %v805, %v801
    %v1290 = vpack.c.b16 %v806, %v802
    %v1291 = vpack.c.b16 %v807, %v803
    %v1292 = vpack.c.b16 %v812, %v808
    %v1293 = vpack.c.b16 %v813, %v809
    %v1294 = vpack.c.b16 %v814, %v810
    %v1295 = vpack.c.b16 %v815, %v811
    %v1296 = vpack.c.b16 %v820, %v816
    %v1297 = vpack.c.b16 %v821, %v817
    %v1298 = vpack.c.b16 %v822, %v818
    %v1299 = vpack.c.b16 %v823, %v819
    %v1300 = vpack.c.b16 %v828, %v824
    %v1301 = vpack.c.b16 %v829, %v825
    %v1302 = vpack.c.b16 %v830, %v826
    %v1303 = vpack.c.b16 %v831, %v827
    %v1304 = vpack.c.b16 %v836, %v832
    %v1305 = vpack.c.b16 %v837, %v833
    %v1306 = vpack.c.b16 %v838, %v834
    %v1307 = vpack.c.b16 %v839, %v835
    %v1308 = vpack.c.b16 %v844, %v840
    %v1309 = vpack.c.b16 %v845, %v841
    %v1310 = vpack.c.b16 %v846, %v842
    %v1311 = vpack.c.b16 %v847, %v843
    %v1312 = vpack.c.b16 %v852, %v848
    %v1313 = vpack.c.b16 %v853, %v849
    %v1314 = vpack.c.b16 %v854, %v850
    %v1315 = vpack.c.b16 %v855, %v851
    %v1316 = vpack.c.b16 %v860, %v856
    %v1317 = vpack.c.b16 %v861, %v857
    %v1318 = vpack.c.b16 %v862, %v858
    %v1319 = vpack.c.b16 %v863, %v859
    %v1320 = vpack.c.b16 %v868, %v864
    %v1321 = vpack.c.b16 %v869, %v865
    %v1322 = vpack.c.b16 %v870, %v866
    %v1323 = vpack.c.b16 %v871, %v867
    %v1324 = vpack.c.b16 %v876, %v872
    %v1325 = vpack.c.b16 %v877, %v873
    %v1326 = vpack.c.b16 %v878, %v874
    %v1327 = vpack.c.b16 %v879, %v875
    %v1328 = vpack.c.b16 %v884, %v880
    %v1329 = vpack.c.b16 %v885, %v881
    %v1330 = vpack.c.b16 %v886, %v882
    %v1331 = vpack.c.b16 %v887, %v883
    %v1332 = vpack.c.b16 %v892, %v888
    %v1333 = vpack.c.b16 %v893, %v889
    %v1334 = vpack.c.b16 %v894, %v890
    %v1335 = vpack.c.b16 %v895, %v891
    %v1336 = vpack.c.b16 %v900, %v896
    %v1337 = vpack.c.b16 %v901, %v897
    %v1338 = vpack.c.b16 %v902, %v898
    %v1339 = vpack.c.b16 %v903, %v899
    %v1340 = vpack.c.b16 %v908, %v904
    %v1341 = vpack.c.b16 %v909, %v905
    %v1342 = vpack.c.b16 %v910, %v906
    %v1343 = vpack.c.b16 %v911, %v907
    %v1344 = vpack.c.b16 %v916, %v912
    %v1345 = vpack.c.b16 %v917, %v913
    %v1346 = vpack.c.b16 %v918, %v914
    %v1347 = vpack.c.b16 %v919, %v915
    %v1348 = vpack.c.b16 %v924, %v920
    %v1349 = vpack.c.b16 %v925, %v921
    %v1350 = vpack.c.b16 %v926, %v922
    %v1351 = vpack.c.b16 %v927, %v923
    %v1352 = vpack.c.b16 %v932, %v928
    %v1353 = vpack.c.b16 %v933, %v929
    %v1354 = vpack.c.b16 %v934, %v930
    %v1355 = vpack.c.b16 %v935, %v931
    %v1356 = vpack.c.b16 %v940, %v936
    %v1357 = vpack.c.b16 %v941, %v937
    %v1358 = vpack.c.b16 %v942, %v938
    %v1359 = vpack.c.b16 %v943, %v939
    %v1360 = vpack.c.b16 %v948, %v944
    %v1361 = vpack.c.b16 %v949, %v945
    %v1362 = vpack.c.b16 %v950, %v946
    %v1363 = vpack.c.b16 %v951, %v947
    %v1364 = vpack.c.b16 %v956, %v952
    %v1365 = vpack.c.b16 %v957, %v953
    %v1366 = vpack.c.b16 %v958, %v954
    %v1367 = vpack.c.b16 %v959, %v955
    %v1368 = vpack.c.b16 %v964, %v960
    %v1369 = vpack.c.b16 %v965, %v961
    %v1370 = vpack.c.b16 %v966, %v962
    %v1371 = vpack.c.b16 %v967, %v963
    %v1372 = vpack.c.b16 %v972, %v968
    %v1373 = vpack.c.b16 %v973, %v969
    %v1374 = vpack.c.b16 %v974, %v970
    %v1375 = vpack.c.b16 %v975, %v971
    %v1376 = vpack.c.b16 %v980, %v976
    %v1377 = vpack.c.b16 %v981, %v977
    %v1378 = vpack.c.b16 %v982, %v978
    %v1379 = vpack.c.b16 %v983, %v979
    %v1380 = vpack.c.b16 %v988, %v984
    %v1381 = vpack.c.b16 %v989, %v985
    %v1382 = vpack.c.b16 %v990, %v986
    %v1383 = vpack.c.b16 %v991, %v987
    %v1384 = vpack.c.b16 %v996, %v992
    %v1385 = vpack.c.b16 %v997, %v993
    %v1386 = vpack.c.b16 %v998, %v994
    %v1387 = vpack.c.b16 %v999, %v995
    %v1388 = vpack.c.b16 %v1004, %v1000
    %v1389 = vpack.c.b16 %v1005, %v1001
    %v1390 = vpack.c.b16 %v1006, %v1002
    %v1391 = vpack.c.b16 %v1007, %v1003
    %v1392 = vpack.c.b16 %v1012, %v1008
    %v1393 = vpack.c.b16 %v1013, %v1009
    %v1394 = vpack.c.b16 %v1014, %v1010
    %v1395 = vpack.c.b16 %v1015, %v1011
    %v1396 = vpack.c.b16 %v1020, %v1016
    %v1397 = vpack.c.b16 %v1021, %v1017
    %v1398 = vpack.c.b16 %v1022, %v1018
    %v1399 = vpack.c.b16 %v1023, %v1019
    %v1400 = vpack.c.b16 %v1028, %v1024
    %v1401 = vpack.c.b16 %v1029, %v1025
    %v1402 = vpack.c.b16 %v1030, %v1026
    %v1403 = vpack.c.b16 %v1031, %v1027
    %v1404 = vpack.c.b16 %v1036, %v1032
    %v1405 = vpack.c.b16 %v1037, %v1033
    %v1406 = vpack.c.b16 %v1038, %v1034
    %v1407 = vpack.c.b16 %v1039, %v1035
    %v1408 = vpack.c.b16 %v1044, %v1040
    %v1409 = vpack.c.b16 %v1045, %v1041
    %v1410 = vpack.c.b16 %v1046, %v1042
    %v1411 = vpack.c.b16 %v1047, %v1043
    %v1412 = vpack.c.b16 %v1052, %v1048
    %v1413 = vpack.c.b16 %v1053, %v1049
    %v1414 = vpack.c.b16 %v1054, %v1050
    %v1415 = vpack.c.b16 %v1055, %v1051
    %v1416 = vpack.c.b16 %v1060, %v1056
    %v1417 = vpack.c.b16 %v1061, %v1057
    %v1418 = vpack.c.b16 %v1062, %v1058
    %v1419 = vpack.c.b16 %v1063, %v1059
    %v1420 = vpack.c.b16 %v1068, %v1064
    %v1421 = vpack.c.b16 %v1069, %v1065
    %v1422 = vpack.c.b16 %v1070, %v1066
    %v1423 = vpack.c.b16 %v1071, %v1067
    %v1424 = vpack.c.b16 %v1076, %v1072
    %v1425 = vpack.c.b16 %v1077, %v1073
    %v1426 = vpack.c.b16 %v1078, %v1074
    %v1427 = vpack.c.b16 %v1079, %v1075
    %v1428 = vpack.c.b16 %v1084, %v1080
    %v1429 = vpack.c.b16 %v1085, %v1081
    %v1430 = vpack.c.b16 %v1086, %v1082
    %v1431 = vpack.c.b16 %v1087, %v1083
    %v1432 = vpack.c.b16 %v1092, %v1088
    %v1433 = vpack.c.b16 %v1093, %v1089
    %v1434 = vpack.c.b16 %v1094, %v1090
    %v1435 = vpack.c.b16 %v1095, %v1091
    %v1436 = vpack.c.b16 %v1100, %v1096
    %v1437 = vpack.c.b16 %v1101, %v1097
    %v1438 = vpack.c.b16 %v1102, %v1098
    %v1439 = vpack.c.b16 %v1103, %v1099
    %v1440 = vpack.c.b16 %v1108, %v1104
    %v1441 = vpack.c.b16 %v1109, %v1105
    %v1442 = vpack.c.b16 %v1110, %v1106
    %v1443 = vpack.c.b16 %v1111, %v1107
    %v1444 = vpack.c.b16 %v1116, %v1112
    %v1445 = vpack.c.b16 %v1117, %v1113
    %v1446 = vpack.c.b16 %v1118, %v1114
    %v1447 = vpack.c.b16 %v1119, %v1115
    %v1448 = vpack.c.b16 %v1124, %v1120
    %v1449 = vpack.c.b16 %v1125, %v1121
    %v1450 = vpack.c.b16 %v1126, %v1122
    %v1451 = vpack.c.b16 %v1127, %v1123
    %v1452 = vpack.c.b16 %v1132, %v1128
    %v1453 = vpack.c.b16 %v1133, %v1129
    %v1454 = vpack.c.b16 %v1134, %v1130
    %v1455 = vpack.c.b16 %v1135, %v1131
    %v1456 = vpack.c.b16 %v1140, %v1136
    %v1457 = vpack.c.b16 %v1141, %v1137
    %v1458 = vpack.c.b16 %v1142, %v1138
    %v1459 = vpack.c.b16 %v1143, %v1139
    %v1460 = vpack.c.b16 %v1148, %v1144
    %v1461 = vpack.c.b16 %v1149, %v1145
    %v1462 = vpack.c.b16 %v1150, %v1146
    %v1463 = vpack.c.b16 %v1151, %v1147
    %v1464 = vpack.c.b16 %v1156, %v1152
    %v1465 = vpack.c.b16 %v1157, %v1153
    %v1466 = vpack.c.b16 %v1158, %v1154
    %v1467 = vpack.c.b16 %v1159, %v1155
    %v1468 = vpack.c.b16 %v1164, %v1160
    %v1469 = vpack.c.b16 %v1165, %v1161
    %v1470 = vpack.c.b16 %v1166, %v1162
    %v1471 = vpack.c.b16 %v1167, %v1163
    %v1472 = vpack.c.b16 %v1172, %v1168
    %v1473 = vpack.c.b16 %v1173, %v1169
    %v1474 = vpack.c.b16 %v1174, %v1170
    %v1475 = vpack.c.b16 %v1175, %v1171
    %v1476 = vpack.c.b16 %v1180, %v1176
    %v1477 = vpack.c.b16 %v1181, %v1177
    %v1478 = vpack.c.b16 %v1182, %v1178
    %v1479 = vpack.c.b16 %v1183, %v1179
    %v1480 = vpack.c.b16 %v1188, %v1184
    %v1481 = vpack.c.b16 %v1189, %v1185
    %v1482 = vpack.c.b16 %v1190, %v1186
    %v1483 = vpack.c.b16 %v1191, %v1187
    %v1484 = vpack.c.b16 %v1196, %v1192
    %v1485 = vpack.c.b16 %v1197, %v1193
    %v1486 = vpack.c.b16 %v1198, %v1194
    %v1487 = vpack.c.b16 %v1199, %v1195
    %v1488 = vpack.c.b16 %v1204, %v1200
    %v1489 = vpack.c.b16 %v1205, %v1201
    %v1490 = vpack.c.b16 %v1206, %v1202
    %v1491 = vpack.c.b16 %v1207, %v1203
    %v1492 = vpack.c.b16 %v1212, %v1208
    %v1493 = vpack.c.b16 %v1213, %v1209
    %v1494 = vpack.c.b16 %v1214, %v1210
    %v1495 = vpack.c.b16 %v1215, %v1211
    %v1496 = vpack.c.b16 %v1220, %v1216
    %v1497 = vpack.c.b16 %v1221, %v1217
    %v1498 = vpack.c.b16 %v1222, %v1218
    %v1499 = vpack.c.b16 %v1223, %v1219
    %v1500 = vpack.c.b16 %v1228, %v1224
    %v1501 = vpack.c.b16 %v1229, %v1225
    %v1502 = vpack.c.b16 %v1230, %v1226
    %v1503 = vpack.c.b16 %v1231, %v1227
    %v1504 = vpack.c.b16 %v1236, %v1232
    %v1505 = vpack.c.b16 %v1237, %v1233
    %v1506 = vpack.c.b16 %v1238, %v1234
    %v1507 = vpack.c.b16 %v1239, %v1235
    %v1508 = vpack.c.b16 %v1244, %v1240
    %v1509 = vpack.c.b16 %v1245, %v1241
    %v1510 = vpack.c.b16 %v1246, %v1242
    %v1511 = vpack.c.b16 %v1247, %v1243
    %v1512 = vpack.c.b16 %v1252, %v1248
    %v1513 = vpack.c.b16 %v1253, %v1249
    %v1514 = vpack.c.b16 %v1254, %v1250
    %v1515 = vpack.c.b16 %v1255, %v1251
    %v1516 = vpack.c.b16 %v1260, %v1256
    %v1517 = vpack.c.b16 %v1261, %v1257
    %v1518 = vpack.c.b16 %v1262, %v1258
    %v1519 = vpack.c.b16 %v1263, %v1259
    %1776 = vmatprep.subr.bf16.mxu0 %v1265
    %1777 = vmatpush1.bf16.msra.mxu0 %v1264
    %1778 = vmatprep.subr.bf16.mxu0 %v1269
    %1779 = vmatpush1.bf16.msra.mxu0 %v1268
    %1780 = vmatprep.subr.bf16.mxu0 %v1273
    %1781 = vmatpush1.bf16.msra.mxu0 %v1272
    %1782 = vmatprep.subr.bf16.mxu0 %v1277
    %1783 = vmatpush1.bf16.msra.mxu0 %v1276
    %1784 = vmatprep.subr.bf16.mxu0 %v1281
    %1785 = vmatpush1.bf16.msra.mxu0 %v1280
    %1786 = vmatprep.subr.bf16.mxu0 %v1285
    %1787 = vmatpush1.bf16.msra.mxu0 %v1284
    %1788 = vmatprep.subr.bf16.mxu0 %v1289
    %1789 = vmatpush1.bf16.msra.mxu0 %v1288
    %1790 = vmatprep.subr.bf16.mxu0 %v1293
    %1791 = vmatpush1.bf16.msra.mxu0 %v1292
    %1792 = vmatprep.subr.bf16.mxu0 %v1297
    %1793 = vmatpush1.bf16.msra.mxu0 %v1296
    %1794 = vmatprep.subr.bf16.mxu0 %v1301
    %1795 = vmatpush1.bf16.msra.mxu0 %v1300
    %1796 = vmatprep.subr.bf16.mxu0 %v1305
    %1797 = vmatpush1.bf16.msra.mxu0 %v1304
    %1798 = vmatprep.subr.bf16.mxu0 %v1309
    %1799 = vmatpush1.bf16.msra.mxu0 %v1308
    %1800 = vmatprep.subr.bf16.mxu0 %v1313
    %1801 = vmatpush1.bf16.msra.mxu0 %v1312
    %1802 = vmatprep.subr.bf16.mxu0 %v1317
    %1803 = vmatpush1.bf16.msra.mxu0 %v1316
    %1804 = vmatprep.subr.bf16.mxu0 %v1321
    %1805 = vmatpush1.bf16.msra.mxu0 %v1320
    %1806 = vmatprep.subr.bf16.mxu0 %v1325
    %1807 = vmatpush1.bf16.msra.mxu0 %v1324
    %1808 = vmatprep.mubr.bf16.mxu0 %v476
    %1809 = vmatmul.mubr.bf16.gmra.mrb[0].mxu0 %v462
    %v1810 = vpop.f32.mrb[0].mxu0
    %v1811 = vadd.f32 0.0, %v1810
    %v1812 = vpop.f32.mrb[0].mxu0
    %v1813 = vadd.f32 0.0, %v1812
    %v1814 = vpop.f32.mrb[0].mxu0
    %v1815 = vpop.f32.mrb[0].mxu0
    %1816 = vdwg.mxu0
    %1817 = vmatprep.subr.bf16.mxu0 %v1329
    %1818 = vmatpush1.bf16.msra.mxu0 %v1328
    %1819 = vmatprep.subr.bf16.mxu0 %v1333
    %1820 = vmatpush1.bf16.msra.mxu0 %v1332
    %1821 = vmatprep.subr.bf16.mxu0 %v1337
    %1822 = vmatpush1.bf16.msra.mxu0 %v1336
    %1823 = vmatprep.subr.bf16.mxu0 %v1341
    %1824 = vmatpush1.bf16.msra.mxu0 %v1340
    %1825 = vmatprep.subr.bf16.mxu0 %v1345
    %1826 = vmatpush1.bf16.msra.mxu0 %v1344
    %1827 = vmatprep.subr.bf16.mxu0 %v1349
    %1828 = vmatpush1.bf16.msra.mxu0 %v1348
    %1829 = vmatprep.subr.bf16.mxu0 %v1353
    %1830 = vmatpush1.bf16.msra.mxu0 %v1352
    %1831 = vmatprep.subr.bf16.mxu0 %v1357
    %1832 = vmatpush1.bf16.msra.mxu0 %v1356
    %1833 = vmatprep.subr.bf16.mxu0 %v1361
    %1834 = vmatpush1.bf16.msra.mxu0 %v1360
    %1835 = vmatprep.subr.bf16.mxu0 %v1365
    %1836 = vmatpush1.bf16.msra.mxu0 %v1364
    %1837 = vmatprep.subr.bf16.mxu0 %v1369
    %1838 = vmatpush1.bf16.msra.mxu0 %v1368
    %1839 = vmatprep.subr.bf16.mxu0 %v1373
    %1840 = vmatpush1.bf16.msra.mxu0 %v1372
    %1841 = vmatprep.subr.bf16.mxu0 %v1377
    %1842 = vmatpush1.bf16.msra.mxu0 %v1376
    %1843 = vmatprep.subr.bf16.mxu0 %v1381
    %1844 = vmatpush1.bf16.msra.mxu0 %v1380
    %1845 = vmatprep.subr.bf16.mxu0 %v1385
    %1846 = vmatpush1.bf16.msra.mxu0 %v1384
    %1847 = vmatprep.subr.bf16.mxu0 %v1389
    %1848 = vmatpush1.bf16.msra.mxu0 %v1388
    %1849 = vmatprep.mubr.bf16.mxu0 %v486
    %1850 = vmatmul.mubr.bf16.gmra.mrb[0].mxu0 %v484
    %v1851 = vpop.f32.mrb[0].mxu0
    %v1852 = vadd.f32 %v1811, %v1851
    %v1853 = vpop.f32.mrb[0].mxu0
    %v1854 = vadd.f32 %v1813, %v1853
    %v1855 = vpop.f32.mrb[0].mxu0
    %v1856 = vpop.f32.mrb[0].mxu0
    %1857 = vdwg.mxu0
    %1858 = vmatprep.subr.bf16.mxu0 %v1393
    %1859 = vmatpush1.bf16.msra.mxu0 %v1392
    %1860 = vmatprep.subr.bf16.mxu0 %v1397
    %1861 = vmatpush1.bf16.msra.mxu0 %v1396
    %1862 = vmatprep.subr.bf16.mxu0 %v1401
    %1863 = vmatpush1.bf16.msra.mxu0 %v1400
    %1864 = vmatprep.subr.bf16.mxu0 %v1405
    %1865 = vmatpush1.bf16.msra.mxu0 %v1404
    %1866 = vmatprep.subr.bf16.mxu0 %v1409
    %1867 = vmatpush1.bf16.msra.mxu0 %v1408
    %1868 = vmatprep.subr.bf16.mxu0 %v1413
    %1869 = vmatpush1.bf16.msra.mxu0 %v1412
    %1870 = vmatprep.subr.bf16.mxu0 %v1417
    %1871 = vmatpush1.bf16.msra.mxu0 %v1416
    %1872 = vmatprep.subr.bf16.mxu0 %v1421
    %1873 = vmatpush1.bf16.msra.mxu0 %v1420
    %1874 = vmatprep.subr.bf16.mxu0 %v1425
    %1875 = vmatpush1.bf16.msra.mxu0 %v1424
    %1876 = vmatprep.subr.bf16.mxu0 %v1429
    %1877 = vmatpush1.bf16.msra.mxu0 %v1428
    %1878 = vmatprep.subr.bf16.mxu0 %v1433
    %1879 = vmatpush1.bf16.msra.mxu0 %v1432
    %1880 = vmatprep.subr.bf16.mxu0 %v1437
    %1881 = vmatpush1.bf16.msra.mxu0 %v1436
    %1882 = vmatprep.subr.bf16.mxu0 %v1441
    %1883 = vmatpush1.bf16.msra.mxu0 %v1440
    %1884 = vmatprep.subr.bf16.mxu0 %v1445
    %1885 = vmatpush1.bf16.msra.mxu0 %v1444
    %1886 = vmatprep.subr.bf16.mxu0 %v1449
    %1887 = vmatpush1.bf16.msra.mxu0 %v1448
    %1888 = vmatprep.subr.bf16.mxu0 %v1453
    %1889 = vmatpush1.bf16.msra.mxu0 %v1452
    %1890 = vmatprep.mubr.bf16.mxu0 %v483
    %1891 = vmatmul.mubr.bf16.gmra.mrb[0].mxu0 %v469
    %v1892 = vpop.f32.mrb[0].mxu0
    %v1893 = vadd.f32 %v1852, %v1892
    %v1894 = vpop.f32.mrb[0].mxu0
    %v1895 = vadd.f32 %v1854, %v1894
    %v1896 = vpop.f32.mrb[0].mxu0
    %v1897 = vpop.f32.mrb[0].mxu0
    %1898 = vdwg.mxu0
    %1899 = vmatprep.subr.bf16.mxu0 %v1457
    %1900 = vmatpush1.bf16.msra.mxu0 %v1456
    %1901 = vmatprep.subr.bf16.mxu0 %v1461
    %1902 = vmatpush1.bf16.msra.mxu0 %v1460
    %1903 = vmatprep.subr.bf16.mxu0 %v1465
    %1904 = vmatpush1.bf16.msra.mxu0 %v1464
    %1905 = vmatprep.subr.bf16.mxu0 %v1469
    %1906 = vmatpush1.bf16.msra.mxu0 %v1468
    %1907 = vmatprep.subr.bf16.mxu0 %v1473
    %1908 = vmatpush1.bf16.msra.mxu0 %v1472
    %1909 = vmatprep.subr.bf16.mxu0 %v1477
    %1910 = vmatpush1.bf16.msra.mxu0 %v1476
    %1911 = vmatprep.subr.bf16.mxu0 %v1481
    %1912 = vmatpush1.bf16.msra.mxu0 %v1480
    %1913 = vmatprep.subr.bf16.mxu0 %v1485
    %1914 = vmatpush1.bf16.msra.mxu0 %v1484
    %1915 = vmatprep.subr.bf16.mxu0 %v1489
    %1916 = vmatpush1.bf16.msra.mxu0 %v1488
    %1917 = vmatprep.subr.bf16.mxu0 %v1493
    %1918 = vmatpush1.bf16.msra.mxu0 %v1492
    %1919 = vmatprep.subr.bf16.mxu0 %v1497
    %1920 = vmatpush1.bf16.msra.mxu0 %v1496
    %1921 = vmatprep.subr.bf16.mxu0 %v1501
    %1922 = vmatpush1.bf16.msra.mxu0 %v1500
    %1923 = vmatprep.subr.bf16.mxu0 %v1505
    %1924 = vmatpush1.bf16.msra.mxu0 %v1504
    %1925 = vmatprep.subr.bf16.mxu0 %v1509
    %1926 = vmatpush1.bf16.msra.mxu0 %v1508
    %1927 = vmatprep.subr.bf16.mxu0 %v1513
    %1928 = vmatpush1.bf16.msra.mxu0 %v1512
    %1929 = vmatprep.subr.bf16.mxu0 %v1517
    %1930 = vmatpush1.bf16.msra.mxu0 %v1516
    %1931 = vmatprep.mubr.bf16.mxu0 %v487
    %1932 = vmatmul.mubr.bf16.gmra.mrb[0].mxu0 %v485
    %v1933 = vpop.f32.mrb[0].mxu0
    %v1934 = vadd.f32 %v1893, %v1933
    %v1935 = vpop.f32.mrb[0].mxu0
    %v1936 = vadd.f32 %v1895, %v1935
    %v1937 = vpop.f32.mrb[0].mxu0
    %v1938 = vpop.f32.mrb[0].mxu0
    %1939 = vdwg.mxu0
    %1940 = vmatprep.subr.bf16.mxu0 %v1267
    %1941 = vmatpush1.bf16.msra.mxu0 %v1266
    %1942 = vmatprep.subr.bf16.mxu0 %v1271
    %1943 = vmatpush1.bf16.msra.mxu0 %v1270
    %1944 = vmatprep.subr.bf16.mxu0 %v1275
    %1945 = vmatpush1.bf16.msra.mxu0 %v1274
    %1946 = vmatprep.subr.bf16.mxu0 %v1279
    %1947 = vmatpush1.bf16.msra.mxu0 %v1278
    %1948 = vmatprep.subr.bf16.mxu0 %v1283
    %1949 = vmatpush1.bf16.msra.mxu0 %v1282
    %1950 = vmatprep.subr.bf16.mxu0 %v1287
    %1951 = vmatpush1.bf16.msra.mxu0 %v1286
    %1952 = vmatprep.subr.bf16.mxu0 %v1291
    %1953 = vmatpush1.bf16.msra.mxu0 %v1290
    %1954 = vmatprep.subr.bf16.mxu0 %v1295
    %1955 = vmatpush1.bf16.msra.mxu0 %v1294
    %1956 = vmatprep.subr.bf16.mxu0 %v1299
    %1957 = vmatpush1.bf16.msra.mxu0 %v1298
    %1958 = vmatprep.subr.bf16.mxu0 %v1303
    %1959 = vmatpush1.bf16.msra.mxu0 %v1302
    %1960 = vmatprep.subr.bf16.mxu0 %v1307
    %1961 = vmatpush1.bf16.msra.mxu0 %v1306
    %1962 = vmatprep.subr.bf16.mxu0 %v1311
    %1963 = vmatpush1.bf16.msra.mxu0 %v1310
    %1964 = vmatprep.subr.bf16.mxu0 %v1315
    %1965 = vmatpush1.bf16.msra.mxu0 %v1314
    %1966 = vmatprep.subr.bf16.mxu0 %v1319
    %1967 = vmatpush1.bf16.msra.mxu0 %v1318
    %1968 = vmatprep.subr.bf16.mxu0 %v1323
    %1969 = vmatpush1.bf16.msra.mxu0 %v1322
    %1970 = vmatprep.subr.bf16.mxu0 %v1327
    %1971 = vmatpush1.bf16.msra.mxu0 %v1326
    %1972 = vmatprep.mubr.bf16.mxu0 %v476
    %1973 = vmatmul.mubr.bf16.gmra.mrb[0].mxu0 %v462
    %v1974 = vpop.f32.mrb[0].mxu0
    %v1975 = vadd.f32 0.0, %v1974
    %v1976 = vpop.f32.mrb[0].mxu0
    %v1977 = vadd.f32 0.0, %v1976
    %v1978 = vpop.f32.mrb[0].mxu0
    %v1979 = vpop.f32.mrb[0].mxu0
    %1980 = vdwg.mxu0
    %1981 = vmatprep.subr.bf16.mxu0 %v1331
    %1982 = vmatpush1.bf16.msra.mxu0 %v1330
    %1983 = vmatprep.subr.bf16.mxu0 %v1335
    %1984 = vmatpush1.bf16.msra.mxu0 %v1334
    %1985 = vmatprep.subr.bf16.mxu0 %v1339
    %1986 = vmatpush1.bf16.msra.mxu0 %v1338
    %1987 = vmatprep.subr.bf16.mxu0 %v1343
    %1988 = vmatpush1.bf16.msra.mxu0 %v1342
    %1989 = vmatprep.subr.bf16.mxu0 %v1347
    %1990 = vmatpush1.bf16.msra.mxu0 %v1346
    %1991 = vmatprep.subr.bf16.mxu0 %v1351
    %1992 = vmatpush1.bf16.msra.mxu0 %v1350
    %1993 = vmatprep.subr.bf16.mxu0 %v1355
    %1994 = vmatpush1.bf16.msra.mxu0 %v1354
    %1995 = vmatprep.subr.bf16.mxu0 %v1359
    %1996 = vmatpush1.bf16.msra.mxu0 %v1358
    %1997 = vmatprep.subr.bf16.mxu0 %v1363
    %1998 = vmatpush1.bf16.msra.mxu0 %v1362
    %1999 = vmatprep.subr.bf16.mxu0 %v1367
    %2000 = vmatpush1.bf16.msra.mxu0 %v1366
    %2001 = vmatprep.subr.bf16.mxu0 %v1371
    %2002 = vmatpush1.bf16.msra.mxu0 %v1370
    %2003 = vmatprep.subr.bf16.mxu0 %v1375
    %2004 = vmatpush1.bf16.msra.mxu0 %v1374
    %2005 = vmatprep.subr.bf16.mxu0 %v1379
    %2006 = vmatpush1.bf16.msra.mxu0 %v1378
    %2007 = vmatprep.subr.bf16.mxu0 %v1383
    %2008 = vmatpush1.bf16.msra.mxu0 %v1382
    %2009 = vmatprep.subr.bf16.mxu0 %v1387
    %2010 = vmatpush1.bf16.msra.mxu0 %v1386
    %2011 = vmatprep.subr.bf16.mxu0 %v1391
    %2012 = vmatpush1.bf16.msra.mxu0 %v1390
    %2013 = vmatprep.mubr.bf16.mxu0 %v486
    %2014 = vmatmul.mubr.bf16.gmra.mrb[0].mxu0 %v484
    %v2015 = vpop.f32.mrb[0].mxu0
    %v2016 = vadd.f32 %v1975, %v2015
    %v2017 = vpop.f32.mrb[0].mxu0
    %v2018 = vadd.f32 %v1977, %v2017
    %v2019 = vpop.f32.mrb[0].mxu0
    %v2020 = vpop.f32.mrb[0].mxu0
    %2021 = vdwg.mxu0
    %2022 = vmatprep.subr.bf16.mxu0 %v1395
    %2023 = vmatpush1.bf16.msra.mxu0 %v1394
    %2024 = vmatprep.subr.bf16.mxu0 %v1399
    %2025 = vmatpush1.bf16.msra.mxu0 %v1398
    %2026 = vmatprep.subr.bf16.mxu0 %v1403
    %2027 = vmatpush1.bf16.msra.mxu0 %v1402
    %2028 = vmatprep.subr.bf16.mxu0 %v1407
    %2029 = vmatpush1.bf16.msra.mxu0 %v1406
    %2030 = vmatprep.subr.bf16.mxu0 %v1411
    %2031 = vmatpush1.bf16.msra.mxu0 %v1410
    %2032 = vmatprep.subr.bf16.mxu0 %v1415
    %2033 = vmatpush1.bf16.msra.mxu0 %v1414
    %2034 = vmatprep.subr.bf16.mxu0 %v1419
    %2035 = vmatpush1.bf16.msra.mxu0 %v1418
    %2036 = vmatprep.subr.bf16.mxu0 %v1423
    %2037 = vmatpush1.bf16.msra.mxu0 %v1422
    %2038 = vmatprep.subr.bf16.mxu0 %v1427
    %2039 = vmatpush1.bf16.msra.mxu0 %v1426
    %2040 = vmatprep.subr.bf16.mxu0 %v1431
    %2041 = vmatpush1.bf16.msra.mxu0 %v1430
    %2042 = vmatprep.subr.bf16.mxu0 %v1435
    %2043 = vmatpush1.bf16.msra.mxu0 %v1434
    %2044 = vmatprep.subr.bf16.mxu0 %v1439
    %2045 = vmatpush1.bf16.msra.mxu0 %v1438
    %2046 = vmatprep.subr.bf16.mxu0 %v1443
    %2047 = vmatpush1.bf16.msra.mxu0 %v1442
    %2048 = vmatprep.subr.bf16.mxu0 %v1447
    %2049 = vmatpush1.bf16.msra.mxu0 %v1446
    %2050 = vmatprep.subr.bf16.mxu0 %v1451
    %2051 = vmatpush1.bf16.msra.mxu0 %v1450
    %2052 = vmatprep.subr.bf16.mxu0 %v1455
    %2053 = vmatpush1.bf16.msra.mxu0 %v1454
    %2054 = vmatprep.mubr.bf16.mxu0 %v483
    %2055 = vmatmul.mubr.bf16.gmra.mrb[0].mxu0 %v469
    %v2056 = vpop.f32.mrb[0].mxu0
    %v2057 = vadd.f32 %v2016, %v2056
    %v2058 = vpop.f32.mrb[0].mxu0
    %v2059 = vadd.f32 %v2018, %v2058
    %v2060 = vpop.f32.mrb[0].mxu0
    %v2061 = vpop.f32.mrb[0].mxu0
    %2062 = vdwg.mxu0
    %2063 = vmatprep.subr.bf16.mxu0 %v1459
    %2064 = vmatpush1.bf16.msra.mxu0 %v1458
    %2065 = vmatprep.subr.bf16.mxu0 %v1463
    %2066 = vmatpush1.bf16.msra.mxu0 %v1462
    %2067 = vmatprep.subr.bf16.mxu0 %v1467
    %2068 = vmatpush1.bf16.msra.mxu0 %v1466
    %2069 = vmatprep.subr.bf16.mxu0 %v1471
    %2070 = vmatpush1.bf16.msra.mxu0 %v1470
    %2071 = vmatprep.subr.bf16.mxu0 %v1475
    %2072 = vmatpush1.bf16.msra.mxu0 %v1474
    %2073 = vmatprep.subr.bf16.mxu0 %v1479
    %2074 = vmatpush1.bf16.msra.mxu0 %v1478
    %2075 = vmatprep.subr.bf16.mxu0 %v1483
    %2076 = vmatpush1.bf16.msra.mxu0 %v1482
    %2077 = vmatprep.subr.bf16.mxu0 %v1487
    %2078 = vmatpush1.bf16.msra.mxu0 %v1486
    %2079 = vmatprep.subr.bf16.mxu0 %v1491
    %2080 = vmatpush1.bf16.msra.mxu0 %v1490
    %2081 = vmatprep.subr.bf16.mxu0 %v1495
    %2082 = vmatpush1.bf16.msra.mxu0 %v1494
    %2083 = vmatprep.subr.bf16.mxu0 %v1499
    %2084 = vmatpush1.bf16.msra.mxu0 %v1498
    %2085 = vmatprep.subr.bf16.mxu0 %v1503
    %2086 = vmatpush1.bf16.msra.mxu0 %v1502
    %2087 = vmatprep.subr.bf16.mxu0 %v1507
    %2088 = vmatpush1.bf16.msra.mxu0 %v1506
    %2089 = vmatprep.subr.bf16.mxu0 %v1511
    %2090 = vmatpush1.bf16.msra.mxu0 %v1510
    %2091 = vmatprep.subr.bf16.mxu0 %v1515
    %2092 = vmatpush1.bf16.msra.mxu0 %v1514
    %2093 = vmatprep.subr.bf16.mxu0 %v1519
    %2094 = vmatpush1.bf16.msra.mxu0 %v1518
    %2095 = vmatprep.mubr.bf16.mxu0 %v487
    %2096 = vmatmul.mubr.bf16.gmra.mrb[0].mxu0 %v485
    %v2097 = vpop.f32.mrb[0].mxu0
    %v2098 = vadd.f32 %v2057, %v2097
    %v2099 = vpop.f32.mrb[0].mxu0
    %v2100 = vadd.f32 %v2059, %v2099
    %v2101 = vpop.f32.mrb[0].mxu0
    %v2102 = vpop.f32.mrb[0].mxu0
    %2103 = vdwg.mxu0
    %vm2104 = vcmp.gt.f32.partialorder %v1934, 0.0
    %vm2105 = vcmp.gt.f32.partialorder %v1936, 0.0
    %vm2106 = vcmp.gt.f32.partialorder %v2098, 0.0
    %vm2107 = vcmp.gt.f32.partialorder %v2100, 0.0
    %v2108 = vmul.f32 %v1934, 0.2
    %v2109 = vmul.f32 %v1936, 0.2
    %v2110 = vmul.f32 %v2098, 0.2
    %v2111 = vmul.f32 %v2100, 0.2
    %v2112 = vsel %vm2104, %v1934, %v2108
    %v2113 = vsel %vm2105, %v1936, %v2109
    %v2114 = vsel %vm2106, %v2098, %v2110
    %v2115 = vsel %vm2107, %v2100, %v2111
    %v2116 = vpack.c.bf16 %v2112, %v2112
    %v2117 = vpack.c.bf16 %v2113, %v2113
    %v2118 = vpack.c.bf16 %v2114, %v2114
    %v2119 = vpack.c.bf16 %v2115, %v2115
    %v2120 = vld [vmem:[%s2] sm:$0xff]
    %v2121 = vld [vmem:[%s2 + $0x8] sm:$0xff]
    %v2122 = vld [vmem:[%s2 + $0x10] sm:$0xff]
    %v2123 = vld [vmem:[%s2 + $0x18] sm:$0xff]
    %v2124 = vld [vmem:[%s2 + $0x20] sm:$0xff]
    %v2125 = vld [vmem:[%s2 + $0x28] sm:$0xff]
    %v2126 = vld [vmem:[%s2 + $0x30] sm:$0xff]
    %v2127 = vld [vmem:[%s2 + $0x38] sm:$0xff]
    %v2128 = vld [vmem:[%s2 + $0x40] sm:$0xff]
    %v2129 = vld [vmem:[%s2 + $0x48] sm:$0xff]
    %v2130 = vld [vmem:[%s2 + $0x50] sm:$0xff]
    %v2131 = vld [vmem:[%s2 + $0x58] sm:$0xff]
    %v2132 = vld [vmem:[%s2 + $0x60] sm:$0xff]
    %v2133 = vld [vmem:[%s2 + $0x68] sm:$0xff]
    %v2134 = vld [vmem:[%s2 + $0x70] sm:$0xff]
    %v2135 = vld [vmem:[%s2 + $0x78] sm:$0xff]
    %v2136 = vld [vmem:[%s2 + $0x80] sm:$0xff]
    %v2137 = vld [vmem:[%s2 + $0x88] sm:$0xff]
    %v2138 = vld [vmem:[%s2 + $0x90] sm:$0xff]
    %v2139 = vld [vmem:[%s2 + $0x98] sm:$0xff]
    %v2140 = vld [vmem:[%s2 + $0xa0] sm:$0xff]
    %v2141 = vld [vmem:[%s2 + $0xa8] sm:$0xff]
    %v2142 = vld [vmem:[%s2 + $0xb0] sm:$0xff]
    %v2143 = vld [vmem:[%s2 + $0xb8] sm:$0xff]
    %v2144 = vld [vmem:[%s2 + $0xc0] sm:$0xff]
    %v2145 = vld [vmem:[%s2 + $0xc8] sm:$0xff]
    %v2146 = vld [vmem:[%s2 + $0xd0] sm:$0xff]
    %v2147 = vld [vmem:[%s2 + $0xd8] sm:$0xff]
    %v2148 = vld [vmem:[%s2 + $0xe0] sm:$0xff]
    %v2149 = vld [vmem:[%s2 + $0xe8] sm:$0xff]
    %v2150 = vld [vmem:[%s2 + $0xf0] sm:$0xff]
    %v2151 = vld [vmem:[%s2 + $0xf8] sm:$0xff]
    %v2152 = vld [vmem:[%s2 + $0x100] sm:$0xff]
    %v2153 = vld [vmem:[%s2 + $0x108] sm:$0xff]
    %v2154 = vld [vmem:[%s2 + $0x110] sm:$0xff]
    %v2155 = vld [vmem:[%s2 + $0x118] sm:$0xff]
    %v2156 = vld [vmem:[%s2 + $0x120] sm:$0xff]
    %v2157 = vld [vmem:[%s2 + $0x128] sm:$0xff]
    %v2158 = vld [vmem:[%s2 + $0x130] sm:$0xff]
    %v2159 = vld [vmem:[%s2 + $0x138] sm:$0xff]
    %v2160 = vld [vmem:[%s2 + $0x140] sm:$0xff]
    %v2161 = vld [vmem:[%s2 + $0x148] sm:$0xff]
    %v2162 = vld [vmem:[%s2 + $0x150] sm:$0xff]
    %v2163 = vld [vmem:[%s2 + $0x158] sm:$0xff]
    %v2164 = vld [vmem:[%s2 + $0x160] sm:$0xff]
    %v2165 = vld [vmem:[%s2 + $0x168] sm:$0xff]
    %v2166 = vld [vmem:[%s2 + $0x170] sm:$0xff]
    %v2167 = vld [vmem:[%s2 + $0x178] sm:$0xff]
    %v2168 = vld [vmem:[%s2 + $0x180] sm:$0xff]
    %v2169 = vld [vmem:[%s2 + $0x188] sm:$0xff]
    %v2170 = vld [vmem:[%s2 + $0x190] sm:$0xff]
    %v2171 = vld [vmem:[%s2 + $0x198] sm:$0xff]
    %v2172 = vld [vmem:[%s2 + $0x1a0] sm:$0xff]
    %v2173 = vld [vmem:[%s2 + $0x1a8] sm:$0xff]
    %v2174 = vld [vmem:[%s2 + $0x1b0] sm:$0xff]
    %v2175 = vld [vmem:[%s2 + $0x1b8] sm:$0xff]
    %v2176 = vld [vmem:[%s2 + $0x1c0] sm:$0xff]
    %v2177 = vld [vmem:[%s2 + $0x1c8] sm:$0xff]
    %v2178 = vld [vmem:[%s2 + $0x1d0] sm:$0xff]
    %v2179 = vld [vmem:[%s2 + $0x1d8] sm:$0xff]
    %v2180 = vld [vmem:[%s2 + $0x1e0] sm:$0xff]
    %v2181 = vld [vmem:[%s2 + $0x1e8] sm:$0xff]
    %v2182 = vld [vmem:[%s2 + $0x1f0] sm:$0xff]
    %v2183 = vld [vmem:[%s2 + $0x1f8] sm:$0xff]
    %v2248 = vunpack.c.l.b16 %v2120
    %v2249 = vunpack.c.h.b16 %v2120
    %v2250 = vunpack.c.l.b16 %v2121
    %v2251 = vunpack.c.h.b16 %v2121
    %v2252 = vunpack.c.l.b16 %v2122
    %v2253 = vunpack.c.h.b16 %v2122
    %v2254 = vunpack.c.l.b16 %v2123
    %v2255 = vunpack.c.h.b16 %v2123
    %v2256 = vunpack.c.l.b16 %v2124
    %v2257 = vunpack.c.h.b16 %v2124
    %v2258 = vunpack.c.l.b16 %v2125
    %v2259 = vunpack.c.h.b16 %v2125
    %v2260 = vunpack.c.l.b16 %v2126
    %v2261 = vunpack.c.h.b16 %v2126
    %v2262 = vunpack.c.l.b16 %v2127
    %v2263 = vunpack.c.h.b16 %v2127
    %v2264 = vunpack.c.l.b16 %v2128
    %v2265 = vunpack.c.h.b16 %v2128
    %v2266 = vunpack.c.l.b16 %v2129
    %v2267 = vunpack.c.h.b16 %v2129
    %v2268 = vunpack.c.l.b16 %v2130
    %v2269 = vunpack.c.h.b16 %v2130
    %v2270 = vunpack.c.l.b16 %v2131
    %v2271 = vunpack.c.h.b16 %v2131
    %v2272 = vunpack.c.l.b16 %v2132
    %v2273 = vunpack.c.h.b16 %v2132
    %v2274 = vunpack.c.l.b16 %v2133
    %v2275 = vunpack.c.h.b16 %v2133
    %v2276 = vunpack.c.l.b16 %v2134
    %v2277 = vunpack.c.h.b16 %v2134
    %v2278 = vunpack.c.l.b16 %v2135
    %v2279 = vunpack.c.h.b16 %v2135
    %v2280 = vunpack.c.l.b16 %v2136
    %v2281 = vunpack.c.h.b16 %v2136
    %v2282 = vunpack.c.l.b16 %v2137
    %v2283 = vunpack.c.h.b16 %v2137
    %v2284 = vunpack.c.l.b16 %v2138
    %v2285 = vunpack.c.h.b16 %v2138
    %v2286 = vunpack.c.l.b16 %v2139
    %v2287 = vunpack.c.h.b16 %v2139
    %v2288 = vunpack.c.l.b16 %v2140
    %v2289 = vunpack.c.h.b16 %v2140
    %v2290 = vunpack.c.l.b16 %v2141
    %v2291 = vunpack.c.h.b16 %v2141
    %v2292 = vunpack.c.l.b16 %v2142
    %v2293 = vunpack.c.h.b16 %v2142
    %v2294 = vunpack.c.l.b16 %v2143
    %v2295 = vunpack.c.h.b16 %v2143
    %v2296 = vunpack.c.l.b16 %v2144
    %v2297 = vunpack.c.h.b16 %v2144
    %v2298 = vunpack.c.l.b16 %v2145
    %v2299 = vunpack.c.h.b16 %v2145
    %v2300 = vunpack.c.l.b16 %v2146
    %v2301 = vunpack.c.h.b16 %v2146
    %v2302 = vunpack.c.l.b16 %v2147
    %v2303 = vunpack.c.h.b16 %v2147
    %v2304 = vunpack.c.l.b16 %v2148
    %v2305 = vunpack.c.h.b16 %v2148
    %v2306 = vunpack.c.l.b16 %v2149
    %v2307 = vunpack.c.h.b16 %v2149
    %v2308 = vunpack.c.l.b16 %v2150
    %v2309 = vunpack.c.h.b16 %v2150
    %v2310 = vunpack.c.l.b16 %v2151
    %v2311 = vunpack.c.h.b16 %v2151
    %v2312 = vunpack.c.l.b16 %v2152
    %v2313 = vunpack.c.h.b16 %v2152
    %v2314 = vunpack.c.l.b16 %v2153
    %v2315 = vunpack.c.h.b16 %v2153
    %v2316 = vunpack.c.l.b16 %v2154
    %v2317 = vunpack.c.h.b16 %v2154
    %v2318 = vunpack.c.l.b16 %v2155
    %v2319 = vunpack.c.h.b16 %v2155
    %v2320 = vunpack.c.l.b16 %v2156
    %v2321 = vunpack.c.h.b16 %v2156
    %v2322 = vunpack.c.l.b16 %v2157
    %v2323 = vunpack.c.h.b16 %v2157
    %v2324 = vunpack.c.l.b16 %v2158
    %v2325 = vunpack.c.h.b16 %v2158
    %v2326 = vunpack.c.l.b16 %v2159
    %v2327 = vunpack.c.h.b16 %v2159
    %v2328 = vunpack.c.l.b16 %v2160
    %v2329 = vunpack.c.h.b16 %v2160
    %v2330 = vunpack.c.l.b16 %v2161
    %v2331 = vunpack.c.h.b16 %v2161
    %v2332 = vunpack.c.l.b16 %v2162
    %v2333 = vunpack.c.h.b16 %v2162
    %v2334 = vunpack.c.l.b16 %v2163
    %v2335 = vunpack.c.h.b16 %v2163
    %v2336 = vunpack.c.l.b16 %v2164
    %v2337 = vunpack.c.h.b16 %v2164
    %v2338 = vunpack.c.l.b16 %v2165
    %v2339 = vunpack.c.h.b16 %v2165
    %v2340 = vunpack.c.l.b16 %v2166
    %v2341 = vunpack.c.h.b16 %v2166
    %v2342 = vunpack.c.l.b16 %v2167
    %v2343 = vunpack.c.h.b16 %v2167
    %v2344 = vunpack.c.l.b16 %v2168
    %v2345 = vunpack.c.h.b16 %v2168
    %v2346 = vunpack.c.l.b16 %v2169
    %v2347 = vunpack.c.h.b16 %v2169
    %v2348 = vunpack.c.l.b16 %v2170
    %v2349 = vunpack.c.h.b16 %v2170
    %v2350 = vunpack.c.l.b16 %v2171
    %v2351 = vunpack.c.h.b16 %v2171
    %v2352 = vunpack.c.l.b16 %v2172
    %v2353 = vunpack.c.h.b16 %v2172
    %v2354 = vunpack.c.l.b16 %v2173
    %v2355 = vunpack.c.h.b16 %v2173
    %v2356 = vunpack.c.l.b16 %v2174
    %v2357 = vunpack.c.h.b16 %v2174
    %v2358 = vunpack.c.l.b16 %v2175
    %v2359 = vunpack.c.h.b16 %v2175
    %v2360 = vunpack.c.l.b16 %v2176
    %v2361 = vunpack.c.h.b16 %v2176
    %v2362 = vunpack.c.l.b16 %v2177
    %v2363 = vunpack.c.h.b16 %v2177
    %v2364 = vunpack.c.l.b16 %v2178
    %v2365 = vunpack.c.h.b16 %v2178
    %v2366 = vunpack.c.l.b16 %v2179
    %v2367 = vunpack.c.h.b16 %v2179
    %v2368 = vunpack.c.l.b16 %v2180
    %v2369 = vunpack.c.h.b16 %v2180
    %v2370 = vunpack.c.l.b16 %v2181
    %v2371 = vunpack.c.h.b16 %v2181
    %v2372 = vunpack.c.l.b16 %v2182
    %v2373 = vunpack.c.h.b16 %v2182
    %v2374 = vunpack.c.l.b16 %v2183
    %v2375 = vunpack.c.h.b16 %v2183
    %v2376 = vpack.c.b16 %v2250, %v2248
    %v2377 = vpack.c.b16 %v2251, %v2249
    %v2378 = vpack.c.b16 %v2254, %v2252
    %v2379 = vpack.c.b16 %v2255, %v2253
    %v2380 = vpack.c.b16 %v2258, %v2256
    %v2381 = vpack.c.b16 %v2259, %v2257
    %v2382 = vpack.c.b16 %v2262, %v2260
    %v2383 = vpack.c.b16 %v2263, %v2261
    %v2384 = vpack.c.b16 %v2266, %v2264
    %v2385 = vpack.c.b16 %v2267, %v2265
    %v2386 = vpack.c.b16 %v2270, %v2268
    %v2387 = vpack.c.b16 %v2271, %v2269
    %v2388 = vpack.c.b16 %v2274, %v2272
    %v2389 = vpack.c.b16 %v2275, %v2273
    %v2390 = vpack.c.b16 %v2278, %v2276
    %v2391 = vpack.c.b16 %v2279, %v2277
    %v2392 = vpack.c.b16 %v2282, %v2280
    %v2393 = vpack.c.b16 %v2283, %v2281
    %v2394 = vpack.c.b16 %v2286, %v2284
    %v2395 = vpack.c.b16 %v2287, %v2285
    %v2396 = vpack.c.b16 %v2290, %v2288
    %v2397 = vpack.c.b16 %v2291, %v2289
    %v2398 = vpack.c.b16 %v2294, %v2292
    %v2399 = vpack.c.b16 %v2295, %v2293
    %v2400 = vpack.c.b16 %v2298, %v2296
    %v2401 = vpack.c.b16 %v2299, %v2297
    %v2402 = vpack.c.b16 %v2302, %v2300
    %v2403 = vpack.c.b16 %v2303, %v2301
    %v2404 = vpack.c.b16 %v2306, %v2304
    %v2405 = vpack.c.b16 %v2307, %v2305
    %v2406 = vpack.c.b16 %v2310, %v2308
    %v2407 = vpack.c.b16 %v2311, %v2309
    %v2408 = vpack.c.b16 %v2314, %v2312
    %v2409 = vpack.c.b16 %v2315, %v2313
    %v2410 = vpack.c.b16 %v2318, %v2316
    %v2411 = vpack.c.b16 %v2319, %v2317
    %v2412 = vpack.c.b16 %v2322, %v2320
    %v2413 = vpack.c.b16 %v2323, %v2321
    %v2414 = vpack.c.b16 %v2326, %v2324
    %v2415 = vpack.c.b16 %v2327, %v2325
    %v2416 = vpack.c.b16 %v2330, %v2328
    %v2417 = vpack.c.b16 %v2331, %v2329
    %v2418 = vpack.c.b16 %v2334, %v2332
    %v2419 = vpack.c.b16 %v2335, %v2333
    %v2420 = vpack.c.b16 %v2338, %v2336
    %v2421 = vpack.c.b16 %v2339, %v2337
    %v2422 = vpack.c.b16 %v2342, %v2340
    %v2423 = vpack.c.b16 %v2343, %v2341
    %v2424 = vpack.c.b16 %v2346, %v2344
    %v2425 = vpack.c.b16 %v2347, %v2345
    %v2426 = vpack.c.b16 %v2350, %v2348
    %v2427 = vpack.c.b16 %v2351, %v2349
    %v2428 = vpack.c.b16 %v2354, %v2352
    %v2429 = vpack.c.b16 %v2355, %v2353
    %v2430 = vpack.c.b16 %v2358, %v2356
    %v2431 = vpack.c.b16 %v2359, %v2357
    %v2432 = vpack.c.b16 %v2362, %v2360
    %v2433 = vpack.c.b16 %v2363, %v2361
    %v2434 = vpack.c.b16 %v2366, %v2364
    %v2435 = vpack.c.b16 %v2367, %v2365
    %v2436 = vpack.c.b16 %v2370, %v2368
    %v2437 = vpack.c.b16 %v2371, %v2369
    %v2438 = vpack.c.b16 %v2374, %v2372
    %v2439 = vpack.c.b16 %v2375, %v2373
    %2504 = vmatprep.subr.bf16.mxu0 %v2377
    %2505 = vmatpush1.bf16.msra.mxu0 %v2376
    %2506 = vmatprep.subr.bf16.mxu0 %v2379
    %2507 = vmatpush1.bf16.msra.mxu0 %v2378
    %2508 = vmatprep.subr.bf16.mxu0 %v2381
    %2509 = vmatpush1.bf16.msra.mxu0 %v2380
    %2510 = vmatprep.subr.bf16.mxu0 %v2383
    %2511 = vmatpush1.bf16.msra.mxu0 %v2382
    %2512 = vmatprep.subr.bf16.mxu0 %v2385
    %2513 = vmatpush1.bf16.msra.mxu0 %v2384
    %2514 = vmatprep.subr.bf16.mxu0 %v2387
    %2515 = vmatpush1.bf16.msra.mxu0 %v2386
    %2516 = vmatprep.subr.bf16.mxu0 %v2389
    %2517 = vmatpush1.bf16.msra.mxu0 %v2388
    %2518 = vmatprep.subr.bf16.mxu0 %v2391
    %2519 = vmatpush1.bf16.msra.mxu0 %v2390
    %2520 = vmatprep.subr.bf16.mxu0 %v2393
    %2521 = vmatpush1.bf16.msra.mxu0 %v2392
    %2522 = vmatprep.subr.bf16.mxu0 %v2395
    %2523 = vmatpush1.bf16.msra.mxu0 %v2394
    %2524 = vmatprep.subr.bf16.mxu0 %v2397
    %2525 = vmatpush1.bf16.msra.mxu0 %v2396
    %2526 = vmatprep.subr.bf16.mxu0 %v2399
    %2527 = vmatpush1.bf16.msra.mxu0 %v2398
    %2528 = vmatprep.subr.bf16.mxu0 %v2401
    %2529 = vmatpush1.bf16.msra.mxu0 %v2400
    %2530 = vmatprep.subr.bf16.mxu0 %v2403
    %2531 = vmatpush1.bf16.msra.mxu0 %v2402
    %2532 = vmatprep.subr.bf16.mxu0 %v2405
    %2533 = vmatpush1.bf16.msra.mxu0 %v2404
    %2534 = vmatprep.subr.bf16.mxu0 %v2407
    %2535 = vmatpush1.bf16.msra.mxu0 %v2406
    %2536 = vmatprep.mubr.bf16.mxu0 %v2117
    %2537 = vmatmul.mubr.bf16.gmra.mrb[0].mxu0 %v2116
    %v2538 = vpop.f32.mrb[0].mxu0
    %v2539 = vadd.f32 0.0, %v2538
    %v2540 = vpop.f32.mrb[0].mxu0
    %v2541 = vadd.f32 0.0, %v2540
    %v2542 = vpop.f32.mrb[0].mxu0
    %v2543 = vpop.f32.mrb[0].mxu0
    %2544 = vdwg.mxu0
    %2545 = vmatprep.subr.bf16.mxu0 %v2409
    %2546 = vmatpush1.bf16.msra.mxu0 %v2408
    %2547 = vmatprep.subr.bf16.mxu0 %v2411
    %2548 = vmatpush1.bf16.msra.mxu0 %v2410
    %2549 = vmatprep.subr.bf16.mxu0 %v2413
    %2550 = vmatpush1.bf16.msra.mxu0 %v2412
    %2551 = vmatprep.subr.bf16.mxu0 %v2415
    %2552 = vmatpush1.bf16.msra.mxu0 %v2414
    %2553 = vmatprep.subr.bf16.mxu0 %v2417
    %2554 = vmatpush1.bf16.msra.mxu0 %v2416
    %2555 = vmatprep.subr.bf16.mxu0 %v2419
    %2556 = vmatpush1.bf16.msra.mxu0 %v2418
    %2557 = vmatprep.subr.bf16.mxu0 %v2421
    %2558 = vmatpush1.bf16.msra.mxu0 %v2420
    %2559 = vmatprep.subr.bf16.mxu0 %v2423
    %2560 = vmatpush1.bf16.msra.mxu0 %v2422
    %2561 = vmatprep.subr.bf16.mxu0 %v2425
    %2562 = vmatpush1.bf16.msra.mxu0 %v2424
    %2563 = vmatprep.subr.bf16.mxu0 %v2427
    %2564 = vmatpush1.bf16.msra.mxu0 %v2426
    %2565 = vmatprep.subr.bf16.mxu0 %v2429
    %2566 = vmatpush1.bf16.msra.mxu0 %v2428
    %2567 = vmatprep.subr.bf16.mxu0 %v2431
    %2568 = vmatpush1.bf16.msra.mxu0 %v2430
    %2569 = vmatprep.subr.bf16.mxu0 %v2433
    %2570 = vmatpush1.bf16.msra.mxu0 %v2432
    %2571 = vmatprep.subr.bf16.mxu0 %v2435
    %2572 = vmatpush1.bf16.msra.mxu0 %v2434
    %2573 = vmatprep.subr.bf16.mxu0 %v2437
    %2574 = vmatpush1.bf16.msra.mxu0 %v2436
    %2575 = vmatprep.subr.bf16.mxu0 %v2439
    %2576 = vmatpush1.bf16.msra.mxu0 %v2438
    %2577 = vmatprep.mubr.bf16.mxu0 %v2119
    %2578 = vmatmul.mubr.bf16.gmra.mrb[0].mxu0 %v2118
    %v2579 = vpop.f32.mrb[0].mxu0
    %v2580 = vadd.f32 %v2539, %v2579
    %v2581 = vpop.f32.mrb[0].mxu0
    %v2582 = vadd.f32 %v2541, %v2581
    %v2583 = vpop.f32.mrb[0].mxu0
    %v2584 = vpop.f32.mrb[0].mxu0
    %2585 = vdwg.mxu0
    %v2586 = vld [vmem:[%s3] sm:$0xf]
    %v2587 = vld [vmem:[%s3 + $0x4] sm:$0xf]
    %v2588 = vld [vmem:[%s3 + $0x8] sm:$0xf]
    %v2589 = vld [vmem:[%s3 + $0xc] sm:$0xf]
    %v2590 = vld [vmem:[%s3 + $0x10] sm:$0xf]
    %v2591 = vld [vmem:[%s3 + $0x14] sm:$0xf]
    %v2592 = vld [vmem:[%s3 + $0x18] sm:$0xf]
    %v2593 = vld [vmem:[%s3 + $0x1c] sm:$0xf]
    %v2594 = vld [vmem:[%s3 + $0x20] sm:$0xf]
    %v2595 = vld [vmem:[%s3 + $0x24] sm:$0xf]
    %v2596 = vld [vmem:[%s3 + $0x28] sm:$0xf]
    %v2597 = vld [vmem:[%s3 + $0x2c] sm:$0xf]
    %v2598 = vld [vmem:[%s3 + $0x30] sm:$0xf]
    %v2599 = vld [vmem:[%s3 + $0x34] sm:$0xf]
    %v2600 = vld [vmem:[%s3 + $0x38] sm:$0xf]
    %v2601 = vld [vmem:[%s3 + $0x3c] sm:$0xf]
    %v2602 = vld [vmem:[%s3 + $0x40] sm:$0xf]
    %v2603 = vld [vmem:[%s3 + $0x44] sm:$0xf]
    %v2604 = vld [vmem:[%s3 + $0x48] sm:$0xf]
    %v2605 = vld [vmem:[%s3 + $0x4c] sm:$0xf]
    %v2606 = vld [vmem:[%s3 + $0x50] sm:$0xf]
    %v2607 = vld [vmem:[%s3 + $0x54] sm:$0xf]
    %v2608 = vld [vmem:[%s3 + $0x58] sm:$0xf]
    %v2609 = vld [vmem:[%s3 + $0x5c] sm:$0xf]
    %v2610 = vld [vmem:[%s3 + $0x60] sm:$0xf]
    %v2611 = vld [vmem:[%s3 + $0x64] sm:$0xf]
    %v2612 = vld [vmem:[%s3 + $0x68] sm:$0xf]
    %v2613 = vld [vmem:[%s3 + $0x6c] sm:$0xf]
    %v2614 = vld [vmem:[%s3 + $0x70] sm:$0xf]
    %v2615 = vld [vmem:[%s3 + $0x74] sm:$0xf]
    %v2616 = vld [vmem:[%s3 + $0x78] sm:$0xf]
    %v2617 = vld [vmem:[%s3 + $0x7c] sm:$0xf]
    %v2618 = vld [vmem:[%s4] sm:$0xff]
    %v2619 = vld [vmem:[%s4 + $0x8] sm:$0xff]
    %v2620 = vld [vmem:[#allocation7] sm:$0x3]
    %v2621 = vld [vmem:[#allocation8] sm:$0x3]
    %v2622 = vpack.c.bf16 %v2580, %v2580
    %v2623 = vpack.c.bf16 %v2582, %v2582
    %v2656 = vunpack.c.l.b16 %v2586
    %v2657 = vunpack.c.l.b16 %v2587
    %v2658 = vunpack.c.l.b16 %v2588
    %v2659 = vunpack.c.l.b16 %v2589
    %v2660 = vunpack.c.l.b16 %v2590
    %v2661 = vunpack.c.l.b16 %v2591
    %v2662 = vunpack.c.l.b16 %v2592
    %v2663 = vunpack.c.l.b16 %v2593
    %v2664 = vunpack.c.l.b16 %v2594
    %v2665 = vunpack.c.l.b16 %v2595
    %v2666 = vunpack.c.l.b16 %v2596
    %v2667 = vunpack.c.l.b16 %v2597
    %v2668 = vunpack.c.l.b16 %v2598
    %v2669 = vunpack.c.l.b16 %v2599
    %v2670 = vunpack.c.l.b16 %v2600
    %v2671 = vunpack.c.l.b16 %v2601
    %v2672 = vunpack.c.l.b16 %v2602
    %v2673 = vunpack.c.l.b16 %v2603
    %v2674 = vunpack.c.l.b16 %v2604
    %v2675 = vunpack.c.l.b16 %v2605
    %v2676 = vunpack.c.l.b16 %v2606
    %v2677 = vunpack.c.l.b16 %v2607
    %v2678 = vunpack.c.l.b16 %v2608
    %v2679 = vunpack.c.l.b16 %v2609
    %v2680 = vunpack.c.l.b16 %v2610
    %v2681 = vunpack.c.l.b16 %v2611
    %v2682 = vunpack.c.l.b16 %v2612
    %v2683 = vunpack.c.l.b16 %v2613
    %v2684 = vunpack.c.l.b16 %v2614
    %v2685 = vunpack.c.l.b16 %v2615
    %v2686 = vunpack.c.l.b16 %v2616
    %v2687 = vunpack.c.l.b16 %v2617
    %v2688 = vpack.c.b16 %v2657, %v2656
    %v2689 = vpack.c.b16 %v2659, %v2658
    %v2690 = vpack.c.b16 %v2661, %v2660
    %v2691 = vpack.c.b16 %v2663, %v2662
    %v2692 = vpack.c.b16 %v2665, %v2664
    %v2693 = vpack.c.b16 %v2667, %v2666
    %v2694 = vpack.c.b16 %v2669, %v2668
    %v2695 = vpack.c.b16 %v2671, %v2670
    %v2696 = vpack.c.b16 %v2673, %v2672
    %v2697 = vpack.c.b16 %v2675, %v2674
    %v2698 = vpack.c.b16 %v2677, %v2676
    %v2699 = vpack.c.b16 %v2679, %v2678
    %v2700 = vpack.c.b16 %v2681, %v2680
    %v2701 = vpack.c.b16 %v2683, %v2682
    %v2702 = vpack.c.b16 %v2685, %v2684
    %v2703 = vpack.c.b16 %v2687, %v2686
    %2720 = vmatprep.subr.bf16.mxu0 0
    %2721 = vmatpush1.bf16.msra.mxu0 %v2688
    %2722 = vmatprep.subr.bf16.mxu0 0
    %2723 = vmatpush1.bf16.msra.mxu0 %v2689
    %2724 = vmatprep.subr.bf16.mxu0 0
    %2725 = vmatpush1.bf16.msra.mxu0 %v2690
    %2726 = vmatprep.subr.bf16.mxu0 0
    %2727 = vmatpush1.bf16.msra.mxu0 %v2691
    %2728 = vmatprep.subr.bf16.mxu0 0
    %2729 = vmatpush1.bf16.msra.mxu0 %v2692
    %2730 = vmatprep.subr.bf16.mxu0 0
    %2731 = vmatpush1.bf16.msra.mxu0 %v2693
    %2732 = vmatprep.subr.bf16.mxu0 0
    %2733 = vmatpush1.bf16.msra.mxu0 %v2694
    %2734 = vmatprep.subr.bf16.mxu0 0
    %2735 = vmatpush1.bf16.msra.mxu0 %v2695
    %2736 = vmatprep.subr.bf16.mxu0 0
    %2737 = vmatpush1.bf16.msra.mxu0 %v2696
    %2738 = vmatprep.subr.bf16.mxu0 0
    %2739 = vmatpush1.bf16.msra.mxu0 %v2697
    %2740 = vmatprep.subr.bf16.mxu0 0
    %2741 = vmatpush1.bf16.msra.mxu0 %v2698
    %2742 = vmatprep.subr.bf16.mxu0 0
    %2743 = vmatpush1.bf16.msra.mxu0 %v2699
    %2744 = vmatprep.subr.bf16.mxu0 0
    %2745 = vmatpush1.bf16.msra.mxu0 %v2700
    %2746 = vmatprep.subr.bf16.mxu0 0
    %2747 = vmatpush1.bf16.msra.mxu0 %v2701
    %2748 = vmatprep.subr.bf16.mxu0 0
    %2749 = vmatpush1.bf16.msra.mxu0 %v2702
    %2750 = vmatprep.subr.bf16.mxu0 0
    %2751 = vmatpush1.bf16.msra.mxu0 %v2703
    %2752 = vmatprep.mubr.bf16.mxu0 %v2623
    %2753 = vmatmul.mubr.bf16.gmra.mrb[0].mxu0 %v2622
    %v2754 = vpop.f32.mrb[0].mxu0
    %v2755 = vadd.f32 0.0, %v2754
    %v2756 = vpop.f32.mrb[0].mxu0
    %v2757 = vpop.f32.mrb[0].mxu0
    %v2758 = vpop.f32.mrb[0].mxu0
    %2759 = vdwg.mxu0
    %vm2760 = vcmask 123904
    %v2761 = vsel %vm2760, %v2755, 0.0
    %v2762 = vrot.slane %v2761, 4
    %v2763 = vadd.f32 %v2761, %v2762
    %v2764 = vrot.slane %v2763, 2
    %v2765 = vadd.f32 %v2763, %v2764
    %v2766 = vrot.slane %v2765, 1
    %v2767 = vadd.f32 %v2765, %v2766
    %v2768 = vmul.f32 %v2767, 0.03125
    %v2769 = vpack.c.bf16 %v2768, %v2768
    %v2772 = vunpack.c.l.b16 %v2618
    %v2773 = vunpack.c.h.b16 %v2618
    %v2774 = vunpack.c.l.b16 %v2619
    %v2775 = vunpack.c.h.b16 %v2619
    %v2776 = vpack.c.b16 %v2774, %v2772
    %v2777 = vpack.c.b16 %v2775, %v2773
    %vm2780 = vcmask 130048
    %v2782 = vsel %vm2780, %v2769, 0
    %2784 = vmatprep.subr.bf16.mxu0 %v2777
    %2785 = vmatpush1.bf16.msra.mxu0 %v2776
    %2786 = vmatprep.subr.bf16.mxu0 0
    %2787 = vmatpush1.bf16.msra.mxu0 0
    %2788 = vmatprep.subr.bf16.mxu0 0
    %2789 = vmatpush1.bf16.msra.mxu0 0
    %2790 = vmatprep.subr.bf16.mxu0 0
    %2791 = vmatpush1.bf16.msra.mxu0 0
    %2792 = vmatprep.subr.bf16.mxu0 0
    %2793 = vmatpush1.bf16.msra.mxu0 0
    %2794 = vmatprep.subr.bf16.mxu0 0
    %2795 = vmatpush1.bf16.msra.mxu0 0
    %2796 = vmatprep.subr.bf16.mxu0 0
    %2797 = vmatpush1.bf16.msra.mxu0 0
    %2798 = vmatprep.subr.bf16.mxu0 0
    %2799 = vmatpush1.bf16.msra.mxu0 0
    %2800 = vmatprep.subr.bf16.mxu0 0
    %2801 = vmatpush1.bf16.msra.mxu0 0
    %2802 = vmatprep.subr.bf16.mxu0 0
    %2803 = vmatpush1.bf16.msra.mxu0 0
    %2804 = vmatprep.subr.bf16.mxu0 0
    %2805 = vmatpush1.bf16.msra.mxu0 0
    %2806 = vmatprep.subr.bf16.mxu0 0
    %2807 = vmatpush1.bf16.msra.mxu0 0
    %2808 = vmatprep.subr.bf16.mxu0 0
    %2809 = vmatpush1.bf16.msra.mxu0 0
    %2810 = vmatprep.subr.bf16.mxu0 0
    %2811 = vmatpush1.bf16.msra.mxu0 0
    %2812 = vmatprep.subr.bf16.mxu0 0
    %2813 = vmatpush1.bf16.msra.mxu0 0
    %2814 = vmatprep.subr.bf16.mxu0 0
    %2815 = vmatpush1.bf16.msra.mxu0 0
    %2816 = vmatprep.mubr.bf16.mxu0 0
    %2817 = vmatmul.mubr.bf16.gmra.mrb[0].mxu0 %v2782
    %v2818 = vpop.f32.mrb[0].mxu0
    %v2819 = vadd.f32 0.0, %v2818
    %v2820 = vpop.f32.mrb[0].mxu0
    %v2821 = vadd.f32 0.0, %v2820
    %v2822 = vpop.f32.mrb[0].mxu0
    %v2823 = vpop.f32.mrb[0].mxu0
    %2824 = vdwg.mxu0
    %v2825 = vlaneseq
    %v2826 = vshrl.u32 %v2825, 7
    %v2827 = vsub.s32 0, %v2826
    %v2828 = vrot.slane %v2819, %v2827
    %v2829 = vlaneseq
    %v2830 = vshrl.u32 %v2829, 7
    %v2831 = vsub.s32 0, %v2830
    %v2832 = vrot.slane %v2821, %v2831
    %v2833 = vsub.f32 %v2580, %v2828
    %v2834 = vsub.f32 %v2582, %v2832
    %v2835 = vmul.f32 %v2833, %v2833
    %v2836 = vmul.f32 %v2834, %v2834
    %v2837 = vpack.c.bf16 %v2835, %v2835
    %v2838 = vpack.c.bf16 %v2836, %v2836
    %2839 = vmatprep.subr.bf16.mxu0 0
    %2840 = vmatpush1.bf16.msra.mxu0 %v2688
    %2841 = vmatprep.subr.bf16.mxu0 0
    %2842 = vmatpush1.bf16.msra.mxu0 %v2689
    %2843 = vmatprep.subr.bf16.mxu0 0
    %2844 = vmatpush1.bf16.msra.mxu0 %v2690
    %2845 = vmatprep.subr.bf16.mxu0 0
    %2846 = vmatpush1.bf16.msra.mxu0 %v2691
    %2847 = vmatprep.subr.bf16.mxu0 0
    %2848 = vmatpush1.bf16.msra.mxu0 %v2692
    %2849 = vmatprep.subr.bf16.mxu0 0
    %2850 = vmatpush1.bf16.msra.mxu0 %v2693
    %2851 = vmatprep.subr.bf16.mxu0 0
    %2852 = vmatpush1.bf16.msra.mxu0 %v2694
    %2853 = vmatprep.subr.bf16.mxu0 0
    %2854 = vmatpush1.bf16.msra.mxu0 %v2695
    %2855 = vmatprep.subr.bf16.mxu0 0
    %2856 = vmatpush1.bf16.msra.mxu0 %v2696
    %2857 = vmatprep.subr.bf16.mxu0 0
    %2858 = vmatpush1.bf16.msra.mxu0 %v2697
    %2859 = vmatprep.subr.bf16.mxu0 0
    %2860 = vmatpush1.bf16.msra.mxu0 %v2698
    %2861 = vmatprep.subr.bf16.mxu0 0
    %2862 = vmatpush1.bf16.msra.mxu0 %v2699
    %2863 = vmatprep.subr.bf16.mxu0 0
    %2864 = vmatpush1.bf16.msra.mxu0 %v2700
    %2865 = vmatprep.subr.bf16.mxu0 0
    %2866 = vmatpush1.bf16.msra.mxu0 %v2701
    %2867 = vmatprep.subr.bf16.mxu0 0
    %2868 = vmatpush1.bf16.msra.mxu0 %v2702
    %2869 = vmatprep.subr.bf16.mxu0 0
    %2870 = vmatpush1.bf16.msra.mxu0 %v2703
    %2871 = vmatprep.mubr.bf16.mxu0 %v2838
    %2872 = vmatmul.mubr.bf16.gmra.mrb[0].mxu0 %v2837
    %v2873 = vpop.f32.mrb[0].mxu0
    %v2874 = vadd.f32 0.0, %v2873
    %v2875 = vpop.f32.mrb[0].mxu0
    %v2876 = vpop.f32.mrb[0].mxu0
    %v2877 = vpop.f32.mrb[0].mxu0
    %2878 = vdwg.mxu0
    %v2879 = vsel %vm2760, %v2874, 0.0
    %v2880 = vrot.slane %v2879, 4
    %v2881 = vadd.f32 %v2879, %v2880
    %v2882 = vrot.slane %v2881, 2
    %v2883 = vadd.f32 %v2881, %v2882
    %v2884 = vrot.slane %v2883, 1
    %v2885 = vadd.f32 %v2883, %v2884
    %v2886 = vmul.f32 %v2885, 0.03125
    %v2887 = vadd.f32 %v2886, 1e-05
    %v2888 = vrsqrt.pop %v2887
    %v2889 = vpack.c.bf16 %v2888, %v2888
    %v2891 = vsel %vm2780, %v2889, 0
    %2893 = vmatprep.subr.bf16.mxu0 %v2777
    %2894 = vmatpush1.bf16.msra.mxu0 %v2776
    %2895 = vmatprep.subr.bf16.mxu0 0
    %2896 = vmatpush1.bf16.msra.mxu0 0
    %2897 = vmatprep.subr.bf16.mxu0 0
    %2898 = vmatpush1.bf16.msra.mxu0 0
    %2899 = vmatprep.subr.bf16.mxu0 0
    %2900 = vmatpush1.bf16.msra.mxu0 0
    %2901 = vmatprep.subr.bf16.mxu0 0
    %2902 = vmatpush1.bf16.msra.mxu0 0
    %2903 = vmatprep.subr.bf16.mxu0 0
    %2904 = vmatpush1.bf16.msra.mxu0 0
    %2905 = vmatprep.subr.bf16.mxu0 0
    %2906 = vmatpush1.bf16.msra.mxu0 0
    %2907 = vmatprep.subr.bf16.mxu0 0
    %2908 = vmatpush1.bf16.msra.mxu0 0
    %2909 = vmatprep.subr.bf16.mxu0 0
    %2910 = vmatpush1.bf16.msra.mxu0 0
    %2911 = vmatprep.subr.bf16.mxu0 0
    %2912 = vmatpush1.bf16.msra.mxu0 0
    %2913 = vmatprep.subr.bf16.mxu0 0
    %2914 = vmatpush1.bf16.msra.mxu0 0
    %2915 = vmatprep.subr.bf16.mxu0 0
    %2916 = vmatpush1.bf16.msra.mxu0 0
    %2917 = vmatprep.subr.bf16.mxu0 0
    %2918 = vmatpush1.bf16.msra.mxu0 0
    %2919 = vmatprep.subr.bf16.mxu0 0
    %2920 = vmatpush1.bf16.msra.mxu0 0
    %2921 = vmatprep.subr.bf16.mxu0 0
    %2922 = vmatpush1.bf16.msra.mxu0 0
    %2923 = vmatprep.subr.bf16.mxu0 0
    %2924 = vmatpush1.bf16.msra.mxu0 0
    %2925 = vmatprep.mubr.bf16.mxu0 0
    %2926 = vmatmul.mubr.bf16.gmra.mrb[0].mxu0 %v2891
    %v2927 = vpop.f32.mrb[0].mxu0
    %v2928 = vadd.f32 0.0, %v2927
    %v2929 = vpop.f32.mrb[0].mxu0
    %v2930 = vadd.f32 0.0, %v2929
    %v2931 = vpop.f32.mrb[0].mxu0
    %v2932 = vpop.f32.mrb[0].mxu0
    %2933 = vdwg.mxu0
    %v2934 = vlaneseq
    %v2935 = vshrl.u32 %v2934, 7
    %v2936 = vsub.s32 0, %v2935
    %v2937 = vrot.slane %v2928, %v2936
    %v2938 = vlaneseq
    %v2939 = vshrl.u32 %v2938, 7
    %v2940 = vsub.s32 0, %v2939
    %v2941 = vrot.slane %v2930, %v2940
    %v2942 = vmul.f32 %v2833, %v2937
    %v2943 = vmul.f32 %v2834, %v2941
    %v2945 = vlaneseq
    %v2946 = vshrl.u32 %v2945, 7
    %v2947 = vsub.s32 0, %v2946
    %v2948 = vrot.slane %v2620, %v2947
    %v2949 = vlaneseq
    %v2950 = vshrl.u32 %v2949, 7
    %v2951 = vsub.s32 1, %v2950
    %v2952 = vrot.slane %v2620, %v2951
    %v2955 = vmul.f32 %v2942, %v2948
    %v2956 = vmul.f32 %v2943, %v2952
    %v2958 = vlaneseq
    %v2959 = vshrl.u32 %v2958, 7
    %v2960 = vsub.s32 0, %v2959
    %v2961 = vrot.slane %v2621, %v2960
    %v2962 = vlaneseq
    %v2963 = vshrl.u32 %v2962, 7
    %v2964 = vsub.s32 1, %v2963
    %v2965 = vrot.slane %v2621, %v2964
    %v2968 = vadd.f32 %v2955, %v2961
    %v2969 = vadd.f32 %v2956, %v2965
    %vm2970 = vcmp.gt.f32.partialorder %v2968, 0.0
    %vm2971 = vcmp.gt.f32.partialorder %v2969, 0.0
    %v2972 = vmul.f32 %v2968, 0.2
    %v2973 = vmul.f32 %v2969, 0.2
    %v2974 = vsel %vm2970, %v2968, %v2972
    %v2975 = vsel %vm2971, %v2969, %v2973
    %v2976 = vpack.c.bf16 %v2974, %v2974
    %v2977 = vpack.c.bf16 %v2975, %v2975
    %v2978 = vld [vmem:[#allocation10] sm:$0xf]
    %v2979 = vld [vmem:[#allocation10 + $0x4] sm:$0xf]
    %v2980 = vld [vmem:[#allocation10 + $0x8] sm:$0xf]
    %v2981 = vld [vmem:[#allocation10 + $0xc] sm:$0xf]
    %v2982 = vld [vmem:[#allocation10 + $0x10] sm:$0xf]
    %v2983 = vld [vmem:[#allocation10 + $0x14] sm:$0xf]
    %v2984 = vld [vmem:[#allocation10 + $0x18] sm:$0xf]
    %v2985 = vld [vmem:[#allocation10 + $0x1c] sm:$0xf]
    %v2986 = vld [vmem:[#allocation10 + $0x20] sm:$0xf]
    %v2987 = vld [vmem:[#allocation10 + $0x24] sm:$0xf]
    %v2988 = vld [vmem:[#allocation10 + $0x28] sm:$0xf]
    %v2989 = vld [vmem:[#allocation10 + $0x2c] sm:$0xf]
    %v2990 = vld [vmem:[#allocation10 + $0x30] sm:$0xf]
    %v2991 = vld [vmem:[#allocation10 + $0x34] sm:$0xf]
    %v2992 = vld [vmem:[#allocation10 + $0x38] sm:$0xf]
    %v2993 = vld [vmem:[#allocation10 + $0x3c] sm:$0xf]
    %v2994 = vld [vmem:[#allocation10 + $0x40] sm:$0xf]
    %v2995 = vld [vmem:[#allocation10 + $0x44] sm:$0xf]
    %v2996 = vld [vmem:[#allocation10 + $0x48] sm:$0xf]
    %v2997 = vld [vmem:[#allocation10 + $0x4c] sm:$0xf]
    %v2998 = vld [vmem:[#allocation10 + $0x50] sm:$0xf]
    %v2999 = vld [vmem:[#allocation10 + $0x54] sm:$0xf]
    %v3000 = vld [vmem:[#allocation10 + $0x58] sm:$0xf]
    %v3001 = vld [vmem:[#allocation10 + $0x5c] sm:$0xf]
    %v3002 = vld [vmem:[#allocation10 + $0x60] sm:$0xf]
    %v3003 = vld [vmem:[#allocation10 + $0x64] sm:$0xf]
    %v3004 = vld [vmem:[#allocation10 + $0x68] sm:$0xf]
    %v3005 = vld [vmem:[#allocation10 + $0x6c] sm:$0xf]
    %v3006 = vld [vmem:[#allocation10 + $0x70] sm:$0xf]
    %v3007 = vld [vmem:[#allocation10 + $0x74] sm:$0xf]
    %v3008 = vld [vmem:[#allocation10 + $0x78] sm:$0xf]
    %v3009 = vld [vmem:[#allocation10 + $0x7c] sm:$0xf]
    %v3042 = vunpack.c.l.b16 %v2978
    %v3043 = vunpack.c.l.b16 %v2979
    %v3044 = vunpack.c.l.b16 %v2980
    %v3045 = vunpack.c.l.b16 %v2981
    %v3046 = vunpack.c.l.b16 %v2982
    %v3047 = vunpack.c.l.b16 %v2983
    %v3048 = vunpack.c.l.b16 %v2984
    %v3049 = vunpack.c.l.b16 %v2985
    %v3050 = vunpack.c.l.b16 %v2986
    %v3051 = vunpack.c.l.b16 %v2987
    %v3052 = vunpack.c.l.b16 %v2988
    %v3053 = vunpack.c.l.b16 %v2989
    %v3054 = vunpack.c.l.b16 %v2990
    %v3055 = vunpack.c.l.b16 %v2991
    %v3056 = vunpack.c.l.b16 %v2992
    %v3057 = vunpack.c.l.b16 %v2993
    %v3058 = vunpack.c.l.b16 %v2994
    %v3059 = vunpack.c.l.b16 %v2995
    %v3060 = vunpack.c.l.b16 %v2996
    %v3061 = vunpack.c.l.b16 %v2997
    %v3062 = vunpack.c.l.b16 %v2998
    %v3063 = vunpack.c.l.b16 %v2999
    %v3064 = vunpack.c.l.b16 %v3000
    %v3065 = vunpack.c.l.b16 %v3001
    %v3066 = vunpack.c.l.b16 %v3002
    %v3067 = vunpack.c.l.b16 %v3003
    %v3068 = vunpack.c.l.b16 %v3004
    %v3069 = vunpack.c.l.b16 %v3005
    %v3070 = vunpack.c.l.b16 %v3006
    %v3071 = vunpack.c.l.b16 %v3007
    %v3072 = vunpack.c.l.b16 %v3008
    %v3073 = vunpack.c.l.b16 %v3009
    %v3074 = vpack.c.b16 %v3043, %v3042
    %v3075 = vpack.c.b16 %v3045, %v3044
    %v3076 = vpack.c.b16 %v3047, %v3046
    %v3077 = vpack.c.b16 %v3049, %v3048
    %v3078 = vpack.c.b16 %v3051, %v3050
    %v3079 = vpack.c.b16 %v3053, %v3052
    %v3080 = vpack.c.b16 %v3055, %v3054
    %v3081 = vpack.c.b16 %v3057, %v3056
    %v3082 = vpack.c.b16 %v3059, %v3058
    %v3083 = vpack.c.b16 %v3061, %v3060
    %v3084 = vpack.c.b16 %v3063, %v3062
    %v3085 = vpack.c.b16 %v3065, %v3064
    %v3086 = vpack.c.b16 %v3067, %v3066
    %v3087 = vpack.c.b16 %v3069, %v3068
    %v3088 = vpack.c.b16 %v3071, %v3070
    %v3089 = vpack.c.b16 %v3073, %v3072
    %3106 = vmatprep.subr.bf16.mxu0 0
    %3107 = vmatpush1.bf16.msra.mxu0 %v3074
    %3108 = vmatprep.subr.bf16.mxu0 0
    %3109 = vmatpush1.bf16.msra.mxu0 %v3075
    %3110 = vmatprep.subr.bf16.mxu0 0
    %3111 = vmatpush1.bf16.msra.mxu0 %v3076
    %3112 = vmatprep.subr.bf16.mxu0 0
    %3113 = vmatpush1.bf16.msra.mxu0 %v3077
    %3114 = vmatprep.subr.bf16.mxu0 0
    %3115 = vmatpush1.bf16.msra.mxu0 %v3078
    %3116 = vmatprep.subr.bf16.mxu0 0
    %3117 = vmatpush1.bf16.msra.mxu0 %v3079
    %3118 = vmatprep.subr.bf16.mxu0 0
    %3119 = vmatpush1.bf16.msra.mxu0 %v3080
    %3120 = vmatprep.subr.bf16.mxu0 0
    %3121 = vmatpush1.bf16.msra.mxu0 %v3081
    %3122 = vmatprep.subr.bf16.mxu0 0
    %3123 = vmatpush1.bf16.msra.mxu0 %v3082
    %3124 = vmatprep.subr.bf16.mxu0 0
    %3125 = vmatpush1.bf16.msra.mxu0 %v3083
    %3126 = vmatprep.subr.bf16.mxu0 0
    %3127 = vmatpush1.bf16.msra.mxu0 %v3084
    %3128 = vmatprep.subr.bf16.mxu0 0
    %3129 = vmatpush1.bf16.msra.mxu0 %v3085
    %3130 = vmatprep.subr.bf16.mxu0 0
    %3131 = vmatpush1.bf16.msra.mxu0 %v3086
    %3132 = vmatprep.subr.bf16.mxu0 0
    %3133 = vmatpush1.bf16.msra.mxu0 %v3087
    %3134 = vmatprep.subr.bf16.mxu0 0
    %3135 = vmatpush1.bf16.msra.mxu0 %v3088
    %3136 = vmatprep.subr.bf16.mxu0 0
    %3137 = vmatpush1.bf16.msra.mxu0 %v3089
    %3138 = vmatprep.mubr.bf16.mxu0 %v2977
    %3139 = vmatmul.mubr.bf16.gmra.mrb[0].mxu0 %v2976
    %v3140 = vpop.f32.mrb[0].mxu0
    %v3141 = vadd.f32 0.0, %v3140
    %v3142 = vpop.f32.mrb[0].mxu0
    %v3143 = vpop.f32.mrb[0].mxu0
    %v3144 = vpop.f32.mrb[0].mxu0
    %3145 = vdwg.mxu0
    %3146 = vst [vmem:[#allocation17] sm:$0x3] %v3141
    %v3147 = vpack.c.bf16 %v3141, %v3141
    %v3148 = vld [vmem:[#allocation11] sm:$0xff]
    %v3149 = vld [vmem:[#allocation11 + $0x8] sm:$0xff]
    %v3150 = vld [vmem:[#allocation11 + $0x10] sm:$0xff]
    %v3151 = vld [vmem:[#allocation11 + $0x18] sm:$0xff]
    %v3152 = vld [vmem:[#allocation11 + $0x20] sm:$0xff]
    %v3153 = vld [vmem:[#allocation11 + $0x28] sm:$0xff]
    %v3154 = vld [vmem:[#allocation11 + $0x30] sm:$0xff]
    %v3155 = vld [vmem:[#allocation11 + $0x38] sm:$0xff]
    %v3156 = vld [vmem:[#allocation11 + $0x40] sm:$0xff]
    %v3157 = vld [vmem:[#allocation11 + $0x48] sm:$0xff]
    %v3158 = vld [vmem:[#allocation11 + $0x50] sm:$0xff]
    %v3159 = vld [vmem:[#allocation11 + $0x58] sm:$0xff]
    %v3160 = vld [vmem:[#allocation11 + $0x60] sm:$0xff]
    %v3161 = vld [vmem:[#allocation11 + $0x68] sm:$0xff]
    %v3162 = vld [vmem:[#allocation11 + $0x70] sm:$0xff]
    %v3163 = vld [vmem:[#allocation11 + $0x78] sm:$0xff]
    %v3180 = vunpack.c.l.b16 %v3148
    %v3181 = vunpack.c.h.b16 %v3148
    %v3182 = vunpack.c.l.b16 %v3149
    %v3183 = vunpack.c.h.b16 %v3149
    %v3184 = vunpack.c.l.b16 %v3150
    %v3185 = vunpack.c.h.b16 %v3150
    %v3186 = vunpack.c.l.b16 %v3151
    %v3187 = vunpack.c.h.b16 %v3151
    %v3188 = vunpack.c.l.b16 %v3152
    %v3189 = vunpack.c.h.b16 %v3152
    %v3190 = vunpack.c.l.b16 %v3153
    %v3191 = vunpack.c.h.b16 %v3153
    %v3192 = vunpack.c.l.b16 %v3154
    %v3193 = vunpack.c.h.b16 %v3154
    %v3194 = vunpack.c.l.b16 %v3155
    %v3195 = vunpack.c.h.b16 %v3155
    %v3196 = vunpack.c.l.b16 %v3156
    %v3197 = vunpack.c.h.b16 %v3156
    %v3198 = vunpack.c.l.b16 %v3157
    %v3199 = vunpack.c.h.b16 %v3157
    %v3200 = vunpack.c.l.b16 %v3158
    %v3201 = vunpack.c.h.b16 %v3158
    %v3202 = vunpack.c.l.b16 %v3159
    %v3203 = vunpack.c.h.b16 %v3159
    %v3204 = vunpack.c.l.b16 %v3160
    %v3205 = vunpack.c.h.b16 %v3160
    %v3206 = vunpack.c.l.b16 %v3161
    %v3207 = vunpack.c.h.b16 %v3161
    %v3208 = vunpack.c.l.b16 %v3162
    %v3209 = vunpack.c.h.b16 %v3162
    %v3210 = vunpack.c.l.b16 %v3163
    %v3211 = vunpack.c.h.b16 %v3163
    %v3212 = vpack.c.b16 %v3182, %v3180
    %v3213 = vpack.c.b16 %v3183, %v3181
    %v3214 = vpack.c.b16 %v3186, %v3184
    %v3215 = vpack.c.b16 %v3187, %v3185
    %v3216 = vpack.c.b16 %v3190, %v3188
    %v3217 = vpack.c.b16 %v3191, %v3189
    %v3218 = vpack.c.b16 %v3194, %v3192
    %v3219 = vpack.c.b16 %v3195, %v3193
    %v3220 = vpack.c.b16 %v3198, %v3196
    %v3221 = vpack.c.b16 %v3199, %v3197
    %v3222 = vpack.c.b16 %v3202, %v3200
    %v3223 = vpack.c.b16 %v3203, %v3201
    %v3224 = vpack.c.b16 %v3206, %v3204
    %v3225 = vpack.c.b16 %v3207, %v3205
    %v3226 = vpack.c.b16 %v3210, %v3208
    %v3227 = vpack.c.b16 %v3211, %v3209
    %3244 = vmatprep.subr.bf16.mxu0 %v3213
    %3245 = vmatpush1.bf16.msra.mxu0 %v3212
    %3246 = vmatprep.subr.bf16.mxu0 %v3215
    %3247 = vmatpush1.bf16.msra.mxu0 %v3214
    %3248 = vmatprep.subr.bf16.mxu0 %v3217
    %3249 = vmatpush1.bf16.msra.mxu0 %v3216
    %3250 = vmatprep.subr.bf16.mxu0 %v3219
    %3251 = vmatpush1.bf16.msra.mxu0 %v3218
    %3252 = vmatprep.subr.bf16.mxu0 %v3221
    %3253 = vmatpush1.bf16.msra.mxu0 %v3220
    %3254 = vmatprep.subr.bf16.mxu0 %v3223
    %3255 = vmatpush1.bf16.msra.mxu0 %v3222
    %3256 = vmatprep.subr.bf16.mxu0 %v3225
    %3257 = vmatpush1.bf16.msra.mxu0 %v3224
    %3258 = vmatprep.subr.bf16.mxu0 %v3227
    %3259 = vmatpush1.bf16.msra.mxu0 %v3226
    %3260 = vmatprep.subr.bf16.mxu0 0
    %3261 = vmatpush1.bf16.msra.mxu0 0
    %3262 = vmatprep.subr.bf16.mxu0 0
    %3263 = vmatpush1.bf16.msra.mxu0 0
    %3264 = vmatprep.subr.bf16.mxu0 0
    %3265 = vmatpush1.bf16.msra.mxu0 0
    %3266 = vmatprep.subr.bf16.mxu0 0
    %3267 = vmatpush1.bf16.msra.mxu0 0
    %3268 = vmatprep.subr.bf16.mxu0 0
    %3269 = vmatpush1.bf16.msra.mxu0 0
    %3270 = vmatprep.subr.bf16.mxu0 0
    %3271 = vmatpush1.bf16.msra.mxu0 0
    %3272 = vmatprep.subr.bf16.mxu0 0
    %3273 = vmatpush1.bf16.msra.mxu0 0
    %3274 = vmatprep.subr.bf16.mxu0 0
    %3275 = vmatpush1.bf16.msra.mxu0 0
    %3276 = vmatprep.mubr.bf16.mxu0 0
    %3277 = vmatmul.mubr.bf16.gmra.mrb[0].mxu0 %v3147
    %v3278 = vpop.f32.mrb[0].mxu0
    %v3279 = vadd.f32 0.0, %v3278
    %v3280 = vpop.f32.mrb[0].mxu0
    %v3281 = vadd.f32 0.0, %v3280
    %v3282 = vpop.f32.mrb[0].mxu0
    %v3283 = vpop.f32.mrb[0].mxu0
    %3284 = vdwg.mxu0
    %v3285 = vld [vmem:[%s9] sm:$0xf]
    %v3286 = vld [vmem:[%s9 + $0x4] sm:$0xf]
    %v3287 = vld [vmem:[%s9 + $0x8] sm:$0xf]
    %v3288 = vld [vmem:[%s9 + $0xc] sm:$0xf]
    %v3289 = vld [vmem:[%s9 + $0x10] sm:$0xf]
    %v3290 = vld [vmem:[%s9 + $0x14] sm:$0xf]
    %v3291 = vld [vmem:[%s9 + $0x18] sm:$0xf]
    %v3292 = vld [vmem:[%s9 + $0x1c] sm:$0xf]
    %v3293 = vld [vmem:[%s9 + $0x20] sm:$0xf]
    %v3294 = vld [vmem:[%s9 + $0x24] sm:$0xf]
    %v3295 = vld [vmem:[%s9 + $0x28] sm:$0xf]
    %v3296 = vld [vmem:[%s9 + $0x2c] sm:$0xf]
    %v3297 = vld [vmem:[%s9 + $0x30] sm:$0xf]
    %v3298 = vld [vmem:[%s9 + $0x34] sm:$0xf]
    %v3299 = vld [vmem:[%s9 + $0x38] sm:$0xf]
    %v3300 = vld [vmem:[%s9 + $0x3c] sm:$0xf]
    %v3301 = vld [vmem:[%s9 + $0x40] sm:$0xf]
    %v3302 = vld [vmem:[%s9 + $0x44] sm:$0xf]
    %v3303 = vld [vmem:[%s9 + $0x48] sm:$0xf]
    %v3304 = vld [vmem:[%s9 + $0x4c] sm:$0xf]
    %v3305 = vld [vmem:[%s9 + $0x50] sm:$0xf]
    %v3306 = vld [vmem:[%s9 + $0x54] sm:$0xf]
    %v3307 = vld [vmem:[%s9 + $0x58] sm:$0xf]
    %v3308 = vld [vmem:[%s9 + $0x5c] sm:$0xf]
    %v3309 = vld [vmem:[%s9 + $0x60] sm:$0xf]
    %v3310 = vld [vmem:[%s9 + $0x64] sm:$0xf]
    %v3311 = vld [vmem:[%s9 + $0x68] sm:$0xf]
    %v3312 = vld [vmem:[%s9 + $0x6c] sm:$0xf]
    %v3313 = vld [vmem:[%s9 + $0x70] sm:$0xf]
    %v3314 = vld [vmem:[%s9 + $0x74] sm:$0xf]
    %v3315 = vld [vmem:[%s9 + $0x78] sm:$0xf]
    %v3316 = vld [vmem:[%s9 + $0x7c] sm:$0xf]
    %v3317 = vld [vmem:[%s10] sm:$0xff]
    %v3318 = vld [vmem:[%s10 + $0x8] sm:$0xff]
    %v3319 = vld [vmem:[#allocation13] sm:$0x3]
    %v3320 = vld [vmem:[%s12] sm:$0x3]
    %v3321 = vpack.c.bf16 %v3279, %v3279
    %v3322 = vpack.c.bf16 %v3281, %v3281
    %v3355 = vunpack.c.l.b16 %v3285
    %v3356 = vunpack.c.l.b16 %v3286
    %v3357 = vunpack.c.l.b16 %v3287
    %v3358 = vunpack.c.l.b16 %v3288
    %v3359 = vunpack.c.l.b16 %v3289
    %v3360 = vunpack.c.l.b16 %v3290
    %v3361 = vunpack.c.l.b16 %v3291
    %v3362 = vunpack.c.l.b16 %v3292
    %v3363 = vunpack.c.l.b16 %v3293
    %v3364 = vunpack.c.l.b16 %v3294
    %v3365 = vunpack.c.l.b16 %v3295
    %v3366 = vunpack.c.l.b16 %v3296
    %v3367 = vunpack.c.l.b16 %v3297
    %v3368 = vunpack.c.l.b16 %v3298
    %v3369 = vunpack.c.l.b16 %v3299
    %v3370 = vunpack.c.l.b16 %v3300
    %v3371 = vunpack.c.l.b16 %v3301
    %v3372 = vunpack.c.l.b16 %v3302
    %v3373 = vunpack.c.l.b16 %v3303
    %v3374 = vunpack.c.l.b16 %v3304
    %v3375 = vunpack.c.l.b16 %v3305
    %v3376 = vunpack.c.l.b16 %v3306
    %v3377 = vunpack.c.l.b16 %v3307
    %v3378 = vunpack.c.l.b16 %v3308
    %v3379 = vunpack.c.l.b16 %v3309
    %v3380 = vunpack.c.l.b16 %v3310
    %v3381 = vunpack.c.l.b16 %v3311
    %v3382 = vunpack.c.l.b16 %v3312
    %v3383 = vunpack.c.l.b16 %v3313
    %v3384 = vunpack.c.l.b16 %v3314
    %v3385 = vunpack.c.l.b16 %v3315
    %v3386 = vunpack.c.l.b16 %v3316
    %v3387 = vpack.c.b16 %v3356, %v3355
    %v3388 = vpack.c.b16 %v3358, %v3357
    %v3389 = vpack.c.b16 %v3360, %v3359
    %v3390 = vpack.c.b16 %v3362, %v3361
    %v3391 = vpack.c.b16 %v3364, %v3363
    %v3392 = vpack.c.b16 %v3366, %v3365
    %v3393 = vpack.c.b16 %v3368, %v3367
    %v3394 = vpack.c.b16 %v3370, %v3369
    %v3395 = vpack.c.b16 %v3372, %v3371
    %v3396 = vpack.c.b16 %v3374, %v3373
    %v3397 = vpack.c.b16 %v3376, %v3375
    %v3398 = vpack.c.b16 %v3378, %v3377
    %v3399 = vpack.c.b16 %v3380, %v3379
    %v3400 = vpack.c.b16 %v3382, %v3381
    %v3401 = vpack.c.b16 %v3384, %v3383
    %v3402 = vpack.c.b16 %v3386, %v3385
    %3419 = vmatprep.subr.bf16.mxu0 0
    %3420 = vmatpush1.bf16.msra.mxu0 %v3387
    %3421 = vmatprep.subr.bf16.mxu0 0
    %3422 = vmatpush1.bf16.msra.mxu0 %v3388
    %3423 = vmatprep.subr.bf16.mxu0 0
    %3424 = vmatpush1.bf16.msra.mxu0 %v3389
    %3425 = vmatprep.subr.bf16.mxu0 0
    %3426 = vmatpush1.bf16.msra.mxu0 %v3390
    %3427 = vmatprep.subr.bf16.mxu0 0
    %3428 = vmatpush1.bf16.msra.mxu0 %v3391
    %3429 = vmatprep.subr.bf16.mxu0 0
    %3430 = vmatpush1.bf16.msra.mxu0 %v3392
    %3431 = vmatprep.subr.bf16.mxu0 0
    %3432 = vmatpush1.bf16.msra.mxu0 %v3393
    %3433 = vmatprep.subr.bf16.mxu0 0
    %3434 = vmatpush1.bf16.msra.mxu0 %v3394
    %3435 = vmatprep.subr.bf16.mxu0 0
    %3436 = vmatpush1.bf16.msra.mxu0 %v3395
    %3437 = vmatprep.subr.bf16.mxu0 0
    %3438 = vmatpush1.bf16.msra.mxu0 %v3396
    %3439 = vmatprep.subr.bf16.mxu0 0
    %3440 = vmatpush1.bf16.msra.mxu0 %v3397
    %3441 = vmatprep.subr.bf16.mxu0 0
    %3442 = vmatpush1.bf16.msra.mxu0 %v3398
    %3443 = vmatprep.subr.bf16.mxu0 0
    %3444 = vmatpush1.bf16.msra.mxu0 %v3399
    %3445 = vmatprep.subr.bf16.mxu0 0
    %3446 = vmatpush1.bf16.msra.mxu0 %v3400
    %3447 = vmatprep.subr.bf16.mxu0 0
    %3448 = vmatpush1.bf16.msra.mxu0 %v3401
    %3449 = vmatprep.subr.bf16.mxu0 0
    %3450 = vmatpush1.bf16.msra.mxu0 %v3402
    %3451 = vmatprep.mubr.bf16.mxu0 %v3322
    %3452 = vmatmul.mubr.bf16.gmra.mrb[0].mxu0 %v3321
    %v3453 = vpop.f32.mrb[0].mxu0
    %v3454 = vadd.f32 0.0, %v3453
    %v3455 = vpop.f32.mrb[0].mxu0
    %v3456 = vpop.f32.mrb[0].mxu0
    %v3457 = vpop.f32.mrb[0].mxu0
    %3458 = vdwg.mxu0
    %v3459 = vsel %vm2760, %v3454, 0.0
    %v3460 = vrot.slane %v3459, 4
    %v3461 = vadd.f32 %v3459, %v3460
    %v3462 = vrot.slane %v3461, 2
    %v3463 = vadd.f32 %v3461, %v3462
    %v3464 = vrot.slane %v3463, 1
    %v3465 = vadd.f32 %v3463, %v3464
    %v3466 = vmul.f32 %v3465, 0.03125
    %v3467 = vpack.c.bf16 %v3466, %v3466
    %v3470 = vunpack.c.l.b16 %v3317
    %v3471 = vunpack.c.h.b16 %v3317
    %v3472 = vunpack.c.l.b16 %v3318
    %v3473 = vunpack.c.h.b16 %v3318
    %v3474 = vpack.c.b16 %v3472, %v3470
    %v3475 = vpack.c.b16 %v3473, %v3471
    %v3479 = vsel %vm2780, %v3467, 0
    %3481 = vmatprep.subr.bf16.mxu0 %v3475
    %3482 = vmatpush1.bf16.msra.mxu0 %v3474
    %3483 = vmatprep.subr.bf16.mxu0 0
    %3484 = vmatpush1.bf16.msra.mxu0 0
    %3485 = vmatprep.subr.bf16.mxu0 0
    %3486 = vmatpush1.bf16.msra.mxu0 0
    %3487 = vmatprep.subr.bf16.mxu0 0
    %3488 = vmatpush1.bf16.msra.mxu0 0
    %3489 = vmatprep.subr.bf16.mxu0 0
    %3490 = vmatpush1.bf16.msra.mxu0 0
    %3491 = vmatprep.subr.bf16.mxu0 0
    %3492 = vmatpush1.bf16.msra.mxu0 0
    %3493 = vmatprep.subr.bf16.mxu0 0
    %3494 = vmatpush1.bf16.msra.mxu0 0
    %3495 = vmatprep.subr.bf16.mxu0 0
    %3496 = vmatpush1.bf16.msra.mxu0 0
    %3497 = vmatprep.subr.bf16.mxu0 0
    %3498 = vmatpush1.bf16.msra.mxu0 0
    %3499 = vmatprep.subr.bf16.mxu0 0
    %3500 = vmatpush1.bf16.msra.mxu0 0
    %3501 = vmatprep.subr.bf16.mxu0 0
    %3502 = vmatpush1.bf16.msra.mxu0 0
    %3503 = vmatprep.subr.bf16.mxu0 0
    %3504 = vmatpush1.bf16.msra.mxu0 0
    %3505 = vmatprep.subr.bf16.mxu0 0
    %3506 = vmatpush1.bf16.msra.mxu0 0
    %3507 = vmatprep.subr.bf16.mxu0 0
    %3508 = vmatpush1.bf16.msra.mxu0 0
    %3509 = vmatprep.subr.bf16.mxu0 0
    %3510 = vmatpush1.bf16.msra.mxu0 0
    %3511 = vmatprep.subr.bf16.mxu0 0
    %3512 = vmatpush1.bf16.msra.mxu0 0
    %3513 = vmatprep.mubr.bf16.mxu0 0
    %3514 = vmatmul.mubr.bf16.gmra.mrb[0].mxu0 %v3479
    %v3515 = vpop.f32.mrb[0].mxu0
    %v3516 = vadd.f32 0.0, %v3515
    %v3517 = vpop.f32.mrb[0].mxu0
    %v3518 = vadd.f32 0.0, %v3517
    %v3519 = vpop.f32.mrb[0].mxu0
    %v3520 = vpop.f32.mrb[0].mxu0
    %3521 = vdwg.mxu0
    %v3522 = vlaneseq
    %v3523 = vshrl.u32 %v3522, 7
    %v3524 = vsub.s32 0, %v3523
    %v3525 = vrot.slane %v3516, %v3524
    %v3526 = vlaneseq
    %v3527 = vshrl.u32 %v3526, 7
    %v3528 = vsub.s32 0, %v3527
    %v3529 = vrot.slane %v3518, %v3528
    %v3530 = vsub.f32 %v3279, %v3525
    %v3531 = vsub.f32 %v3281, %v3529
    %v3532 = vmul.f32 %v3530, %v3530
    %v3533 = vmul.f32 %v3531, %v3531
    %v3534 = vpack.c.bf16 %v3532, %v3532
    %v3535 = vpack.c.bf16 %v3533, %v3533
    %3536 = vmatprep.subr.bf16.mxu0 0
    %3537 = vmatpush1.bf16.msra.mxu0 %v3387
    %3538 = vmatprep.subr.bf16.mxu0 0
    %3539 = vmatpush1.bf16.msra.mxu0 %v3388
    %3540 = vmatprep.subr.bf16.mxu0 0
    %3541 = vmatpush1.bf16.msra.mxu0 %v3389
    %3542 = vmatprep.subr.bf16.mxu0 0
    %3543 = vmatpush1.bf16.msra.mxu0 %v3390
    %3544 = vmatprep.subr.bf16.mxu0 0
    %3545 = vmatpush1.bf16.msra.mxu0 %v3391
    %3546 = vmatprep.subr.bf16.mxu0 0
    %3547 = vmatpush1.bf16.msra.mxu0 %v3392
    %3548 = vmatprep.subr.bf16.mxu0 0
    %3549 = vmatpush1.bf16.msra.mxu0 %v3393
    %3550 = vmatprep.subr.bf16.mxu0 0
    %3551 = vmatpush1.bf16.msra.mxu0 %v3394
    %3552 = vmatprep.subr.bf16.mxu0 0
    %3553 = vmatpush1.bf16.msra.mxu0 %v3395
    %3554 = vmatprep.subr.bf16.mxu0 0
    %3555 = vmatpush1.bf16.msra.mxu0 %v3396
    %3556 = vmatprep.subr.bf16.mxu0 0
    %3557 = vmatpush1.bf16.msra.mxu0 %v3397
    %3558 = vmatprep.subr.bf16.mxu0 0
    %3559 = vmatpush1.bf16.msra.mxu0 %v3398
    %3560 = vmatprep.subr.bf16.mxu0 0
    %3561 = vmatpush1.bf16.msra.mxu0 %v3399
    %3562 = vmatprep.subr.bf16.mxu0 0
    %3563 = vmatpush1.bf16.msra.mxu0 %v3400
    %3564 = vmatprep.subr.bf16.mxu0 0
    %3565 = vmatpush1.bf16.msra.mxu0 %v3401
    %3566 = vmatprep.subr.bf16.mxu0 0
    %3567 = vmatpush1.bf16.msra.mxu0 %v3402
    %3568 = vmatprep.mubr.bf16.mxu0 %v3535
    %3569 = vmatmul.mubr.bf16.gmra.mrb[0].mxu0 %v3534
    %v3570 = vpop.f32.mrb[0].mxu0
    %v3571 = vadd.f32 0.0, %v3570
    %v3572 = vpop.f32.mrb[0].mxu0
    %v3573 = vpop.f32.mrb[0].mxu0
    %v3574 = vpop.f32.mrb[0].mxu0
    %3575 = vdwg.mxu0
    %v3576 = vsel %vm2760, %v3571, 0.0
    %v3577 = vrot.slane %v3576, 4
    %v3578 = vadd.f32 %v3576, %v3577
    %v3579 = vrot.slane %v3578, 2
    %v3580 = vadd.f32 %v3578, %v3579
    %v3581 = vrot.slane %v3580, 1
    %v3582 = vadd.f32 %v3580, %v3581
    %v3583 = vmul.f32 %v3582, 0.03125
    %v3584 = vadd.f32 %v3583, 1e-05
    %v3585 = vrsqrt.pop %v3584
    %v3586 = vpack.c.bf16 %v3585, %v3585
    %v3588 = vsel %vm2780, %v3586, 0
    %3590 = vmatprep.subr.bf16.mxu0 %v3475
    %3591 = vmatpush1.bf16.msra.mxu0 %v3474
    %3592 = vmatprep.subr.bf16.mxu0 0
    %3593 = vmatpush1.bf16.msra.mxu0 0
    %3594 = vmatprep.subr.bf16.mxu0 0
    %3595 = vmatpush1.bf16.msra.mxu0 0
    %3596 = vmatprep.subr.bf16.mxu0 0
    %3597 = vmatpush1.bf16.msra.mxu0 0
    %3598 = vmatprep.subr.bf16.mxu0 0
    %3599 = vmatpush1.bf16.msra.mxu0 0
    %3600 = vmatprep.subr.bf16.mxu0 0
    %3601 = vmatpush1.bf16.msra.mxu0 0
    %3602 = vmatprep.subr.bf16.mxu0 0
    %3603 = vmatpush1.bf16.msra.mxu0 0
    %3604 = vmatprep.subr.bf16.mxu0 0
    %3605 = vmatpush1.bf16.msra.mxu0 0
    %3606 = vmatprep.subr.bf16.mxu0 0
    %3607 = vmatpush1.bf16.msra.mxu0 0
    %3608 = vmatprep.subr.bf16.mxu0 0
    %3609 = vmatpush1.bf16.msra.mxu0 0
    %3610 = vmatprep.subr.bf16.mxu0 0
    %3611 = vmatpush1.bf16.msra.mxu0 0
    %3612 = vmatprep.subr.bf16.mxu0 0
    %3613 = vmatpush1.bf16.msra.mxu0 0
    %3614 = vmatprep.subr.bf16.mxu0 0
    %3615 = vmatpush1.bf16.msra.mxu0 0
    %3616 = vmatprep.subr.bf16.mxu0 0
    %3617 = vmatpush1.bf16.msra.mxu0 0
    %3618 = vmatprep.subr.bf16.mxu0 0
    %3619 = vmatpush1.bf16.msra.mxu0 0
    %3620 = vmatprep.subr.bf16.mxu0 0
    %3621 = vmatpush1.bf16.msra.mxu0 0
    %3622 = vmatprep.mubr.bf16.mxu0 0
    %3623 = vmatmul.mubr.bf16.gmra.mrb[0].mxu0 %v3588
    %v3624 = vpop.f32.mrb[0].mxu0
    %v3625 = vadd.f32 0.0, %v3624
    %v3626 = vpop.f32.mrb[0].mxu0
    %v3627 = vadd.f32 0.0, %v3626
    %v3628 = vpop.f32.mrb[0].mxu0
    %v3629 = vpop.f32.mrb[0].mxu0
    %3630 = vdwg.mxu0
    %v3631 = vlaneseq
    %v3632 = vshrl.u32 %v3631, 7
    %v3633 = vsub.s32 0, %v3632
    %v3634 = vrot.slane %v3625, %v3633
    %v3635 = vlaneseq
    %v3636 = vshrl.u32 %v3635, 7
    %v3637 = vsub.s32 0, %v3636
    %v3638 = vrot.slane %v3627, %v3637
    %v3639 = vmul.f32 %v3530, %v3634
    %v3640 = vmul.f32 %v3531, %v3638
    %v3642 = vlaneseq
    %v3643 = vshrl.u32 %v3642, 7
    %v3644 = vsub.s32 0, %v3643
    %v3645 = vrot.slane %v3319, %v3644
    %v3646 = vlaneseq
    %v3647 = vshrl.u32 %v3646, 7
    %v3648 = vsub.s32 1, %v3647
    %v3649 = vrot.slane %v3319, %v3648
    %v3652 = vmul.f32 %v3639, %v3645
    %v3653 = vmul.f32 %v3640, %v3649
    %v3655 = vlaneseq
    %v3656 = vshrl.u32 %v3655, 7
    %v3657 = vsub.s32 0, %v3656
    %v3658 = vrot.slane %v3320, %v3657
    %v3659 = vlaneseq
    %v3660 = vshrl.u32 %v3659, 7
    %v3661 = vsub.s32 1, %v3660
    %v3662 = vrot.slane %v3320, %v3661
    %v3665 = vadd.f32 %v3652, %v3658
    %v3666 = vadd.f32 %v3653, %v3662
    %v3667 = vmax.f32 %v3665, 0.0
    %v3668 = vmax.f32 %v3666, 0.0
    %v3669 = vpack.c.bf16 %v3667, %v3667
    %v3670 = vpack.c.bf16 %v3668, %v3668
    %v3671 = vld [vmem:[#allocation14] sm:$0xff]
    %v3672 = vld [vmem:[#allocation14 + $0x8] sm:$0xff]
    %v3673 = vld [vmem:[#allocation14 + $0x10] sm:$0xff]
    %v3674 = vld [vmem:[#allocation14 + $0x18] sm:$0xff]
    %v3675 = vld [vmem:[#allocation14 + $0x20] sm:$0xff]
    %v3676 = vld [vmem:[#allocation14 + $0x28] sm:$0xff]
    %v3677 = vld [vmem:[#allocation14 + $0x30] sm:$0xff]
    %v3678 = vld [vmem:[#allocation14 + $0x38] sm:$0xff]
    %v3679 = vld [vmem:[#allocation14 + $0x40] sm:$0xff]
    %v3680 = vld [vmem:[#allocation14 + $0x48] sm:$0xff]
    %v3681 = vld [vmem:[#allocation14 + $0x50] sm:$0xff]
    %v3682 = vld [vmem:[#allocation14 + $0x58] sm:$0xff]
    %v3683 = vld [vmem:[#allocation14 + $0x60] sm:$0xff]
    %v3684 = vld [vmem:[#allocation14 + $0x68] sm:$0xff]
    %v3685 = vld [vmem:[#allocation14 + $0x70] sm:$0xff]
    %v3686 = vld [vmem:[#allocation14 + $0x78] sm:$0xff]
    %v3687 = vld [vmem:[#allocation14 + $0x80] sm:$0xff]
    %v3688 = vld [vmem:[#allocation14 + $0x88] sm:$0xff]
    %v3689 = vld [vmem:[#allocation14 + $0x90] sm:$0xff]
    %v3690 = vld [vmem:[#allocation14 + $0x98] sm:$0xff]
    %v3691 = vld [vmem:[#allocation14 + $0xa0] sm:$0xff]
    %v3692 = vld [vmem:[#allocation14 + $0xa8] sm:$0xff]
    %v3693 = vld [vmem:[#allocation14 + $0xb0] sm:$0xff]
    %v3694 = vld [vmem:[#allocation14 + $0xb8] sm:$0xff]
    %v3695 = vld [vmem:[#allocation14 + $0xc0] sm:$0xff]
    %v3696 = vld [vmem:[#allocation14 + $0xc8] sm:$0xff]
    %v3697 = vld [vmem:[#allocation14 + $0xd0] sm:$0xff]
    %v3698 = vld [vmem:[#allocation14 + $0xd8] sm:$0xff]
    %v3699 = vld [vmem:[#allocation14 + $0xe0] sm:$0xff]
    %v3700 = vld [vmem:[#allocation14 + $0xe8] sm:$0xff]
    %v3701 = vld [vmem:[#allocation14 + $0xf0] sm:$0xff]
    %v3702 = vld [vmem:[#allocation14 + $0xf8] sm:$0xff]
    %v3703 = vld [vmem:[#allocation14 + $0x100] sm:$0xff]
    %v3704 = vld [vmem:[#allocation14 + $0x108] sm:$0xff]
    %v3705 = vld [vmem:[#allocation14 + $0x110] sm:$0xff]
    %v3706 = vld [vmem:[#allocation14 + $0x118] sm:$0xff]
    %v3707 = vld [vmem:[#allocation14 + $0x120] sm:$0xff]
    %v3708 = vld [vmem:[#allocation14 + $0x128] sm:$0xff]
    %v3709 = vld [vmem:[#allocation14 + $0x130] sm:$0xff]
    %v3710 = vld [vmem:[#allocation14 + $0x138] sm:$0xff]
    %v3711 = vld [vmem:[#allocation14 + $0x140] sm:$0xff]
    %v3712 = vld [vmem:[#allocation14 + $0x148] sm:$0xff]
    %v3713 = vld [vmem:[#allocation14 + $0x150] sm:$0xff]
    %v3714 = vld [vmem:[#allocation14 + $0x158] sm:$0xff]
    %v3715 = vld [vmem:[#allocation14 + $0x160] sm:$0xff]
    %v3716 = vld [vmem:[#allocation14 + $0x168] sm:$0xff]
    %v3717 = vld [vmem:[#allocation14 + $0x170] sm:$0xff]
    %v3718 = vld [vmem:[#allocation14 + $0x178] sm:$0xff]
    %v3719 = vld [vmem:[#allocation14 + $0x180] sm:$0xff]
    %v3720 = vld [vmem:[#allocation14 + $0x188] sm:$0xff]
    %v3721 = vld [vmem:[#allocation14 + $0x190] sm:$0xff]
    %v3722 = vld [vmem:[#allocation14 + $0x198] sm:$0xff]
    %v3723 = vld [vmem:[#allocation14 + $0x1a0] sm:$0xff]
    %v3724 = vld [vmem:[#allocation14 + $0x1a8] sm:$0xff]
    %v3725 = vld [vmem:[#allocation14 + $0x1b0] sm:$0xff]
    %v3726 = vld [vmem:[#allocation14 + $0x1b8] sm:$0xff]
    %v3727 = vld [vmem:[#allocation14 + $0x1c0] sm:$0xff]
    %v3728 = vld [vmem:[#allocation14 + $0x1c8] sm:$0xff]
    %v3729 = vld [vmem:[#allocation14 + $0x1d0] sm:$0xff]
    %v3730 = vld [vmem:[#allocation14 + $0x1d8] sm:$0xff]
    %v3731 = vld [vmem:[#allocation14 + $0x1e0] sm:$0xff]
    %v3732 = vld [vmem:[#allocation14 + $0x1e8] sm:$0xff]
    %v3733 = vld [vmem:[#allocation14 + $0x1f0] sm:$0xff]
    %v3734 = vld [vmem:[#allocation14 + $0x1f8] sm:$0xff]
    %v3799 = vunpack.c.l.b16 %v3671
    %v3800 = vunpack.c.h.b16 %v3671
    %v3801 = vunpack.c.l.b16 %v3672
    %v3802 = vunpack.c.h.b16 %v3672
    %v3803 = vunpack.c.l.b16 %v3673
    %v3804 = vunpack.c.h.b16 %v3673
    %v3805 = vunpack.c.l.b16 %v3674
    %v3806 = vunpack.c.h.b16 %v3674
    %v3807 = vunpack.c.l.b16 %v3675
    %v3808 = vunpack.c.h.b16 %v3675
    %v3809 = vunpack.c.l.b16 %v3676
    %v3810 = vunpack.c.h.b16 %v3676
    %v3811 = vunpack.c.l.b16 %v3677
    %v3812 = vunpack.c.h.b16 %v3677
    %v3813 = vunpack.c.l.b16 %v3678
    %v3814 = vunpack.c.h.b16 %v3678
    %v3815 = vunpack.c.l.b16 %v3679
    %v3816 = vunpack.c.h.b16 %v3679
    %v3817 = vunpack.c.l.b16 %v3680
    %v3818 = vunpack.c.h.b16 %v3680
    %v3819 = vunpack.c.l.b16 %v3681
    %v3820 = vunpack.c.h.b16 %v3681
    %v3821 = vunpack.c.l.b16 %v3682
    %v3822 = vunpack.c.h.b16 %v3682
    %v3823 = vunpack.c.l.b16 %v3683
    %v3824 = vunpack.c.h.b16 %v3683
    %v3825 = vunpack.c.l.b16 %v3684
    %v3826 = vunpack.c.h.b16 %v3684
    %v3827 = vunpack.c.l.b16 %v3685
    %v3828 = vunpack.c.h.b16 %v3685
    %v3829 = vunpack.c.l.b16 %v3686
    %v3830 = vunpack.c.h.b16 %v3686
    %v3831 = vunpack.c.l.b16 %v3687
    %v3832 = vunpack.c.h.b16 %v3687
    %v3833 = vunpack.c.l.b16 %v3688
    %v3834 = vunpack.c.h.b16 %v3688
    %v3835 = vunpack.c.l.b16 %v3689
    %v3836 = vunpack.c.h.b16 %v3689
    %v3837 = vunpack.c.l.b16 %v3690
    %v3838 = vunpack.c.h.b16 %v3690
    %v3839 = vunpack.c.l.b16 %v3691
    %v3840 = vunpack.c.h.b16 %v3691
    %v3841 = vunpack.c.l.b16 %v3692
    %v3842 = vunpack.c.h.b16 %v3692
    %v3843 = vunpack.c.l.b16 %v3693
    %v3844 = vunpack.c.h.b16 %v3693
    %v3845 = vunpack.c.l.b16 %v3694
    %v3846 = vunpack.c.h.b16 %v3694
    %v3847 = vunpack.c.l.b16 %v3695
    %v3848 = vunpack.c.h.b16 %v3695
    %v3849 = vunpack.c.l.b16 %v3696
    %v3850 = vunpack.c.h.b16 %v3696
    %v3851 = vunpack.c.l.b16 %v3697
    %v3852 = vunpack.c.h.b16 %v3697
    %v3853 = vunpack.c.l.b16 %v3698
    %v3854 = vunpack.c.h.b16 %v3698
    %v3855 = vunpack.c.l.b16 %v3699
    %v3856 = vunpack.c.h.b16 %v3699
    %v3857 = vunpack.c.l.b16 %v3700
    %v3858 = vunpack.c.h.b16 %v3700
    %v3859 = vunpack.c.l.b16 %v3701
    %v3860 = vunpack.c.h.b16 %v3701
    %v3861 = vunpack.c.l.b16 %v3702
    %v3862 = vunpack.c.h.b16 %v3702
    %v3863 = vunpack.c.l.b16 %v3703
    %v3864 = vunpack.c.h.b16 %v3703
    %v3865 = vunpack.c.l.b16 %v3704
    %v3866 = vunpack.c.h.b16 %v3704
    %v3867 = vunpack.c.l.b16 %v3705
    %v3868 = vunpack.c.h.b16 %v3705
    %v3869 = vunpack.c.l.b16 %v3706
    %v3870 = vunpack.c.h.b16 %v3706
    %v3871 = vunpack.c.l.b16 %v3707
    %v3872 = vunpack.c.h.b16 %v3707
    %v3873 = vunpack.c.l.b16 %v3708
    %v3874 = vunpack.c.h.b16 %v3708
    %v3875 = vunpack.c.l.b16 %v3709
    %v3876 = vunpack.c.h.b16 %v3709
    %v3877 = vunpack.c.l.b16 %v3710
    %v3878 = vunpack.c.h.b16 %v3710
    %v3879 = vunpack.c.l.b16 %v3711
    %v3880 = vunpack.c.h.b16 %v3711
    %v3881 = vunpack.c.l.b16 %v3712
    %v3882 = vunpack.c.h.b16 %v3712
    %v3883 = vunpack.c.l.b16 %v3713
    %v3884 = vunpack.c.h.b16 %v3713
    %v3885 = vunpack.c.l.b16 %v3714
    %v3886 = vunpack.c.h.b16 %v3714
    %v3887 = vunpack.c.l.b16 %v3715
    %v3888 = vunpack.c.h.b16 %v3715
    %v3889 = vunpack.c.l.b16 %v3716
    %v3890 = vunpack.c.h.b16 %v3716
    %v3891 = vunpack.c.l.b16 %v3717
    %v3892 = vunpack.c.h.b16 %v3717
    %v3893 = vunpack.c.l.b16 %v3718
    %v3894 = vunpack.c.h.b16 %v3718
    %v3895 = vunpack.c.l.b16 %v3719
    %v3896 = vunpack.c.h.b16 %v3719
    %v3897 = vunpack.c.l.b16 %v3720
    %v3898 = vunpack.c.h.b16 %v3720
    %v3899 = vunpack.c.l.b16 %v3721
    %v3900 = vunpack.c.h.b16 %v3721
    %v3901 = vunpack.c.l.b16 %v3722
    %v3902 = vunpack.c.h.b16 %v3722
    %v3903 = vunpack.c.l.b16 %v3723
    %v3904 = vunpack.c.h.b16 %v3723
    %v3905 = vunpack.c.l.b16 %v3724
    %v3906 = vunpack.c.h.b16 %v3724
    %v3907 = vunpack.c.l.b16 %v3725
    %v3908 = vunpack.c.h.b16 %v3725
    %v3909 = vunpack.c.l.b16 %v3726
    %v3910 = vunpack.c.h.b16 %v3726
    %v3911 = vunpack.c.l.b16 %v3727
    %v3912 = vunpack.c.h.b16 %v3727
    %v3913 = vunpack.c.l.b16 %v3728
    %v3914 = vunpack.c.h.b16 %v3728
    %v3915 = vunpack.c.l.b16 %v3729
    %v3916 = vunpack.c.h.b16 %v3729
    %v3917 = vunpack.c.l.b16 %v3730
    %v3918 = vunpack.c.h.b16 %v3730
    %v3919 = vunpack.c.l.b16 %v3731
    %v3920 = vunpack.c.h.b16 %v3731
    %v3921 = vunpack.c.l.b16 %v3732
    %v3922 = vunpack.c.h.b16 %v3732
    %v3923 = vunpack.c.l.b16 %v3733
    %v3924 = vunpack.c.h.b16 %v3733
    %v3925 = vunpack.c.l.b16 %v3734
    %v3926 = vunpack.c.h.b16 %v3734
    %v3927 = vpack.c.b16 %v3803, %v3799
    %v3928 = vpack.c.b16 %v3804, %v3800
    %v3929 = vpack.c.b16 %v3805, %v3801
    %v3930 = vpack.c.b16 %v3806, %v3802
    %v3931 = vpack.c.b16 %v3811, %v3807
    %v3932 = vpack.c.b16 %v3812, %v3808
    %v3933 = vpack.c.b16 %v3813, %v3809
    %v3934 = vpack.c.b16 %v3814, %v3810
    %v3935 = vpack.c.b16 %v3819, %v3815
    %v3936 = vpack.c.b16 %v3820, %v3816
    %v3937 = vpack.c.b16 %v3821, %v3817
    %v3938 = vpack.c.b16 %v3822, %v3818
    %v3939 = vpack.c.b16 %v3827, %v3823
    %v3940 = vpack.c.b16 %v3828, %v3824
    %v3941 = vpack.c.b16 %v3829, %v3825
    %v3942 = vpack.c.b16 %v3830, %v3826
    %v3943 = vpack.c.b16 %v3835, %v3831
    %v3944 = vpack.c.b16 %v3836, %v3832
    %v3945 = vpack.c.b16 %v3837, %v3833
    %v3946 = vpack.c.b16 %v3838, %v3834
    %v3947 = vpack.c.b16 %v3843, %v3839
    %v3948 = vpack.c.b16 %v3844, %v3840
    %v3949 = vpack.c.b16 %v3845, %v3841
    %v3950 = vpack.c.b16 %v3846, %v3842
    %v3951 = vpack.c.b16 %v3851, %v3847
    %v3952 = vpack.c.b16 %v3852, %v3848
    %v3953 = vpack.c.b16 %v3853, %v3849
    %v3954 = vpack.c.b16 %v3854, %v3850
    %v3955 = vpack.c.b16 %v3859, %v3855
    %v3956 = vpack.c.b16 %v3860, %v3856
    %v3957 = vpack.c.b16 %v3861, %v3857
    %v3958 = vpack.c.b16 %v3862, %v3858
    %v3959 = vpack.c.b16 %v3867, %v3863
    %v3960 = vpack.c.b16 %v3868, %v3864
    %v3961 = vpack.c.b16 %v3869, %v3865
    %v3962 = vpack.c.b16 %v3870, %v3866
    %v3963 = vpack.c.b16 %v3875, %v3871
    %v3964 = vpack.c.b16 %v3876, %v3872
    %v3965 = vpack.c.b16 %v3877, %v3873
    %v3966 = vpack.c.b16 %v3878, %v3874
    %v3967 = vpack.c.b16 %v3883, %v3879
    %v3968 = vpack.c.b16 %v3884, %v3880
    %v3969 = vpack.c.b16 %v3885, %v3881
    %v3970 = vpack.c.b16 %v3886, %v3882
    %v3971 = vpack.c.b16 %v3891, %v3887
    %v3972 = vpack.c.b16 %v3892, %v3888
    %v3973 = vpack.c.b16 %v3893, %v3889
    %v3974 = vpack.c.b16 %v3894, %v3890
    %v3975 = vpack.c.b16 %v3899, %v3895
    %v3976 = vpack.c.b16 %v3900, %v3896
    %v3977 = vpack.c.b16 %v3901, %v3897
    %v3978 = vpack.c.b16 %v3902, %v3898
    %v3979 = vpack.c.b16 %v3907, %v3903
    %v3980 = vpack.c.b16 %v3908, %v3904
    %v3981 = vpack.c.b16 %v3909, %v3905
    %v3982 = vpack.c.b16 %v3910, %v3906
    %v3983 = vpack.c.b16 %v3915, %v3911
    %v3984 = vpack.c.b16 %v3916, %v3912
    %v3985 = vpack.c.b16 %v3917, %v3913
    %v3986 = vpack.c.b16 %v3918, %v3914
    %v3987 = vpack.c.b16 %v3923, %v3919
    %v3988 = vpack.c.b16 %v3924, %v3920
    %v3989 = vpack.c.b16 %v3925, %v3921
    %v3990 = vpack.c.b16 %v3926, %v3922
    %4055 = vmatprep.subr.bf16.mxu0 %v3928
    %4056 = vmatpush1.bf16.msra.mxu0 %v3927
    %4057 = vmatprep.subr.bf16.mxu0 %v3932
    %4058 = vmatpush1.bf16.msra.mxu0 %v3931
    %4059 = vmatprep.subr.bf16.mxu0 %v3936
    %4060 = vmatpush1.bf16.msra.mxu0 %v3935
    %4061 = vmatprep.subr.bf16.mxu0 %v3940
    %4062 = vmatpush1.bf16.msra.mxu0 %v3939
    %4063 = vmatprep.subr.bf16.mxu0 %v3944
    %4064 = vmatpush1.bf16.msra.mxu0 %v3943
    %4065 = vmatprep.subr.bf16.mxu0 %v3948
    %4066 = vmatpush1.bf16.msra.mxu0 %v3947
    %4067 = vmatprep.subr.bf16.mxu0 %v3952
    %4068 = vmatpush1.bf16.msra.mxu0 %v3951
    %4069 = vmatprep.subr.bf16.mxu0 %v3956
    %4070 = vmatpush1.bf16.msra.mxu0 %v3955
    %4071 = vmatprep.subr.bf16.mxu0 %v3960
    %4072 = vmatpush1.bf16.msra.mxu0 %v3959
    %4073 = vmatprep.subr.bf16.mxu0 %v3964
    %4074 = vmatpush1.bf16.msra.mxu0 %v3963
    %4075 = vmatprep.subr.bf16.mxu0 %v3968
    %4076 = vmatpush1.bf16.msra.mxu0 %v3967
    %4077 = vmatprep.subr.bf16.mxu0 %v3972
    %4078 = vmatpush1.bf16.msra.mxu0 %v3971
    %4079 = vmatprep.subr.bf16.mxu0 %v3976
    %4080 = vmatpush1.bf16.msra.mxu0 %v3975
    %4081 = vmatprep.subr.bf16.mxu0 %v3980
    %4082 = vmatpush1.bf16.msra.mxu0 %v3979
    %4083 = vmatprep.subr.bf16.mxu0 %v3984
    %4084 = vmatpush1.bf16.msra.mxu0 %v3983
    %4085 = vmatprep.subr.bf16.mxu0 %v3988
    %4086 = vmatpush1.bf16.msra.mxu0 %v3987
    %4087 = vmatprep.mubr.bf16.mxu0 %v3670
    %4088 = vmatmul.mubr.bf16.gmra.mrb[0].mxu0 %v3669
    %v4089 = vpop.f32.mrb[0].mxu0
    %v4090 = vadd.f32 0.0, %v4089
    %v4091 = vpop.f32.mrb[0].mxu0
    %v4092 = vadd.f32 0.0, %v4091
    %v4093 = vpop.f32.mrb[0].mxu0
    %v4094 = vpop.f32.mrb[0].mxu0
    %4095 = vdwg.mxu0
    %4096 = vmatprep.subr.bf16.mxu0 %v3930
    %4097 = vmatpush1.bf16.msra.mxu0 %v3929
    %4098 = vmatprep.subr.bf16.mxu0 %v3934
    %4099 = vmatpush1.bf16.msra.mxu0 %v3933
    %4100 = vmatprep.subr.bf16.mxu0 %v3938
    %4101 = vmatpush1.bf16.msra.mxu0 %v3937
    %4102 = vmatprep.subr.bf16.mxu0 %v3942
    %4103 = vmatpush1.bf16.msra.mxu0 %v3941
    %4104 = vmatprep.subr.bf16.mxu0 %v3946
    %4105 = vmatpush1.bf16.msra.mxu0 %v3945
    %4106 = vmatprep.subr.bf16.mxu0 %v3950
    %4107 = vmatpush1.bf16.msra.mxu0 %v3949
    %4108 = vmatprep.subr.bf16.mxu0 %v3954
    %4109 = vmatpush1.bf16.msra.mxu0 %v3953
    %4110 = vmatprep.subr.bf16.mxu0 %v3958
    %4111 = vmatpush1.bf16.msra.mxu0 %v3957
    %4112 = vmatprep.subr.bf16.mxu0 %v3962
    %4113 = vmatpush1.bf16.msra.mxu0 %v3961
    %4114 = vmatprep.subr.bf16.mxu0 %v3966
    %4115 = vmatpush1.bf16.msra.mxu0 %v3965
    %4116 = vmatprep.subr.bf16.mxu0 %v3970
    %4117 = vmatpush1.bf16.msra.mxu0 %v3969
    %4118 = vmatprep.subr.bf16.mxu0 %v3974
    %4119 = vmatpush1.bf16.msra.mxu0 %v3973
    %4120 = vmatprep.subr.bf16.mxu0 %v3978
    %4121 = vmatpush1.bf16.msra.mxu0 %v3977
    %4122 = vmatprep.subr.bf16.mxu0 %v3982
    %4123 = vmatpush1.bf16.msra.mxu0 %v3981
    %4124 = vmatprep.subr.bf16.mxu0 %v3986
    %4125 = vmatpush1.bf16.msra.mxu0 %v3985
    %4126 = vmatprep.subr.bf16.mxu0 %v3990
    %4127 = vmatpush1.bf16.msra.mxu0 %v3989
    %4128 = vmatprep.mubr.bf16.mxu0 %v3670
    %4129 = vmatmul.mubr.bf16.gmra.mrb[0].mxu0 %v3669
    %v4130 = vpop.f32.mrb[0].mxu0
    %v4131 = vadd.f32 0.0, %v4130
    %v4132 = vpop.f32.mrb[0].mxu0
    %v4133 = vadd.f32 0.0, %v4132
    %v4134 = vpop.f32.mrb[0].mxu0
    %v4135 = vpop.f32.mrb[0].mxu0
    %4136 = vdwg.mxu0
    %v4137 = vld [vmem:[%s14] sm:$0xf]
    %v4138 = vld [vmem:[%s14 + $0x4] sm:$0xf]
    %v4139 = vld [vmem:[%s14 + $0x8] sm:$0xf]
    %v4140 = vld [vmem:[%s14 + $0xc] sm:$0xf]
    %v4141 = vld [vmem:[%s14 + $0x10] sm:$0xf]
    %v4142 = vld [vmem:[%s14 + $0x14] sm:$0xf]
    %v4143 = vld [vmem:[%s14 + $0x18] sm:$0xf]
    %v4144 = vld [vmem:[%s14 + $0x1c] sm:$0xf]
    %v4145 = vld [vmem:[%s14 + $0x20] sm:$0xf]
    %v4146 = vld [vmem:[%s14 + $0x24] sm:$0xf]
    %v4147 = vld [vmem:[%s14 + $0x28] sm:$0xf]
    %v4148 = vld [vmem:[%s14 + $0x2c] sm:$0xf]
    %v4149 = vld [vmem:[%s14 + $0x30] sm:$0xf]
    %v4150 = vld [vmem:[%s14 + $0x34] sm:$0xf]
    %v4151 = vld [vmem:[%s14 + $0x38] sm:$0xf]
    %v4152 = vld [vmem:[%s14 + $0x3c] sm:$0xf]
    %v4153 = vld [vmem:[%s14 + $0x40] sm:$0xf]
    %v4154 = vld [vmem:[%s14 + $0x44] sm:$0xf]
    %v4155 = vld [vmem:[%s14 + $0x48] sm:$0xf]
    %v4156 = vld [vmem:[%s14 + $0x4c] sm:$0xf]
    %v4157 = vld [vmem:[%s14 + $0x50] sm:$0xf]
    %v4158 = vld [vmem:[%s14 + $0x54] sm:$0xf]
    %v4159 = vld [vmem:[%s14 + $0x58] sm:$0xf]
    %v4160 = vld [vmem:[%s14 + $0x5c] sm:$0xf]
    %v4161 = vld [vmem:[%s14 + $0x60] sm:$0xf]
    %v4162 = vld [vmem:[%s14 + $0x64] sm:$0xf]
    %v4163 = vld [vmem:[%s14 + $0x68] sm:$0xf]
    %v4164 = vld [vmem:[%s14 + $0x6c] sm:$0xf]
    %v4165 = vld [vmem:[%s14 + $0x70] sm:$0xf]
    %v4166 = vld [vmem:[%s14 + $0x74] sm:$0xf]
    %v4167 = vld [vmem:[%s14 + $0x78] sm:$0xf]
    %v4168 = vld [vmem:[%s14 + $0x7c] sm:$0xf]
    %v4169 = vld [vmem:[%s14 + $0x80] sm:$0xf]
    %v4170 = vld [vmem:[%s14 + $0x84] sm:$0xf]
    %v4171 = vld [vmem:[%s14 + $0x88] sm:$0xf]
    %v4172 = vld [vmem:[%s14 + $0x8c] sm:$0xf]
    %v4173 = vld [vmem:[%s14 + $0x90] sm:$0xf]
    %v4174 = vld [vmem:[%s14 + $0x94] sm:$0xf]
    %v4175 = vld [vmem:[%s14 + $0x98] sm:$0xf]
    %v4176 = vld [vmem:[%s14 + $0x9c] sm:$0xf]
    %v4177 = vld [vmem:[%s14 + $0xa0] sm:$0xf]
    %v4178 = vld [vmem:[%s14 + $0xa4] sm:$0xf]
    %v4179 = vld [vmem:[%s14 + $0xa8] sm:$0xf]
    %v4180 = vld [vmem:[%s14 + $0xac] sm:$0xf]
    %v4181 = vld [vmem:[%s14 + $0xb0] sm:$0xf]
    %v4182 = vld [vmem:[%s14 + $0xb4] sm:$0xf]
    %v4183 = vld [vmem:[%s14 + $0xb8] sm:$0xf]
    %v4184 = vld [vmem:[%s14 + $0xbc] sm:$0xf]
    %v4185 = vld [vmem:[%s14 + $0xc0] sm:$0xf]
    %v4186 = vld [vmem:[%s14 + $0xc4] sm:$0xf]
    %v4187 = vld [vmem:[%s14 + $0xc8] sm:$0xf]
    %v4188 = vld [vmem:[%s14 + $0xcc] sm:$0xf]
    %v4189 = vld [vmem:[%s14 + $0xd0] sm:$0xf]
    %v4190 = vld [vmem:[%s14 + $0xd4] sm:$0xf]
    %v4191 = vld [vmem:[%s14 + $0xd8] sm:$0xf]
    %v4192 = vld [vmem:[%s14 + $0xdc] sm:$0xf]
    %v4193 = vld [vmem:[%s14 + $0xe0] sm:$0xf]
    %v4194 = vld [vmem:[%s14 + $0xe4] sm:$0xf]
    %v4195 = vld [vmem:[%s14 + $0xe8] sm:$0xf]
    %v4196 = vld [vmem:[%s14 + $0xec] sm:$0xf]
    %v4197 = vld [vmem:[%s14 + $0xf0] sm:$0xf]
    %v4198 = vld [vmem:[%s14 + $0xf4] sm:$0xf]
    %v4199 = vld [vmem:[%s14 + $0xf8] sm:$0xf]
    %v4200 = vld [vmem:[%s14 + $0xfc] sm:$0xf]
    %v4201 = vld [vmem:[%s15] sm:$0xff]
    %v4202 = vld [vmem:[%s15 + $0x8] sm:$0xff]
    %v4203 = vld [vmem:[%s16] sm:$0xf]
    %v4204 = vld [vmem:[%s17] sm:$0xf]
    %v4205 = vpack.c.bf16 %v4090, %v4090
    %v4206 = vpack.c.bf16 %v4092, %v4092
    %v4207 = vpack.c.bf16 %v4131, %v4131
    %v4208 = vpack.c.bf16 %v4133, %v4133
    %v4273 = vunpack.c.l.b16 %v4137
    %v4274 = vunpack.c.l.b16 %v4138
    %v4275 = vunpack.c.l.b16 %v4139
    %v4276 = vunpack.c.l.b16 %v4140
    %v4277 = vunpack.c.l.b16 %v4141
    %v4278 = vunpack.c.l.b16 %v4142
    %v4279 = vunpack.c.l.b16 %v4143
    %v4280 = vunpack.c.l.b16 %v4144
    %v4281 = vunpack.c.l.b16 %v4145
    %v4282 = vunpack.c.l.b16 %v4146
    %v4283 = vunpack.c.l.b16 %v4147
    %v4284 = vunpack.c.l.b16 %v4148
    %v4285 = vunpack.c.l.b16 %v4149
    %v4286 = vunpack.c.l.b16 %v4150
    %v4287 = vunpack.c.l.b16 %v4151
    %v4288 = vunpack.c.l.b16 %v4152
    %v4289 = vunpack.c.l.b16 %v4153
    %v4290 = vunpack.c.l.b16 %v4154
    %v4291 = vunpack.c.l.b16 %v4155
    %v4292 = vunpack.c.l.b16 %v4156
    %v4293 = vunpack.c.l.b16 %v4157
    %v4294 = vunpack.c.l.b16 %v4158
    %v4295 = vunpack.c.l.b16 %v4159
    %v4296 = vunpack.c.l.b16 %v4160
    %v4297 = vunpack.c.l.b16 %v4161
    %v4298 = vunpack.c.l.b16 %v4162
    %v4299 = vunpack.c.l.b16 %v4163
    %v4300 = vunpack.c.l.b16 %v4164
    %v4301 = vunpack.c.l.b16 %v4165
    %v4302 = vunpack.c.l.b16 %v4166
    %v4303 = vunpack.c.l.b16 %v4167
    %v4304 = vunpack.c.l.b16 %v4168
    %v4305 = vunpack.c.l.b16 %v4169
    %v4306 = vunpack.c.l.b16 %v4170
    %v4307 = vunpack.c.l.b16 %v4171
    %v4308 = vunpack.c.l.b16 %v4172
    %v4309 = vunpack.c.l.b16 %v4173
    %v4310 = vunpack.c.l.b16 %v4174
    %v4311 = vunpack.c.l.b16 %v4175
    %v4312 = vunpack.c.l.b16 %v4176
    %v4313 = vunpack.c.l.b16 %v4177
    %v4314 = vunpack.c.l.b16 %v4178
    %v4315 = vunpack.c.l.b16 %v4179
    %v4316 = vunpack.c.l.b16 %v4180
    %v4317 = vunpack.c.l.b16 %v4181
    %v4318 = vunpack.c.l.b16 %v4182
    %v4319 = vunpack.c.l.b16 %v4183
    %v4320 = vunpack.c.l.b16 %v4184
    %v4321 = vunpack.c.l.b16 %v4185
    %v4322 = vunpack.c.l.b16 %v4186
    %v4323 = vunpack.c.l.b16 %v4187
    %v4324 = vunpack.c.l.b16 %v4188
    %v4325 = vunpack.c.l.b16 %v4189
    %v4326 = vunpack.c.l.b16 %v4190
    %v4327 = vunpack.c.l.b16 %v4191
    %v4328 = vunpack.c.l.b16 %v4192
    %v4329 = vunpack.c.l.b16 %v4193
    %v4330 = vunpack.c.l.b16 %v4194
    %v4331 = vunpack.c.l.b16 %v4195
    %v4332 = vunpack.c.l.b16 %v4196
    %v4333 = vunpack.c.l.b16 %v4197
    %v4334 = vunpack.c.l.b16 %v4198
    %v4335 = vunpack.c.l.b16 %v4199
    %v4336 = vunpack.c.l.b16 %v4200
    %v4337 = vpack.c.b16 %v4274, %v4273
    %v4338 = vpack.c.b16 %v4276, %v4275
    %v4339 = vpack.c.b16 %v4278, %v4277
    %v4340 = vpack.c.b16 %v4280, %v4279
    %v4341 = vpack.c.b16 %v4282, %v4281
    %v4342 = vpack.c.b16 %v4284, %v4283
    %v4343 = vpack.c.b16 %v4286, %v4285
    %v4344 = vpack.c.b16 %v4288, %v4287
    %v4345 = vpack.c.b16 %v4290, %v4289
    %v4346 = vpack.c.b16 %v4292, %v4291
    %v4347 = vpack.c.b16 %v4294, %v4293
    %v4348 = vpack.c.b16 %v4296, %v4295
    %v4349 = vpack.c.b16 %v4298, %v4297
    %v4350 = vpack.c.b16 %v4300, %v4299
    %v4351 = vpack.c.b16 %v4302, %v4301
    %v4352 = vpack.c.b16 %v4304, %v4303
    %v4353 = vpack.c.b16 %v4306, %v4305
    %v4354 = vpack.c.b16 %v4308, %v4307
    %v4355 = vpack.c.b16 %v4310, %v4309
    %v4356 = vpack.c.b16 %v4312, %v4311
    %v4357 = vpack.c.b16 %v4314, %v4313
    %v4358 = vpack.c.b16 %v4316, %v4315
    %v4359 = vpack.c.b16 %v4318, %v4317
    %v4360 = vpack.c.b16 %v4320, %v4319
    %v4361 = vpack.c.b16 %v4322, %v4321
    %v4362 = vpack.c.b16 %v4324, %v4323
    %v4363 = vpack.c.b16 %v4326, %v4325
    %v4364 = vpack.c.b16 %v4328, %v4327
    %v4365 = vpack.c.b16 %v4330, %v4329
    %v4366 = vpack.c.b16 %v4332, %v4331
    %v4367 = vpack.c.b16 %v4334, %v4333
    %v4368 = vpack.c.b16 %v4336, %v4335
    %4401 = vmatprep.subr.bf16.mxu0 0
    %4402 = vmatpush1.bf16.msra.mxu0 %v4337
    %4403 = vmatprep.subr.bf16.mxu0 0
    %4404 = vmatpush1.bf16.msra.mxu0 %v4338
    %4405 = vmatprep.subr.bf16.mxu0 0
    %4406 = vmatpush1.bf16.msra.mxu0 %v4339
    %4407 = vmatprep.subr.bf16.mxu0 0
    %4408 = vmatpush1.bf16.msra.mxu0 %v4340
    %4409 = vmatprep.subr.bf16.mxu0 0
    %4410 = vmatpush1.bf16.msra.mxu0 %v4341
    %4411 = vmatprep.subr.bf16.mxu0 0
    %4412 = vmatpush1.bf16.msra.mxu0 %v4342
    %4413 = vmatprep.subr.bf16.mxu0 0
    %4414 = vmatpush1.bf16.msra.mxu0 %v4343
    %4415 = vmatprep.subr.bf16.mxu0 0
    %4416 = vmatpush1.bf16.msra.mxu0 %v4344
    %4417 = vmatprep.subr.bf16.mxu0 0
    %4418 = vmatpush1.bf16.msra.mxu0 %v4345
    %4419 = vmatprep.subr.bf16.mxu0 0
    %4420 = vmatpush1.bf16.msra.mxu0 %v4346
    %4421 = vmatprep.subr.bf16.mxu0 0
    %4422 = vmatpush1.bf16.msra.mxu0 %v4347
    %4423 = vmatprep.subr.bf16.mxu0 0
    %4424 = vmatpush1.bf16.msra.mxu0 %v4348
    %4425 = vmatprep.subr.bf16.mxu0 0
    %4426 = vmatpush1.bf16.msra.mxu0 %v4349
    %4427 = vmatprep.subr.bf16.mxu0 0
    %4428 = vmatpush1.bf16.msra.mxu0 %v4350
    %4429 = vmatprep.subr.bf16.mxu0 0
    %4430 = vmatpush1.bf16.msra.mxu0 %v4351
    %4431 = vmatprep.subr.bf16.mxu0 0
    %4432 = vmatpush1.bf16.msra.mxu0 %v4352
    %4433 = vmatprep.mubr.bf16.mxu0 %v4206
    %4434 = vmatmul.mubr.bf16.gmra.mrb[0].mxu0 %v4205
    %v4435 = vpop.f32.mrb[0].mxu0
    %v4436 = vadd.f32 0.0, %v4435
    %v4437 = vpop.f32.mrb[0].mxu0
    %v4438 = vpop.f32.mrb[0].mxu0
    %v4439 = vpop.f32.mrb[0].mxu0
    %4440 = vdwg.mxu0
    %4441 = vmatprep.subr.bf16.mxu0 0
    %4442 = vmatpush1.bf16.msra.mxu0 %v4353
    %4443 = vmatprep.subr.bf16.mxu0 0
    %4444 = vmatpush1.bf16.msra.mxu0 %v4354
    %4445 = vmatprep.subr.bf16.mxu0 0
    %4446 = vmatpush1.bf16.msra.mxu0 %v4355
    %4447 = vmatprep.subr.bf16.mxu0 0
    %4448 = vmatpush1.bf16.msra.mxu0 %v4356
    %4449 = vmatprep.subr.bf16.mxu0 0
    %4450 = vmatpush1.bf16.msra.mxu0 %v4357
    %4451 = vmatprep.subr.bf16.mxu0 0
    %4452 = vmatpush1.bf16.msra.mxu0 %v4358
    %4453 = vmatprep.subr.bf16.mxu0 0
    %4454 = vmatpush1.bf16.msra.mxu0 %v4359
    %4455 = vmatprep.subr.bf16.mxu0 0
    %4456 = vmatpush1.bf16.msra.mxu0 %v4360
    %4457 = vmatprep.subr.bf16.mxu0 0
    %4458 = vmatpush1.bf16.msra.mxu0 %v4361
    %4459 = vmatprep.subr.bf16.mxu0 0
    %4460 = vmatpush1.bf16.msra.mxu0 %v4362
    %4461 = vmatprep.subr.bf16.mxu0 0
    %4462 = vmatpush1.bf16.msra.mxu0 %v4363
    %4463 = vmatprep.subr.bf16.mxu0 0
    %4464 = vmatpush1.bf16.msra.mxu0 %v4364
    %4465 = vmatprep.subr.bf16.mxu0 0
    %4466 = vmatpush1.bf16.msra.mxu0 %v4365
    %4467 = vmatprep.subr.bf16.mxu0 0
    %4468 = vmatpush1.bf16.msra.mxu0 %v4366
    %4469 = vmatprep.subr.bf16.mxu0 0
    %4470 = vmatpush1.bf16.msra.mxu0 %v4367
    %4471 = vmatprep.subr.bf16.mxu0 0
    %4472 = vmatpush1.bf16.msra.mxu0 %v4368
    %4473 = vmatprep.mubr.bf16.mxu0 %v4208
    %4474 = vmatmul.mubr.bf16.gmra.mrb[0].mxu0 %v4207
    %v4475 = vpop.f32.mrb[0].mxu0
    %v4476 = vadd.f32 %v4436, %v4475
    %v4477 = vpop.f32.mrb[0].mxu0
    %v4478 = vpop.f32.mrb[0].mxu0
    %v4479 = vpop.f32.mrb[0].mxu0
    %4480 = vdwg.mxu0
    %vm4481 = vcmask 58368
    %v4482 = vsel %vm4481, %v4476, 0.0
    %v4483 = vrot.slane %v4482, 4
    %v4484 = vadd.f32 %v4482, %v4483
    %v4485 = vrot.slane %v4484, 2
    %v4486 = vadd.f32 %v4484, %v4485
    %v4487 = vrot.slane %v4486, 1
    %v4488 = vadd.f32 %v4486, %v4487
    %v4489 = vmul.f32 %v4488, 0.0078125
    %v4490 = vpack.c.bf16 %v4489, %v4489
    %v4493 = vunpack.c.l.b16 %v4201
    %v4494 = vunpack.c.h.b16 %v4201
    %v4495 = vunpack.c.l.b16 %v4202
    %v4496 = vunpack.c.h.b16 %v4202
    %v4497 = vpack.c.b16 %v4493, %v4493
    %v4498 = vpack.c.b16 %v4494, %v4494
    %v4499 = vpack.c.b16 %v4495, %v4495
    %v4500 = vpack.c.b16 %v4496, %v4496
    %vm4501 = vcmask 64512
    %v4503 = vsel %vm4501, %v4490, 0
    %vm4505 = vcmask 1043456
    %v4507 = vsel %vm4505, %v4497, 0
    %v4510 = vsel %vm4505, %v4498, 0
    %v4513 = vsel %vm4505, %v4499, 0
    %v4516 = vsel %vm4505, %v4500, 0
    %4518 = vmatprep.subr.bf16.mxu0 %v4510
    %4519 = vmatpush1.bf16.msra.mxu0 %v4507
    %4520 = vmatprep.subr.bf16.mxu0 0
    %4521 = vmatpush1.bf16.msra.mxu0 0
    %4522 = vmatprep.subr.bf16.mxu0 0
    %4523 = vmatpush1.bf16.msra.mxu0 0
    %4524 = vmatprep.subr.bf16.mxu0 0
    %4525 = vmatpush1.bf16.msra.mxu0 0
    %4526 = vmatprep.subr.bf16.mxu0 0
    %4527 = vmatpush1.bf16.msra.mxu0 0
    %4528 = vmatprep.subr.bf16.mxu0 0
    %4529 = vmatpush1.bf16.msra.mxu0 0
    %4530 = vmatprep.subr.bf16.mxu0 0
    %4531 = vmatpush1.bf16.msra.mxu0 0
    %4532 = vmatprep.subr.bf16.mxu0 0
    %4533 = vmatpush1.bf16.msra.mxu0 0
    %4534 = vmatprep.subr.bf16.mxu0 0
    %4535 = vmatpush1.bf16.msra.mxu0 0
    %4536 = vmatprep.subr.bf16.mxu0 0
    %4537 = vmatpush1.bf16.msra.mxu0 0
    %4538 = vmatprep.subr.bf16.mxu0 0
    %4539 = vmatpush1.bf16.msra.mxu0 0
    %4540 = vmatprep.subr.bf16.mxu0 0
    %4541 = vmatpush1.bf16.msra.mxu0 0
    %4542 = vmatprep.subr.bf16.mxu0 0
    %4543 = vmatpush1.bf16.msra.mxu0 0
    %4544 = vmatprep.subr.bf16.mxu0 0
    %4545 = vmatpush1.bf16.msra.mxu0 0
    %4546 = vmatprep.subr.bf16.mxu0 0
    %4547 = vmatpush1.bf16.msra.mxu0 0
    %4548 = vmatprep.subr.bf16.mxu0 0
    %4549 = vmatpush1.bf16.msra.mxu0 0
    %4550 = vmatprep.mubr.bf16.mxu0 0
    %4551 = vmatmul.mubr.bf16.gmra.mrb[0].mxu0 %v4503
    %v4552 = vpop.f32.mrb[0].mxu0
    %v4553 = vadd.f32 0.0, %v4552
    %v4554 = vpop.f32.mrb[0].mxu0
    %v4555 = vadd.f32 0.0, %v4554
    %v4556 = vpop.f32.mrb[0].mxu0
    %v4557 = vpop.f32.mrb[0].mxu0
    %4558 = vdwg.mxu0
    %4559 = vmatprep.subr.bf16.mxu0 %v4516
    %4560 = vmatpush1.bf16.msra.mxu0 %v4513
    %4561 = vmatprep.subr.bf16.mxu0 0
    %4562 = vmatpush1.bf16.msra.mxu0 0
    %4563 = vmatprep.subr.bf16.mxu0 0
    %4564 = vmatpush1.bf16.msra.mxu0 0
    %4565 = vmatprep.subr.bf16.mxu0 0
    %4566 = vmatpush1.bf16.msra.mxu0 0
    %4567 = vmatprep.subr.bf16.mxu0 0
    %4568 = vmatpush1.bf16.msra.mxu0 0
    %4569 = vmatprep.subr.bf16.mxu0 0
    %4570 = vmatpush1.bf16.msra.mxu0 0
    %4571 = vmatprep.subr.bf16.mxu0 0
    %4572 = vmatpush1.bf16.msra.mxu0 0
    %4573 = vmatprep.subr.bf16.mxu0 0
    %4574 = vmatpush1.bf16.msra.mxu0 0
    %4575 = vmatprep.subr.bf16.mxu0 0
    %4576 = vmatpush1.bf16.msra.mxu0 0
    %4577 = vmatprep.subr.bf16.mxu0 0
    %4578 = vmatpush1.bf16.msra.mxu0 0
    %4579 = vmatprep.subr.bf16.mxu0 0
    %4580 = vmatpush1.bf16.msra.mxu0 0
    %4581 = vmatprep.subr.bf16.mxu0 0
    %4582 = vmatpush1.bf16.msra.mxu0 0
    %4583 = vmatprep.subr.bf16.mxu0 0
    %4584 = vmatpush1.bf16.msra.mxu0 0
    %4585 = vmatprep.subr.bf16.mxu0 0
    %4586 = vmatpush1.bf16.msra.mxu0 0
    %4587 = vmatprep.subr.bf16.mxu0 0
    %4588 = vmatpush1.bf16.msra.mxu0 0
    %4589 = vmatprep.subr.bf16.mxu0 0
    %4590 = vmatpush1.bf16.msra.mxu0 0
    %4591 = vmatprep.mubr.bf16.mxu0 0
    %4592 = vmatmul.mubr.bf16.gmra.mrb[0].mxu0 %v4503
    %v4593 = vpop.f32.mrb[0].mxu0
    %v4594 = vadd.f32 0.0, %v4593
    %v4595 = vpop.f32.mrb[0].mxu0
    %v4596 = vadd.f32 0.0, %v4595
    %v4597 = vpop.f32.mrb[0].mxu0
    %v4598 = vpop.f32.mrb[0].mxu0
    %4599 = vdwg.mxu0
    %v4600 = vlaneseq
    %v4601 = vshrl.u32 %v4600, 7
    %v4602 = vsub.s32 0, %v4601
    %v4603 = vrot.slane %v4553, %v4602
    %v4604 = vlaneseq
    %v4605 = vshrl.u32 %v4604, 7
    %v4606 = vsub.s32 0, %v4605
    %v4607 = vrot.slane %v4555, %v4606
    %v4608 = vlaneseq
    %v4609 = vshrl.u32 %v4608, 7
    %v4610 = vsub.s32 0, %v4609
    %v4611 = vrot.slane %v4594, %v4610
    %v4612 = vlaneseq
    %v4613 = vshrl.u32 %v4612, 7
    %v4614 = vsub.s32 0, %v4613
    %v4615 = vrot.slane %v4596, %v4614
    %v4616 = vsub.f32 %v4090, %v4603
    %v4617 = vsub.f32 %v4092, %v4607
    %v4618 = vsub.f32 %v4131, %v4611
    %v4619 = vsub.f32 %v4133, %v4615
    %v4620 = vmul.f32 %v4616, %v4616
    %v4621 = vmul.f32 %v4617, %v4617
    %v4622 = vmul.f32 %v4618, %v4618
    %v4623 = vmul.f32 %v4619, %v4619
    %v4624 = vpack.c.bf16 %v4620, %v4620
    %v4625 = vpack.c.bf16 %v4621, %v4621
    %v4626 = vpack.c.bf16 %v4622, %v4622
    %v4627 = vpack.c.bf16 %v4623, %v4623
    %4628 = vmatprep.subr.bf16.mxu0 0
    %4629 = vmatpush1.bf16.msra.mxu0 %v4337
    %4630 = vmatprep.subr.bf16.mxu0 0
    %4631 = vmatpush1.bf16.msra.mxu0 %v4338
    %4632 = vmatprep.subr.bf16.mxu0 0
    %4633 = vmatpush1.bf16.msra.mxu0 %v4339
    %4634 = vmatprep.subr.bf16.mxu0 0
    %4635 = vmatpush1.bf16.msra.mxu0 %v4340
    %4636 = vmatprep.subr.bf16.mxu0 0
    %4637 = vmatpush1.bf16.msra.mxu0 %v4341
    %4638 = vmatprep.subr.bf16.mxu0 0
    %4639 = vmatpush1.bf16.msra.mxu0 %v4342
    %4640 = vmatprep.subr.bf16.mxu0 0
    %4641 = vmatpush1.bf16.msra.mxu0 %v4343
    %4642 = vmatprep.subr.bf16.mxu0 0
    %4643 = vmatpush1.bf16.msra.mxu0 %v4344
    %4644 = vmatprep.subr.bf16.mxu0 0
    %4645 = vmatpush1.bf16.msra.mxu0 %v4345
    %4646 = vmatprep.subr.bf16.mxu0 0
    %4647 = vmatpush1.bf16.msra.mxu0 %v4346
    %4648 = vmatprep.subr.bf16.mxu0 0
    %4649 = vmatpush1.bf16.msra.mxu0 %v4347
    %4650 = vmatprep.subr.bf16.mxu0 0
    %4651 = vmatpush1.bf16.msra.mxu0 %v4348
    %4652 = vmatprep.subr.bf16.mxu0 0
    %4653 = vmatpush1.bf16.msra.mxu0 %v4349
    %4654 = vmatprep.subr.bf16.mxu0 0
    %4655 = vmatpush1.bf16.msra.mxu0 %v4350
    %4656 = vmatprep.subr.bf16.mxu0 0
    %4657 = vmatpush1.bf16.msra.mxu0 %v4351
    %4658 = vmatprep.subr.bf16.mxu0 0
    %4659 = vmatpush1.bf16.msra.mxu0 %v4352
    %4660 = vmatprep.mubr.bf16.mxu0 %v4625
    %4661 = vmatmul.mubr.bf16.gmra.mrb[0].mxu0 %v4624
    %v4662 = vpop.f32.mrb[0].mxu0
    %v4663 = vadd.f32 0.0, %v4662
    %v4664 = vpop.f32.mrb[0].mxu0
    %v4665 = vpop.f32.mrb[0].mxu0
    %v4666 = vpop.f32.mrb[0].mxu0
    %4667 = vdwg.mxu0
    %4668 = vmatprep.subr.bf16.mxu0 0
    %4669 = vmatpush1.bf16.msra.mxu0 %v4353
    %4670 = vmatprep.subr.bf16.mxu0 0
    %4671 = vmatpush1.bf16.msra.mxu0 %v4354
    %4672 = vmatprep.subr.bf16.mxu0 0
    %4673 = vmatpush1.bf16.msra.mxu0 %v4355
    %4674 = vmatprep.subr.bf16.mxu0 0
    %4675 = vmatpush1.bf16.msra.mxu0 %v4356
    %4676 = vmatprep.subr.bf16.mxu0 0
    %4677 = vmatpush1.bf16.msra.mxu0 %v4357
    %4678 = vmatprep.subr.bf16.mxu0 0
    %4679 = vmatpush1.bf16.msra.mxu0 %v4358
    %4680 = vmatprep.subr.bf16.mxu0 0
    %4681 = vmatpush1.bf16.msra.mxu0 %v4359
    %4682 = vmatprep.subr.bf16.mxu0 0
    %4683 = vmatpush1.bf16.msra.mxu0 %v4360
    %4684 = vmatprep.subr.bf16.mxu0 0
    %4685 = vmatpush1.bf16.msra.mxu0 %v4361
    %4686 = vmatprep.subr.bf16.mxu0 0
    %4687 = vmatpush1.bf16.msra.mxu0 %v4362
    %4688 = vmatprep.subr.bf16.mxu0 0
    %4689 = vmatpush1.bf16.msra.mxu0 %v4363
    %4690 = vmatprep.subr.bf16.mxu0 0
    %4691 = vmatpush1.bf16.msra.mxu0 %v4364
    %4692 = vmatprep.subr.bf16.mxu0 0
    %4693 = vmatpush1.bf16.msra.mxu0 %v4365
    %4694 = vmatprep.subr.bf16.mxu0 0
    %4695 = vmatpush1.bf16.msra.mxu0 %v4366
    %4696 = vmatprep.subr.bf16.mxu0 0
    %4697 = vmatpush1.bf16.msra.mxu0 %v4367
    %4698 = vmatprep.subr.bf16.mxu0 0
    %4699 = vmatpush1.bf16.msra.mxu0 %v4368
    %4700 = vmatprep.mubr.bf16.mxu0 %v4627
    %4701 = vmatmul.mubr.bf16.gmra.mrb[0].mxu0 %v4626
    %v4702 = vpop.f32.mrb[0].mxu0
    %v4703 = vadd.f32 %v4663, %v4702
    %v4704 = vpop.f32.mrb[0].mxu0
    %v4705 = vpop.f32.mrb[0].mxu0
    %v4706 = vpop.f32.mrb[0].mxu0
    %4707 = vdwg.mxu0
    %v4708 = vsel %vm4481, %v4703, 0.0
    %v4709 = vrot.slane %v4708, 4
    %v4710 = vadd.f32 %v4708, %v4709
    %v4711 = vrot.slane %v4710, 2
    %v4712 = vadd.f32 %v4710, %v4711
    %v4713 = vrot.slane %v4712, 1
    %v4714 = vadd.f32 %v4712, %v4713
    %v4715 = vmul.f32 %v4714, 0.0078125
    %v4716 = vadd.f32 %v4715, 1e-05
    %v4717 = vrsqrt.pop %v4716
    %v4718 = vpack.c.bf16 %v4717, %v4717
    %v4720 = vsel %vm4501, %v4718, 0
    %4722 = vmatprep.subr.bf16.mxu0 %v4510
    %4723 = vmatpush1.bf16.msra.mxu0 %v4507
    %4724 = vmatprep.subr.bf16.mxu0 0
    %4725 = vmatpush1.bf16.msra.mxu0 0
    %4726 = vmatprep.subr.bf16.mxu0 0
    %4727 = vmatpush1.bf16.msra.mxu0 0
    %4728 = vmatprep.subr.bf16.mxu0 0
    %4729 = vmatpush1.bf16.msra.mxu0 0
    %4730 = vmatprep.subr.bf16.mxu0 0
    %4731 = vmatpush1.bf16.msra.mxu0 0
    %4732 = vmatprep.subr.bf16.mxu0 0
    %4733 = vmatpush1.bf16.msra.mxu0 0
    %4734 = vmatprep.subr.bf16.mxu0 0
    %4735 = vmatpush1.bf16.msra.mxu0 0
    %4736 = vmatprep.subr.bf16.mxu0 0
    %4737 = vmatpush1.bf16.msra.mxu0 0
    %4738 = vmatprep.subr.bf16.mxu0 0
    %4739 = vmatpush1.bf16.msra.mxu0 0
    %4740 = vmatprep.subr.bf16.mxu0 0
    %4741 = vmatpush1.bf16.msra.mxu0 0
    %4742 = vmatprep.subr.bf16.mxu0 0
    %4743 = vmatpush1.bf16.msra.mxu0 0
    %4744 = vmatprep.subr.bf16.mxu0 0
    %4745 = vmatpush1.bf16.msra.mxu0 0
    %4746 = vmatprep.subr.bf16.mxu0 0
    %4747 = vmatpush1.bf16.msra.mxu0 0
    %4748 = vmatprep.subr.bf16.mxu0 0
    %4749 = vmatpush1.bf16.msra.mxu0 0
    %4750 = vmatprep.subr.bf16.mxu0 0
    %4751 = vmatpush1.bf16.msra.mxu0 0
    %4752 = vmatprep.subr.bf16.mxu0 0
    %4753 = vmatpush1.bf16.msra.mxu0 0
    %4754 = vmatprep.mubr.bf16.mxu0 0
    %4755 = vmatmul.mubr.bf16.gmra.mrb[0].mxu0 %v4720
    %v4756 = vpop.f32.mrb[0].mxu0
    %v4757 = vadd.f32 0.0, %v4756
    %v4758 = vpop.f32.mrb[0].mxu0
    %v4759 = vadd.f32 0.0, %v4758
    %v4760 = vpop.f32.mrb[0].mxu0
    %v4761 = vpop.f32.mrb[0].mxu0
    %4762 = vdwg.mxu0
    %4763 = vmatprep.subr.bf16.mxu0 %v4516
    %4764 = vmatpush1.bf16.msra.mxu0 %v4513
    %4765 = vmatprep.subr.bf16.mxu0 0
    %4766 = vmatpush1.bf16.msra.mxu0 0
    %4767 = vmatprep.subr.bf16.mxu0 0
    %4768 = vmatpush1.bf16.msra.mxu0 0
    %4769 = vmatprep.subr.bf16.mxu0 0
    %4770 = vmatpush1.bf16.msra.mxu0 0
    %4771 = vmatprep.subr.bf16.mxu0 0
    %4772 = vmatpush1.bf16.msra.mxu0 0
    %4773 = vmatprep.subr.bf16.mxu0 0
    %4774 = vmatpush1.bf16.msra.mxu0 0
    %4775 = vmatprep.subr.bf16.mxu0 0
    %4776 = vmatpush1.bf16.msra.mxu0 0
    %4777 = vmatprep.subr.bf16.mxu0 0
    %4778 = vmatpush1.bf16.msra.mxu0 0
    %4779 = vmatprep.subr.bf16.mxu0 0
    %4780 = vmatpush1.bf16.msra.mxu0 0
    %4781 = vmatprep.subr.bf16.mxu0 0
    %4782 = vmatpush1.bf16.msra.mxu0 0
    %4783 = vmatprep.subr.bf16.mxu0 0
    %4784 = vmatpush1.bf16.msra.mxu0 0
    %4785 = vmatprep.subr.bf16.mxu0 0
    %4786 = vmatpush1.bf16.msra.mxu0 0
    %4787 = vmatprep.subr.bf16.mxu0 0
    %4788 = vmatpush1.bf16.msra.mxu0 0
    %4789 = vmatprep.subr.bf16.mxu0 0
    %4790 = vmatpush1.bf16.msra.mxu0 0
    %4791 = vmatprep.subr.bf16.mxu0 0
    %4792 = vmatpush1.bf16.msra.mxu0 0
    %4793 = vmatprep.subr.bf16.mxu0 0
    %4794 = vmatpush1.bf16.msra.mxu0 0
    %4795 = vmatprep.mubr.bf16.mxu0 0
    %4796 = vmatmul.mubr.bf16.gmra.mrb[0].mxu0 %v4720
    %v4797 = vpop.f32.mrb[0].mxu0
    %v4798 = vadd.f32 0.0, %v4797
    %v4799 = vpop.f32.mrb[0].mxu0
    %v4800 = vadd.f32 0.0, %v4799
    %v4801 = vpop.f32.mrb[0].mxu0
    %v4802 = vpop.f32.mrb[0].mxu0
    %4803 = vdwg.mxu0
    %v4804 = vlaneseq
    %v4805 = vshrl.u32 %v4804, 7
    %v4806 = vsub.s32 0, %v4805
    %v4807 = vrot.slane %v4757, %v4806
    %v4808 = vlaneseq
    %v4809 = vshrl.u32 %v4808, 7
    %v4810 = vsub.s32 0, %v4809
    %v4811 = vrot.slane %v4759, %v4810
    %v4812 = vlaneseq
    %v4813 = vshrl.u32 %v4812, 7
    %v4814 = vsub.s32 0, %v4813
    %v4815 = vrot.slane %v4798, %v4814
    %v4816 = vlaneseq
    %v4817 = vshrl.u32 %v4816, 7
    %v4818 = vsub.s32 0, %v4817
    %v4819 = vrot.slane %v4800, %v4818
    %v4820 = vmul.f32 %v4616, %v4807
    %v4821 = vmul.f32 %v4617, %v4811
    %v4822 = vmul.f32 %v4618, %v4815
    %v4823 = vmul.f32 %v4619, %v4819
    %v4825 = vlaneseq
    %v4826 = vshrl.u32 %v4825, 7
    %v4827 = vsub.s32 0, %v4826
    %v4828 = vrot.slane %v4203, %v4827
    %v4829 = vlaneseq
    %v4830 = vshrl.u32 %v4829, 7
    %v4831 = vsub.s32 1, %v4830
    %v4832 = vrot.slane %v4203, %v4831
    %v4833 = vlaneseq
    %v4834 = vshrl.u32 %v4833, 7
    %v4835 = vsub.s32 2, %v4834
    %v4836 = vrot.slane %v4203, %v4835
    %v4837 = vlaneseq
    %v4838 = vshrl.u32 %v4837, 7
    %v4839 = vsub.s32 3, %v4838
    %v4840 = vrot.slane %v4203, %v4839
    %v4845 = vmul.f32 %v4820, %v4828
    %v4846 = vmul.f32 %v4821, %v4832
    %v4847 = vmul.f32 %v4822, %v4836
    %v4848 = vmul.f32 %v4823, %v4840
    %v4850 = vlaneseq
    %v4851 = vshrl.u32 %v4850, 7
    %v4852 = vsub.s32 0, %v4851
    %v4853 = vrot.slane %v4204, %v4852
    %v4854 = vlaneseq
    %v4855 = vshrl.u32 %v4854, 7
    %v4856 = vsub.s32 1, %v4855
    %v4857 = vrot.slane %v4204, %v4856
    %v4858 = vlaneseq
    %v4859 = vshrl.u32 %v4858, 7
    %v4860 = vsub.s32 2, %v4859
    %v4861 = vrot.slane %v4204, %v4860
    %v4862 = vlaneseq
    %v4863 = vshrl.u32 %v4862, 7
    %v4864 = vsub.s32 3, %v4863
    %v4865 = vrot.slane %v4204, %v4864
    %v4870 = vadd.f32 %v4845, %v4853
    %v4871 = vadd.f32 %v4846, %v4857
    %v4872 = vadd.f32 %v4847, %v4861
    %v4873 = vadd.f32 %v4848, %v4865
    %v4874 = vmax.f32 %v4870, 0.0
    %v4875 = vmax.f32 %v4871, 0.0
    %v4876 = vmax.f32 %v4872, 0.0
    %v4877 = vmax.f32 %v4873, 0.0
    %v4878 = vpack.c.bf16 %v4874, %v4874
    %v4879 = vpack.c.bf16 %v4875, %v4875
    %v4880 = vpack.c.bf16 %v4876, %v4876
    %v4881 = vpack.c.bf16 %v4877, %v4877
    %v4882 = vld [vmem:[#allocation16] sm:$0xff]
    %v4883 = vld [vmem:[#allocation16 + $0x8] sm:$0xff]
    %v4884 = vld [vmem:[#allocation16 + $0x10] sm:$0xff]
    %v4885 = vld [vmem:[#allocation16 + $0x18] sm:$0xff]
    %v4886 = vld [vmem:[#allocation16 + $0x20] sm:$0xff]
    %v4887 = vld [vmem:[#allocation16 + $0x28] sm:$0xff]
    %v4888 = vld [vmem:[#allocation16 + $0x30] sm:$0xff]
    %v4889 = vld [vmem:[#allocation16 + $0x38] sm:$0xff]
    %v4890 = vld [vmem:[#allocation16 + $0x40] sm:$0xff]
    %v4891 = vld [vmem:[#allocation16 + $0x48] sm:$0xff]
    %v4892 = vld [vmem:[#allocation16 + $0x50] sm:$0xff]
    %v4893 = vld [vmem:[#allocation16 + $0x58] sm:$0xff]
    %v4894 = vld [vmem:[#allocation16 + $0x60] sm:$0xff]
    %v4895 = vld [vmem:[#allocation16 + $0x68] sm:$0xff]
    %v4896 = vld [vmem:[#allocation16 + $0x70] sm:$0xff]
    %v4897 = vld [vmem:[#allocation16 + $0x78] sm:$0xff]
    %v4898 = vld [vmem:[#allocation16 + $0x80] sm:$0xff]
    %v4899 = vld [vmem:[#allocation16 + $0x88] sm:$0xff]
    %v4900 = vld [vmem:[#allocation16 + $0x90] sm:$0xff]
    %v4901 = vld [vmem:[#allocation16 + $0x98] sm:$0xff]
    %v4902 = vld [vmem:[#allocation16 + $0xa0] sm:$0xff]
    %v4903 = vld [vmem:[#allocation16 + $0xa8] sm:$0xff]
    %v4904 = vld [vmem:[#allocation16 + $0xb0] sm:$0xff]
    %v4905 = vld [vmem:[#allocation16 + $0xb8] sm:$0xff]
    %v4906 = vld [vmem:[#allocation16 + $0xc0] sm:$0xff]
    %v4907 = vld [vmem:[#allocation16 + $0xc8] sm:$0xff]
    %v4908 = vld [vmem:[#allocation16 + $0xd0] sm:$0xff]
    %v4909 = vld [vmem:[#allocation16 + $0xd8] sm:$0xff]
    %v4910 = vld [vmem:[#allocation16 + $0xe0] sm:$0xff]
    %v4911 = vld [vmem:[#allocation16 + $0xe8] sm:$0xff]
    %v4912 = vld [vmem:[#allocation16 + $0xf0] sm:$0xff]
    %v4913 = vld [vmem:[#allocation16 + $0xf8] sm:$0xff]
    %v4914 = vld [vmem:[#allocation16 + $0x100] sm:$0xff]
    %v4915 = vld [vmem:[#allocation16 + $0x108] sm:$0xff]
    %v4916 = vld [vmem:[#allocation16 + $0x110] sm:$0xff]
    %v4917 = vld [vmem:[#allocation16 + $0x118] sm:$0xff]
    %v4918 = vld [vmem:[#allocation16 + $0x120] sm:$0xff]
    %v4919 = vld [vmem:[#allocation16 + $0x128] sm:$0xff]
    %v4920 = vld [vmem:[#allocation16 + $0x130] sm:$0xff]
    %v4921 = vld [vmem:[#allocation16 + $0x138] sm:$0xff]
    %v4922 = vld [vmem:[#allocation16 + $0x140] sm:$0xff]
    %v4923 = vld [vmem:[#allocation16 + $0x148] sm:$0xff]
    %v4924 = vld [vmem:[#allocation16 + $0x150] sm:$0xff]
    %v4925 = vld [vmem:[#allocation16 + $0x158] sm:$0xff]
    %v4926 = vld [vmem:[#allocation16 + $0x160] sm:$0xff]
    %v4927 = vld [vmem:[#allocation16 + $0x168] sm:$0xff]
    %v4928 = vld [vmem:[#allocation16 + $0x170] sm:$0xff]
    %v4929 = vld [vmem:[#allocation16 + $0x178] sm:$0xff]
    %v4930 = vld [vmem:[#allocation16 + $0x180] sm:$0xff]
    %v4931 = vld [vmem:[#allocation16 + $0x188] sm:$0xff]
    %v4932 = vld [vmem:[#allocation16 + $0x190] sm:$0xff]
    %v4933 = vld [vmem:[#allocation16 + $0x198] sm:$0xff]
    %v4934 = vld [vmem:[#allocation16 + $0x1a0] sm:$0xff]
    %v4935 = vld [vmem:[#allocation16 + $0x1a8] sm:$0xff]
    %v4936 = vld [vmem:[#allocation16 + $0x1b0] sm:$0xff]
    %v4937 = vld [vmem:[#allocation16 + $0x1b8] sm:$0xff]
    %v4938 = vld [vmem:[#allocation16 + $0x1c0] sm:$0xff]
    %v4939 = vld [vmem:[#allocation16 + $0x1c8] sm:$0xff]
    %v4940 = vld [vmem:[#allocation16 + $0x1d0] sm:$0xff]
    %v4941 = vld [vmem:[#allocation16 + $0x1d8] sm:$0xff]
    %v4942 = vld [vmem:[#allocation16 + $0x1e0] sm:$0xff]
    %v4943 = vld [vmem:[#allocation16 + $0x1e8] sm:$0xff]
    %v4944 = vld [vmem:[#allocation16 + $0x1f0] sm:$0xff]
    %v4945 = vld [vmem:[#allocation16 + $0x1f8] sm:$0xff]
    %v4946 = vld [vmem:[#allocation16 + $0x200] sm:$0xff]
    %v4947 = vld [vmem:[#allocation16 + $0x208] sm:$0xff]
    %v4948 = vld [vmem:[#allocation16 + $0x210] sm:$0xff]
    %v4949 = vld [vmem:[#allocation16 + $0x218] sm:$0xff]
    %v4950 = vld [vmem:[#allocation16 + $0x220] sm:$0xff]
    %v4951 = vld [vmem:[#allocation16 + $0x228] sm:$0xff]
    %v4952 = vld [vmem:[#allocation16 + $0x230] sm:$0xff]
    %v4953 = vld [vmem:[#allocation16 + $0x238] sm:$0xff]
    %v4954 = vld [vmem:[#allocation16 + $0x240] sm:$0xff]
    %v4955 = vld [vmem:[#allocation16 + $0x248] sm:$0xff]
    %v4956 = vld [vmem:[#allocation16 + $0x250] sm:$0xff]
    %v4957 = vld [vmem:[#allocation16 + $0x258] sm:$0xff]
    %v4958 = vld [vmem:[#allocation16 + $0x260] sm:$0xff]
    %v4959 = vld [vmem:[#allocation16 + $0x268] sm:$0xff]
    %v4960 = vld [vmem:[#allocation16 + $0x270] sm:$0xff]
    %v4961 = vld [vmem:[#allocation16 + $0x278] sm:$0xff]
    %v4962 = vld [vmem:[#allocation16 + $0x280] sm:$0xff]
    %v4963 = vld [vmem:[#allocation16 + $0x288] sm:$0xff]
    %v4964 = vld [vmem:[#allocation16 + $0x290] sm:$0xff]
    %v4965 = vld [vmem:[#allocation16 + $0x298] sm:$0xff]
    %v4966 = vld [vmem:[#allocation16 + $0x2a0] sm:$0xff]
    %v4967 = vld [vmem:[#allocation16 + $0x2a8] sm:$0xff]
    %v4968 = vld [vmem:[#allocation16 + $0x2b0] sm:$0xff]
    %v4969 = vld [vmem:[#allocation16 + $0x2b8] sm:$0xff]
    %v4970 = vld [vmem:[#allocation16 + $0x2c0] sm:$0xff]
    %v4971 = vld [vmem:[#allocation16 + $0x2c8] sm:$0xff]
    %v4972 = vld [vmem:[#allocation16 + $0x2d0] sm:$0xff]
    %v4973 = vld [vmem:[#allocation16 + $0x2d8] sm:$0xff]
    %v4974 = vld [vmem:[#allocation16 + $0x2e0] sm:$0xff]
    %v4975 = vld [vmem:[#allocation16 + $0x2e8] sm:$0xff]
    %v4976 = vld [vmem:[#allocation16 + $0x2f0] sm:$0xff]
    %v4977 = vld [vmem:[#allocation16 + $0x2f8] sm:$0xff]
    %v4978 = vld [vmem:[#allocation16 + $0x300] sm:$0xff]
    %v4979 = vld [vmem:[#allocation16 + $0x308] sm:$0xff]
    %v4980 = vld [vmem:[#allocation16 + $0x310] sm:$0xff]
    %v4981 = vld [vmem:[#allocation16 + $0x318] sm:$0xff]
    %v4982 = vld [vmem:[#allocation16 + $0x320] sm:$0xff]
    %v4983 = vld [vmem:[#allocation16 + $0x328] sm:$0xff]
    %v4984 = vld [vmem:[#allocation16 + $0x330] sm:$0xff]
    %v4985 = vld [vmem:[#allocation16 + $0x338] sm:$0xff]
    %v4986 = vld [vmem:[#allocation16 + $0x340] sm:$0xff]
    %v4987 = vld [vmem:[#allocation16 + $0x348] sm:$0xff]
    %v4988 = vld [vmem:[#allocation16 + $0x350] sm:$0xff]
    %v4989 = vld [vmem:[#allocation16 + $0x358] sm:$0xff]
    %v4990 = vld [vmem:[#allocation16 + $0x360] sm:$0xff]
    %v4991 = vld [vmem:[#allocation16 + $0x368] sm:$0xff]
    %v4992 = vld [vmem:[#allocation16 + $0x370] sm:$0xff]
    %v4993 = vld [vmem:[#allocation16 + $0x378] sm:$0xff]
    %v4994 = vld [vmem:[#allocation16 + $0x380] sm:$0xff]
    %v4995 = vld [vmem:[#allocation16 + $0x388] sm:$0xff]
    %v4996 = vld [vmem:[#allocation16 + $0x390] sm:$0xff]
    %v4997 = vld [vmem:[#allocation16 + $0x398] sm:$0xff]
    %v4998 = vld [vmem:[#allocation16 + $0x3a0] sm:$0xff]
    %v4999 = vld [vmem:[#allocation16 + $0x3a8] sm:$0xff]
    %v5000 = vld [vmem:[#allocation16 + $0x3b0] sm:$0xff]
    %v5001 = vld [vmem:[#allocation16 + $0x3b8] sm:$0xff]
    %v5002 = vld [vmem:[#allocation16 + $0x3c0] sm:$0xff]
    %v5003 = vld [vmem:[#allocation16 + $0x3c8] sm:$0xff]
    %v5004 = vld [vmem:[#allocation16 + $0x3d0] sm:$0xff]
    %v5005 = vld [vmem:[#allocation16 + $0x3d8] sm:$0xff]
    %v5006 = vld [vmem:[#allocation16 + $0x3e0] sm:$0xff]
    %v5007 = vld [vmem:[#allocation16 + $0x3e8] sm:$0xff]
    %v5008 = vld [vmem:[#allocation16 + $0x3f0] sm:$0xff]
    %v5009 = vld [vmem:[#allocation16 + $0x3f8] sm:$0xff]
    %v5010 = vld [vmem:[#allocation16 + $0x400] sm:$0xff]
    %v5011 = vld [vmem:[#allocation16 + $0x408] sm:$0xff]
    %v5012 = vld [vmem:[#allocation16 + $0x410] sm:$0xff]
    %v5013 = vld [vmem:[#allocation16 + $0x418] sm:$0xff]
    %v5014 = vld [vmem:[#allocation16 + $0x420] sm:$0xff]
    %v5015 = vld [vmem:[#allocation16 + $0x428] sm:$0xff]
    %v5016 = vld [vmem:[#allocation16 + $0x430] sm:$0xff]
    %v5017 = vld [vmem:[#allocation16 + $0x438] sm:$0xff]
    %v5018 = vld [vmem:[#allocation16 + $0x440] sm:$0xff]
    %v5019 = vld [vmem:[#allocation16 + $0x448] sm:$0xff]
    %v5020 = vld [vmem:[#allocation16 + $0x450] sm:$0xff]
    %v5021 = vld [vmem:[#allocation16 + $0x458] sm:$0xff]
    %v5022 = vld [vmem:[#allocation16 + $0x460] sm:$0xff]
    %v5023 = vld [vmem:[#allocation16 + $0x468] sm:$0xff]
    %v5024 = vld [vmem:[#allocation16 + $0x470] sm:$0xff]
    %v5025 = vld [vmem:[#allocation16 + $0x478] sm:$0xff]
    %v5026 = vld [vmem:[#allocation16 + $0x480] sm:$0xff]
    %v5027 = vld [vmem:[#allocation16 + $0x488] sm:$0xff]
    %v5028 = vld [vmem:[#allocation16 + $0x490] sm:$0xff]
    %v5029 = vld [vmem:[#allocation16 + $0x498] sm:$0xff]
    %v5030 = vld [vmem:[#allocation16 + $0x4a0] sm:$0xff]
    %v5031 = vld [vmem:[#allocation16 + $0x4a8] sm:$0xff]
    %v5032 = vld [vmem:[#allocation16 + $0x4b0] sm:$0xff]
    %v5033 = vld [vmem:[#allocation16 + $0x4b8] sm:$0xff]
    %v5034 = vld [vmem:[#allocation16 + $0x4c0] sm:$0xff]
    %v5035 = vld [vmem:[#allocation16 + $0x4c8] sm:$0xff]
    %v5036 = vld [vmem:[#allocation16 + $0x4d0] sm:$0xff]
    %v5037 = vld [vmem:[#allocation16 + $0x4d8] sm:$0xff]
    %v5038 = vld [vmem:[#allocation16 + $0x4e0] sm:$0xff]
    %v5039 = vld [vmem:[#allocation16 + $0x4e8] sm:$0xff]
    %v5040 = vld [vmem:[#allocation16 + $0x4f0] sm:$0xff]
    %v5041 = vld [vmem:[#allocation16 + $0x4f8] sm:$0xff]
    %v5042 = vld [vmem:[#allocation16 + $0x500] sm:$0xff]
    %v5043 = vld [vmem:[#allocation16 + $0x508] sm:$0xff]
    %v5044 = vld [vmem:[#allocation16 + $0x510] sm:$0xff]
    %v5045 = vld [vmem:[#allocation16 + $0x518] sm:$0xff]
    %v5046 = vld [vmem:[#allocation16 + $0x520] sm:$0xff]
    %v5047 = vld [vmem:[#allocation16 + $0x528] sm:$0xff]
    %v5048 = vld [vmem:[#allocation16 + $0x530] sm:$0xff]
    %v5049 = vld [vmem:[#allocation16 + $0x538] sm:$0xff]
    %v5050 = vld [vmem:[#allocation16 + $0x540] sm:$0xff]
    %v5051 = vld [vmem:[#allocation16 + $0x548] sm:$0xff]
    %v5052 = vld [vmem:[#allocation16 + $0x550] sm:$0xff]
    %v5053 = vld [vmem:[#allocation16 + $0x558] sm:$0xff]
    %v5054 = vld [vmem:[#allocation16 + $0x560] sm:$0xff]
    %v5055 = vld [vmem:[#allocation16 + $0x568] sm:$0xff]
    %v5056 = vld [vmem:[#allocation16 + $0x570] sm:$0xff]
    %v5057 = vld [vmem:[#allocation16 + $0x578] sm:$0xff]
    %v5058 = vld [vmem:[#allocation16 + $0x580] sm:$0xff]
    %v5059 = vld [vmem:[#allocation16 + $0x588] sm:$0xff]
    %v5060 = vld [vmem:[#allocation16 + $0x590] sm:$0xff]
    %v5061 = vld [vmem:[#allocation16 + $0x598] sm:$0xff]
    %v5062 = vld [vmem:[#allocation16 + $0x5a0] sm:$0xff]
    %v5063 = vld [vmem:[#allocation16 + $0x5a8] sm:$0xff]
    %v5064 = vld [vmem:[#allocation16 + $0x5b0] sm:$0xff]
    %v5065 = vld [vmem:[#allocation16 + $0x5b8] sm:$0xff]
    %v5066 = vld [vmem:[#allocation16 + $0x5c0] sm:$0xff]
    %v5067 = vld [vmem:[#allocation16 + $0x5c8] sm:$0xff]
    %v5068 = vld [vmem:[#allocation16 + $0x5d0] sm:$0xff]
    %v5069 = vld [vmem:[#allocation16 + $0x5d8] sm:$0xff]
    %v5070 = vld [vmem:[#allocation16 + $0x5e0] sm:$0xff]
    %v5071 = vld [vmem:[#allocation16 + $0x5e8] sm:$0xff]
    %v5072 = vld [vmem:[#allocation16 + $0x5f0] sm:$0xff]
    %v5073 = vld [vmem:[#allocation16 + $0x5f8] sm:$0xff]
    %v5074 = vld [vmem:[#allocation16 + $0x600] sm:$0xff]
    %v5075 = vld [vmem:[#allocation16 + $0x608] sm:$0xff]
    %v5076 = vld [vmem:[#allocation16 + $0x610] sm:$0xff]
    %v5077 = vld [vmem:[#allocation16 + $0x618] sm:$0xff]
    %v5078 = vld [vmem:[#allocation16 + $0x620] sm:$0xff]
    %v5079 = vld [vmem:[#allocation16 + $0x628] sm:$0xff]
    %v5080 = vld [vmem:[#allocation16 + $0x630] sm:$0xff]
    %v5081 = vld [vmem:[#allocation16 + $0x638] sm:$0xff]
    %v5082 = vld [vmem:[#allocation16 + $0x640] sm:$0xff]
    %v5083 = vld [vmem:[#allocation16 + $0x648] sm:$0xff]
    %v5084 = vld [vmem:[#allocation16 + $0x650] sm:$0xff]
    %v5085 = vld [vmem:[#allocation16 + $0x658] sm:$0xff]
    %v5086 = vld [vmem:[#allocation16 + $0x660] sm:$0xff]
    %v5087 = vld [vmem:[#allocation16 + $0x668] sm:$0xff]
    %v5088 = vld [vmem:[#allocation16 + $0x670] sm:$0xff]
    %v5089 = vld [vmem:[#allocation16 + $0x678] sm:$0xff]
    %v5090 = vld [vmem:[#allocation16 + $0x680] sm:$0xff]
    %v5091 = vld [vmem:[#allocation16 + $0x688] sm:$0xff]
    %v5092 = vld [vmem:[#allocation16 + $0x690] sm:$0xff]
    %v5093 = vld [vmem:[#allocation16 + $0x698] sm:$0xff]
    %v5094 = vld [vmem:[#allocation16 + $0x6a0] sm:$0xff]
    %v5095 = vld [vmem:[#allocation16 + $0x6a8] sm:$0xff]
    %v5096 = vld [vmem:[#allocation16 + $0x6b0] sm:$0xff]
    %v5097 = vld [vmem:[#allocation16 + $0x6b8] sm:$0xff]
    %v5098 = vld [vmem:[#allocation16 + $0x6c0] sm:$0xff]
    %v5099 = vld [vmem:[#allocation16 + $0x6c8] sm:$0xff]
    %v5100 = vld [vmem:[#allocation16 + $0x6d0] sm:$0xff]
    %v5101 = vld [vmem:[#allocation16 + $0x6d8] sm:$0xff]
    %v5102 = vld [vmem:[#allocation16 + $0x6e0] sm:$0xff]
    %v5103 = vld [vmem:[#allocation16 + $0x6e8] sm:$0xff]
    %v5104 = vld [vmem:[#allocation16 + $0x6f0] sm:$0xff]
    %v5105 = vld [vmem:[#allocation16 + $0x6f8] sm:$0xff]
    %v5106 = vld [vmem:[#allocation16 + $0x700] sm:$0xff]
    %v5107 = vld [vmem:[#allocation16 + $0x708] sm:$0xff]
    %v5108 = vld [vmem:[#allocation16 + $0x710] sm:$0xff]
    %v5109 = vld [vmem:[#allocation16 + $0x718] sm:$0xff]
    %v5110 = vld [vmem:[#allocation16 + $0x720] sm:$0xff]
    %v5111 = vld [vmem:[#allocation16 + $0x728] sm:$0xff]
    %v5112 = vld [vmem:[#allocation16 + $0x730] sm:$0xff]
    %v5113 = vld [vmem:[#allocation16 + $0x738] sm:$0xff]
    %v5114 = vld [vmem:[#allocation16 + $0x740] sm:$0xff]
    %v5115 = vld [vmem:[#allocation16 + $0x748] sm:$0xff]
    %v5116 = vld [vmem:[#allocation16 + $0x750] sm:$0xff]
    %v5117 = vld [vmem:[#allocation16 + $0x758] sm:$0xff]
    %v5118 = vld [vmem:[#allocation16 + $0x760] sm:$0xff]
    %v5119 = vld [vmem:[#allocation16 + $0x768] sm:$0xff]
    %v5120 = vld [vmem:[#allocation16 + $0x770] sm:$0xff]
    %v5121 = vld [vmem:[#allocation16 + $0x778] sm:$0xff]
    %v5122 = vld [vmem:[#allocation16 + $0x780] sm:$0xff]
    %v5123 = vld [vmem:[#allocation16 + $0x788] sm:$0xff]
    %v5124 = vld [vmem:[#allocation16 + $0x790] sm:$0xff]
    %v5125 = vld [vmem:[#allocation16 + $0x798] sm:$0xff]
    %v5126 = vld [vmem:[#allocation16 + $0x7a0] sm:$0xff]
    %v5127 = vld [vmem:[#allocation16 + $0x7a8] sm:$0xff]
    %v5128 = vld [vmem:[#allocation16 + $0x7b0] sm:$0xff]
    %v5129 = vld [vmem:[#allocation16 + $0x7b8] sm:$0xff]
    %v5130 = vld [vmem:[#allocation16 + $0x7c0] sm:$0xff]
    %v5131 = vld [vmem:[#allocation16 + $0x7c8] sm:$0xff]
    %v5132 = vld [vmem:[#allocation16 + $0x7d0] sm:$0xff]
    %v5133 = vld [vmem:[#allocation16 + $0x7d8] sm:$0xff]
    %v5134 = vld [vmem:[#allocation16 + $0x7e0] sm:$0xff]
    %v5135 = vld [vmem:[#allocation16 + $0x7e8] sm:$0xff]
    %v5136 = vld [vmem:[#allocation16 + $0x7f0] sm:$0xff]
    %v5137 = vld [vmem:[#allocation16 + $0x7f8] sm:$0xff]
    %v5394 = vunpack.c.l.b16 %v4882
    %v5395 = vunpack.c.h.b16 %v4882
    %v5396 = vunpack.c.l.b16 %v4883
    %v5397 = vunpack.c.h.b16 %v4883
    %v5398 = vunpack.c.l.b16 %v4884
    %v5399 = vunpack.c.h.b16 %v4884
    %v5400 = vunpack.c.l.b16 %v4885
    %v5401 = vunpack.c.h.b16 %v4885
    %v5402 = vunpack.c.l.b16 %v4886
    %v5403 = vunpack.c.h.b16 %v4886
    %v5404 = vunpack.c.l.b16 %v4887
    %v5405 = vunpack.c.h.b16 %v4887
    %v5406 = vunpack.c.l.b16 %v4888
    %v5407 = vunpack.c.h.b16 %v4888
    %v5408 = vunpack.c.l.b16 %v4889
    %v5409 = vunpack.c.h.b16 %v4889
    %v5410 = vunpack.c.l.b16 %v4890
    %v5411 = vunpack.c.h.b16 %v4890
    %v5412 = vunpack.c.l.b16 %v4891
    %v5413 = vunpack.c.h.b16 %v4891
    %v5414 = vunpack.c.l.b16 %v4892
    %v5415 = vunpack.c.h.b16 %v4892
    %v5416 = vunpack.c.l.b16 %v4893
    %v5417 = vunpack.c.h.b16 %v4893
    %v5418 = vunpack.c.l.b16 %v4894
    %v5419 = vunpack.c.h.b16 %v4894
    %v5420 = vunpack.c.l.b16 %v4895
    %v5421 = vunpack.c.h.b16 %v4895
    %v5422 = vunpack.c.l.b16 %v4896
    %v5423 = vunpack.c.h.b16 %v4896
    %v5424 = vunpack.c.l.b16 %v4897
    %v5425 = vunpack.c.h.b16 %v4897
    %v5426 = vunpack.c.l.b16 %v4898
    %v5427 = vunpack.c.h.b16 %v4898
    %v5428 = vunpack.c.l.b16 %v4899
    %v5429 = vunpack.c.h.b16 %v4899
    %v5430 = vunpack.c.l.b16 %v4900
    %v5431 = vunpack.c.h.b16 %v4900
    %v5432 = vunpack.c.l.b16 %v4901
    %v5433 = vunpack.c.h.b16 %v4901
    %v5434 = vunpack.c.l.b16 %v4902
    %v5435 = vunpack.c.h.b16 %v4902
    %v5436 = vunpack.c.l.b16 %v4903
    %v5437 = vunpack.c.h.b16 %v4903
    %v5438 = vunpack.c.l.b16 %v4904
    %v5439 = vunpack.c.h.b16 %v4904
    %v5440 = vunpack.c.l.b16 %v4905
    %v5441 = vunpack.c.h.b16 %v4905
    %v5442 = vunpack.c.l.b16 %v4906
    %v5443 = vunpack.c.h.b16 %v4906
    %v5444 = vunpack.c.l.b16 %v4907
    %v5445 = vunpack.c.h.b16 %v4907
    %v5446 = vunpack.c.l.b16 %v4908
    %v5447 = vunpack.c.h.b16 %v4908
    %v5448 = vunpack.c.l.b16 %v4909
    %v5449 = vunpack.c.h.b16 %v4909
    %v5450 = vunpack.c.l.b16 %v4910
    %v5451 = vunpack.c.h.b16 %v4910
    %v5452 = vunpack.c.l.b16 %v4911
    %v5453 = vunpack.c.h.b16 %v4911
    %v5454 = vunpack.c.l.b16 %v4912
    %v5455 = vunpack.c.h.b16 %v4912
    %v5456 = vunpack.c.l.b16 %v4913
    %v5457 = vunpack.c.h.b16 %v4913
    %v5458 = vunpack.c.l.b16 %v4914
    %v5459 = vunpack.c.h.b16 %v4914
    %v5460 = vunpack.c.l.b16 %v4915
    %v5461 = vunpack.c.h.b16 %v4915
    %v5462 = vunpack.c.l.b16 %v4916
    %v5463 = vunpack.c.h.b16 %v4916
    %v5464 = vunpack.c.l.b16 %v4917
    %v5465 = vunpack.c.h.b16 %v4917
    %v5466 = vunpack.c.l.b16 %v4918
    %v5467 = vunpack.c.h.b16 %v4918
    %v5468 = vunpack.c.l.b16 %v4919
    %v5469 = vunpack.c.h.b16 %v4919
    %v5470 = vunpack.c.l.b16 %v4920
    %v5471 = vunpack.c.h.b16 %v4920
    %v5472 = vunpack.c.l.b16 %v4921
    %v5473 = vunpack.c.h.b16 %v4921
    %v5474 = vunpack.c.l.b16 %v4922
    %v5475 = vunpack.c.h.b16 %v4922
    %v5476 = vunpack.c.l.b16 %v4923
    %v5477 = vunpack.c.h.b16 %v4923
    %v5478 = vunpack.c.l.b16 %v4924
    %v5479 = vunpack.c.h.b16 %v4924
    %v5480 = vunpack.c.l.b16 %v4925
    %v5481 = vunpack.c.h.b16 %v4925
    %v5482 = vunpack.c.l.b16 %v4926
    %v5483 = vunpack.c.h.b16 %v4926
    %v5484 = vunpack.c.l.b16 %v4927
    %v5485 = vunpack.c.h.b16 %v4927
    %v5486 = vunpack.c.l.b16 %v4928
    %v5487 = vunpack.c.h.b16 %v4928
    %v5488 = vunpack.c.l.b16 %v4929
    %v5489 = vunpack.c.h.b16 %v4929
    %v5490 = vunpack.c.l.b16 %v4930
    %v5491 = vunpack.c.h.b16 %v4930
    %v5492 = vunpack.c.l.b16 %v4931
    %v5493 = vunpack.c.h.b16 %v4931
    %v5494 = vunpack.c.l.b16 %v4932
    %v5495 = vunpack.c.h.b16 %v4932
    %v5496 = vunpack.c.l.b16 %v4933
    %v5497 = vunpack.c.h.b16 %v4933
    %v5498 = vunpack.c.l.b16 %v4934
    %v5499 = vunpack.c.h.b16 %v4934
    %v5500 = vunpack.c.l.b16 %v4935
    %v5501 = vunpack.c.h.b16 %v4935
    %v5502 = vunpack.c.l.b16 %v4936
    %v5503 = vunpack.c.h.b16 %v4936
    %v5504 = vunpack.c.l.b16 %v4937
    %v5505 = vunpack.c.h.b16 %v4937
    %v5506 = vunpack.c.l.b16 %v4938
    %v5507 = vunpack.c.h.b16 %v4938
    %v5508 = vunpack.c.l.b16 %v4939
    %v5509 = vunpack.c.h.b16 %v4939
    %v5510 = vunpack.c.l.b16 %v4940
    %v5511 = vunpack.c.h.b16 %v4940
    %v5512 = vunpack.c.l.b16 %v4941
    %v5513 = vunpack.c.h.b16 %v4941
    %v5514 = vunpack.c.l.b16 %v4942
    %v5515 = vunpack.c.h.b16 %v4942
    %v5516 = vunpack.c.l.b16 %v4943
    %v5517 = vunpack.c.h.b16 %v4943
    %v5518 = vunpack.c.l.b16 %v4944
    %v5519 = vunpack.c.h.b16 %v4944
    %v5520 = vunpack.c.l.b16 %v4945
    %v5521 = vunpack.c.h.b16 %v4945
    %v5522 = vunpack.c.l.b16 %v4946
    %v5523 = vunpack.c.h.b16 %v4946
    %v5524 = vunpack.c.l.b16 %v4947
    %v5525 = vunpack.c.h.b16 %v4947
    %v5526 = vunpack.c.l.b16 %v4948
    %v5527 = vunpack.c.h.b16 %v4948
    %v5528 = vunpack.c.l.b16 %v4949
    %v5529 = vunpack.c.h.b16 %v4949
    %v5530 = vunpack.c.l.b16 %v4950
    %v5531 = vunpack.c.h.b16 %v4950
    %v5532 = vunpack.c.l.b16 %v4951
    %v5533 = vunpack.c.h.b16 %v4951
    %v5534 = vunpack.c.l.b16 %v4952
    %v5535 = vunpack.c.h.b16 %v4952
    %v5536 = vunpack.c.l.b16 %v4953
    %v5537 = vunpack.c.h.b16 %v4953
    %v5538 = vunpack.c.l.b16 %v4954
    %v5539 = vunpack.c.h.b16 %v4954
    %v5540 = vunpack.c.l.b16 %v4955
    %v5541 = vunpack.c.h.b16 %v4955
    %v5542 = vunpack.c.l.b16 %v4956
    %v5543 = vunpack.c.h.b16 %v4956
    %v5544 = vunpack.c.l.b16 %v4957
    %v5545 = vunpack.c.h.b16 %v4957
    %v5546 = vunpack.c.l.b16 %v4958
    %v5547 = vunpack.c.h.b16 %v4958
    %v5548 = vunpack.c.l.b16 %v4959
    %v5549 = vunpack.c.h.b16 %v4959
    %v5550 = vunpack.c.l.b16 %v4960
    %v5551 = vunpack.c.h.b16 %v4960
    %v5552 = vunpack.c.l.b16 %v4961
    %v5553 = vunpack.c.h.b16 %v4961
    %v5554 = vunpack.c.l.b16 %v4962
    %v5555 = vunpack.c.h.b16 %v4962
    %v5556 = vunpack.c.l.b16 %v4963
    %v5557 = vunpack.c.h.b16 %v4963
    %v5558 = vunpack.c.l.b16 %v4964
    %v5559 = vunpack.c.h.b16 %v4964
    %v5560 = vunpack.c.l.b16 %v4965
    %v5561 = vunpack.c.h.b16 %v4965
    %v5562 = vunpack.c.l.b16 %v4966
    %v5563 = vunpack.c.h.b16 %v4966
    %v5564 = vunpack.c.l.b16 %v4967
    %v5565 = vunpack.c.h.b16 %v4967
    %v5566 = vunpack.c.l.b16 %v4968
    %v5567 = vunpack.c.h.b16 %v4968
    %v5568 = vunpack.c.l.b16 %v4969
    %v5569 = vunpack.c.h.b16 %v4969
    %v5570 = vunpack.c.l.b16 %v4970
    %v5571 = vunpack.c.h.b16 %v4970
    %v5572 = vunpack.c.l.b16 %v4971
    %v5573 = vunpack.c.h.b16 %v4971
    %v5574 = vunpack.c.l.b16 %v4972
    %v5575 = vunpack.c.h.b16 %v4972
    %v5576 = vunpack.c.l.b16 %v4973
    %v5577 = vunpack.c.h.b16 %v4973
    %v5578 = vunpack.c.l.b16 %v4974
    %v5579 = vunpack.c.h.b16 %v4974
    %v5580 = vunpack.c.l.b16 %v4975
    %v5581 = vunpack.c.h.b16 %v4975
    %v5582 = vunpack.c.l.b16 %v4976
    %v5583 = vunpack.c.h.b16 %v4976
    %v5584 = vunpack.c.l.b16 %v4977
    %v5585 = vunpack.c.h.b16 %v4977
    %v5586 = vunpack.c.l.b16 %v4978
    %v5587 = vunpack.c.h.b16 %v4978
    %v5588 = vunpack.c.l.b16 %v4979
    %v5589 = vunpack.c.h.b16 %v4979
    %v5590 = vunpack.c.l.b16 %v4980
    %v5591 = vunpack.c.h.b16 %v4980
    %v5592 = vunpack.c.l.b16 %v4981
    %v5593 = vunpack.c.h.b16 %v4981
    %v5594 = vunpack.c.l.b16 %v4982
    %v5595 = vunpack.c.h.b16 %v4982
    %v5596 = vunpack.c.l.b16 %v4983
    %v5597 = vunpack.c.h.b16 %v4983
    %v5598 = vunpack.c.l.b16 %v4984
    %v5599 = vunpack.c.h.b16 %v4984
    %v5600 = vunpack.c.l.b16 %v4985
    %v5601 = vunpack.c.h.b16 %v4985
    %v5602 = vunpack.c.l.b16 %v4986
    %v5603 = vunpack.c.h.b16 %v4986
    %v5604 = vunpack.c.l.b16 %v4987
    %v5605 = vunpack.c.h.b16 %v4987
    %v5606 = vunpack.c.l.b16 %v4988
    %v5607 = vunpack.c.h.b16 %v4988
    %v5608 = vunpack.c.l.b16 %v4989
    %v5609 = vunpack.c.h.b16 %v4989
    %v5610 = vunpack.c.l.b16 %v4990
    %v5611 = vunpack.c.h.b16 %v4990
    %v5612 = vunpack.c.l.b16 %v4991
    %v5613 = vunpack.c.h.b16 %v4991
    %v5614 = vunpack.c.l.b16 %v4992
    %v5615 = vunpack.c.h.b16 %v4992
    %v5616 = vunpack.c.l.b16 %v4993
    %v5617 = vunpack.c.h.b16 %v4993
    %v5618 = vunpack.c.l.b16 %v4994
    %v5619 = vunpack.c.h.b16 %v4994
    %v5620 = vunpack.c.l.b16 %v4995
    %v5621 = vunpack.c.h.b16 %v4995
    %v5622 = vunpack.c.l.b16 %v4996
    %v5623 = vunpack.c.h.b16 %v4996
    %v5624 = vunpack.c.l.b16 %v4997
    %v5625 = vunpack.c.h.b16 %v4997
    %v5626 = vunpack.c.l.b16 %v4998
    %v5627 = vunpack.c.h.b16 %v4998
    %v5628 = vunpack.c.l.b16 %v4999
    %v5629 = vunpack.c.h.b16 %v4999
    %v5630 = vunpack.c.l.b16 %v5000
    %v5631 = vunpack.c.h.b16 %v5000
    %v5632 = vunpack.c.l.b16 %v5001
    %v5633 = vunpack.c.h.b16 %v5001
    %v5634 = vunpack.c.l.b16 %v5002
    %v5635 = vunpack.c.h.b16 %v5002
    %v5636 = vunpack.c.l.b16 %v5003
    %v5637 = vunpack.c.h.b16 %v5003
    %v5638 = vunpack.c.l.b16 %v5004
    %v5639 = vunpack.c.h.b16 %v5004
    %v5640 = vunpack.c.l.b16 %v5005
    %v5641 = vunpack.c.h.b16 %v5005
    %v5642 = vunpack.c.l.b16 %v5006
    %v5643 = vunpack.c.h.b16 %v5006
    %v5644 = vunpack.c.l.b16 %v5007
    %v5645 = vunpack.c.h.b16 %v5007
    %v5646 = vunpack.c.l.b16 %v5008
    %v5647 = vunpack.c.h.b16 %v5008
    %v5648 = vunpack.c.l.b16 %v5009
    %v5649 = vunpack.c.h.b16 %v5009
    %v5650 = vunpack.c.l.b16 %v5010
    %v5651 = vunpack.c.h.b16 %v5010
    %v5652 = vunpack.c.l.b16 %v5011
    %v5653 = vunpack.c.h.b16 %v5011
    %v5654 = vunpack.c.l.b16 %v5012
    %v5655 = vunpack.c.h.b16 %v5012
    %v5656 = vunpack.c.l.b16 %v5013
    %v5657 = vunpack.c.h.b16 %v5013
    %v5658 = vunpack.c.l.b16 %v5014
    %v5659 = vunpack.c.h.b16 %v5014
    %v5660 = vunpack.c.l.b16 %v5015
    %v5661 = vunpack.c.h.b16 %v5015
    %v5662 = vunpack.c.l.b16 %v5016
    %v5663 = vunpack.c.h.b16 %v5016
    %v5664 = vunpack.c.l.b16 %v5017
    %v5665 = vunpack.c.h.b16 %v5017
    %v5666 = vunpack.c.l.b16 %v5018
    %v5667 = vunpack.c.h.b16 %v5018
    %v5668 = vunpack.c.l.b16 %v5019
    %v5669 = vunpack.c.h.b16 %v5019
    %v5670 = vunpack.c.l.b16 %v5020
    %v5671 = vunpack.c.h.b16 %v5020
    %v5672 = vunpack.c.l.b16 %v5021
    %v5673 = vunpack.c.h.b16 %v5021
    %v5674 = vunpack.c.l.b16 %v5022
    %v5675 = vunpack.c.h.b16 %v5022
    %v5676 = vunpack.c.l.b16 %v5023
    %v5677 = vunpack.c.h.b16 %v5023
    %v5678 = vunpack.c.l.b16 %v5024
    %v5679 = vunpack.c.h.b16 %v5024
    %v5680 = vunpack.c.l.b16 %v5025
    %v5681 = vunpack.c.h.b16 %v5025
    %v5682 = vunpack.c.l.b16 %v5026
    %v5683 = vunpack.c.h.b16 %v5026
    %v5684 = vunpack.c.l.b16 %v5027
    %v5685 = vunpack.c.h.b16 %v5027
    %v5686 = vunpack.c.l.b16 %v5028
    %v5687 = vunpack.c.h.b16 %v5028
    %v5688 = vunpack.c.l.b16 %v5029
    %v5689 = vunpack.c.h.b16 %v5029
    %v5690 = vunpack.c.l.b16 %v5030
    %v5691 = vunpack.c.h.b16 %v5030
    %v5692 = vunpack.c.l.b16 %v5031
    %v5693 = vunpack.c.h.b16 %v5031
    %v5694 = vunpack.c.l.b16 %v5032
    %v5695 = vunpack.c.h.b16 %v5032
    %v5696 = vunpack.c.l.b16 %v5033
    %v5697 = vunpack.c.h.b16 %v5033
    %v5698 = vunpack.c.l.b16 %v5034
    %v5699 = vunpack.c.h.b16 %v5034
    %v5700 = vunpack.c.l.b16 %v5035
    %v5701 = vunpack.c.h.b16 %v5035
    %v5702 = vunpack.c.l.b16 %v5036
    %v5703 = vunpack.c.h.b16 %v5036
    %v5704 = vunpack.c.l.b16 %v5037
    %v5705 = vunpack.c.h.b16 %v5037
    %v5706 = vunpack.c.l.b16 %v5038
    %v5707 = vunpack.c.h.b16 %v5038
    %v5708 = vunpack.c.l.b16 %v5039
    %v5709 = vunpack.c.h.b16 %v5039
    %v5710 = vunpack.c.l.b16 %v5040
    %v5711 = vunpack.c.h.b16 %v5040
    %v5712 = vunpack.c.l.b16 %v5041
    %v5713 = vunpack.c.h.b16 %v5041
    %v5714 = vunpack.c.l.b16 %v5042
    %v5715 = vunpack.c.h.b16 %v5042
    %v5716 = vunpack.c.l.b16 %v5043
    %v5717 = vunpack.c.h.b16 %v5043
    %v5718 = vunpack.c.l.b16 %v5044
    %v5719 = vunpack.c.h.b16 %v5044
    %v5720 = vunpack.c.l.b16 %v5045
    %v5721 = vunpack.c.h.b16 %v5045
    %v5722 = vunpack.c.l.b16 %v5046
    %v5723 = vunpack.c.h.b16 %v5046
    %v5724 = vunpack.c.l.b16 %v5047
    %v5725 = vunpack.c.h.b16 %v5047
    %v5726 = vunpack.c.l.b16 %v5048
    %v5727 = vunpack.c.h.b16 %v5048
    %v5728 = vunpack.c.l.b16 %v5049
    %v5729 = vunpack.c.h.b16 %v5049
    %v5730 = vunpack.c.l.b16 %v5050
    %v5731 = vunpack.c.h.b16 %v5050
    %v5732 = vunpack.c.l.b16 %v5051
    %v5733 = vunpack.c.h.b16 %v5051
    %v5734 = vunpack.c.l.b16 %v5052
    %v5735 = vunpack.c.h.b16 %v5052
    %v5736 = vunpack.c.l.b16 %v5053
    %v5737 = vunpack.c.h.b16 %v5053
    %v5738 = vunpack.c.l.b16 %v5054
    %v5739 = vunpack.c.h.b16 %v5054
    %v5740 = vunpack.c.l.b16 %v5055
    %v5741 = vunpack.c.h.b16 %v5055
    %v5742 = vunpack.c.l.b16 %v5056
    %v5743 = vunpack.c.h.b16 %v5056
    %v5744 = vunpack.c.l.b16 %v5057
    %v5745 = vunpack.c.h.b16 %v5057
    %v5746 = vunpack.c.l.b16 %v5058
    %v5747 = vunpack.c.h.b16 %v5058
    %v5748 = vunpack.c.l.b16 %v5059
    %v5749 = vunpack.c.h.b16 %v5059
    %v5750 = vunpack.c.l.b16 %v5060
    %v5751 = vunpack.c.h.b16 %v5060
    %v5752 = vunpack.c.l.b16 %v5061
    %v5753 = vunpack.c.h.b16 %v5061
    %v5754 = vunpack.c.l.b16 %v5062
    %v5755 = vunpack.c.h.b16 %v5062
    %v5756 = vunpack.c.l.b16 %v5063
    %v5757 = vunpack.c.h.b16 %v5063
    %v5758 = vunpack.c.l.b16 %v5064
    %v5759 = vunpack.c.h.b16 %v5064
    %v5760 = vunpack.c.l.b16 %v5065
    %v5761 = vunpack.c.h.b16 %v5065
    %v5762 = vunpack.c.l.b16 %v5066
    %v5763 = vunpack.c.h.b16 %v5066
    %v5764 = vunpack.c.l.b16 %v5067
    %v5765 = vunpack.c.h.b16 %v5067
    %v5766 = vunpack.c.l.b16 %v5068
    %v5767 = vunpack.c.h.b16 %v5068
    %v5768 = vunpack.c.l.b16 %v5069
    %v5769 = vunpack.c.h.b16 %v5069
    %v5770 = vunpack.c.l.b16 %v5070
    %v5771 = vunpack.c.h.b16 %v5070
    %v5772 = vunpack.c.l.b16 %v5071
    %v5773 = vunpack.c.h.b16 %v5071
    %v5774 = vunpack.c.l.b16 %v5072
    %v5775 = vunpack.c.h.b16 %v5072
    %v5776 = vunpack.c.l.b16 %v5073
    %v5777 = vunpack.c.h.b16 %v5073
    %v5778 = vunpack.c.l.b16 %v5074
    %v5779 = vunpack.c.h.b16 %v5074
    %v5780 = vunpack.c.l.b16 %v5075
    %v5781 = vunpack.c.h.b16 %v5075
    %v5782 = vunpack.c.l.b16 %v5076
    %v5783 = vunpack.c.h.b16 %v5076
    %v5784 = vunpack.c.l.b16 %v5077
    %v5785 = vunpack.c.h.b16 %v5077
    %v5786 = vunpack.c.l.b16 %v5078
    %v5787 = vunpack.c.h.b16 %v5078
    %v5788 = vunpack.c.l.b16 %v5079
    %v5789 = vunpack.c.h.b16 %v5079
    %v5790 = vunpack.c.l.b16 %v5080
    %v5791 = vunpack.c.h.b16 %v5080
    %v5792 = vunpack.c.l.b16 %v5081
    %v5793 = vunpack.c.h.b16 %v5081
    %v5794 = vunpack.c.l.b16 %v5082
    %v5795 = vunpack.c.h.b16 %v5082
    %v5796 = vunpack.c.l.b16 %v5083
    %v5797 = vunpack.c.h.b16 %v5083
    %v5798 = vunpack.c.l.b16 %v5084
    %v5799 = vunpack.c.h.b16 %v5084
    %v5800 = vunpack.c.l.b16 %v5085
    %v5801 = vunpack.c.h.b16 %v5085
    %v5802 = vunpack.c.l.b16 %v5086
    %v5803 = vunpack.c.h.b16 %v5086
    %v5804 = vunpack.c.l.b16 %v5087
    %v5805 = vunpack.c.h.b16 %v5087
    %v5806 = vunpack.c.l.b16 %v5088
    %v5807 = vunpack.c.h.b16 %v5088
    %v5808 = vunpack.c.l.b16 %v5089
    %v5809 = vunpack.c.h.b16 %v5089
    %v5810 = vunpack.c.l.b16 %v5090
    %v5811 = vunpack.c.h.b16 %v5090
    %v5812 = vunpack.c.l.b16 %v5091
    %v5813 = vunpack.c.h.b16 %v5091
    %v5814 = vunpack.c.l.b16 %v5092
    %v5815 = vunpack.c.h.b16 %v5092
    %v5816 = vunpack.c.l.b16 %v5093
    %v5817 = vunpack.c.h.b16 %v5093
    %v5818 = vunpack.c.l.b16 %v5094
    %v5819 = vunpack.c.h.b16 %v5094
    %v5820 = vunpack.c.l.b16 %v5095
    %v5821 = vunpack.c.h.b16 %v5095
    %v5822 = vunpack.c.l.b16 %v5096
    %v5823 = vunpack.c.h.b16 %v5096
    %v5824 = vunpack.c.l.b16 %v5097
    %v5825 = vunpack.c.h.b16 %v5097
    %v5826 = vunpack.c.l.b16 %v5098
    %v5827 = vunpack.c.h.b16 %v5098
    %v5828 = vunpack.c.l.b16 %v5099
    %v5829 = vunpack.c.h.b16 %v5099
    %v5830 = vunpack.c.l.b16 %v5100
    %v5831 = vunpack.c.h.b16 %v5100
    %v5832 = vunpack.c.l.b16 %v5101
    %v5833 = vunpack.c.h.b16 %v5101
    %v5834 = vunpack.c.l.b16 %v5102
    %v5835 = vunpack.c.h.b16 %v5102
    %v5836 = vunpack.c.l.b16 %v5103
    %v5837 = vunpack.c.h.b16 %v5103
    %v5838 = vunpack.c.l.b16 %v5104
    %v5839 = vunpack.c.h.b16 %v5104
    %v5840 = vunpack.c.l.b16 %v5105
    %v5841 = vunpack.c.h.b16 %v5105
    %v5842 = vunpack.c.l.b16 %v5106
    %v5843 = vunpack.c.h.b16 %v5106
    %v5844 = vunpack.c.l.b16 %v5107
    %v5845 = vunpack.c.h.b16 %v5107
    %v5846 = vunpack.c.l.b16 %v5108
    %v5847 = vunpack.c.h.b16 %v5108
    %v5848 = vunpack.c.l.b16 %v5109
    %v5849 = vunpack.c.h.b16 %v5109
    %v5850 = vunpack.c.l.b16 %v5110
    %v5851 = vunpack.c.h.b16 %v5110
    %v5852 = vunpack.c.l.b16 %v5111
    %v5853 = vunpack.c.h.b16 %v5111
    %v5854 = vunpack.c.l.b16 %v5112
    %v5855 = vunpack.c.h.b16 %v5112
    %v5856 = vunpack.c.l.b16 %v5113
    %v5857 = vunpack.c.h.b16 %v5113
    %v5858 = vunpack.c.l.b16 %v5114
    %v5859 = vunpack.c.h.b16 %v5114
    %v5860 = vunpack.c.l.b16 %v5115
    %v5861 = vunpack.c.h.b16 %v5115
    %v5862 = vunpack.c.l.b16 %v5116
    %v5863 = vunpack.c.h.b16 %v5116
    %v5864 = vunpack.c.l.b16 %v5117
    %v5865 = vunpack.c.h.b16 %v5117
    %v5866 = vunpack.c.l.b16 %v5118
    %v5867 = vunpack.c.h.b16 %v5118
    %v5868 = vunpack.c.l.b16 %v5119
    %v5869 = vunpack.c.h.b16 %v5119
    %v5870 = vunpack.c.l.b16 %v5120
    %v5871 = vunpack.c.h.b16 %v5120
    %v5872 = vunpack.c.l.b16 %v5121
    %v5873 = vunpack.c.h.b16 %v5121
    %v5874 = vunpack.c.l.b16 %v5122
    %v5875 = vunpack.c.h.b16 %v5122
    %v5876 = vunpack.c.l.b16 %v5123
    %v5877 = vunpack.c.h.b16 %v5123
    %v5878 = vunpack.c.l.b16 %v5124
    %v5879 = vunpack.c.h.b16 %v5124
    %v5880 = vunpack.c.l.b16 %v5125
    %v5881 = vunpack.c.h.b16 %v5125
    %v5882 = vunpack.c.l.b16 %v5126
    %v5883 = vunpack.c.h.b16 %v5126
    %v5884 = vunpack.c.l.b16 %v5127
    %v5885 = vunpack.c.h.b16 %v5127
    %v5886 = vunpack.c.l.b16 %v5128
    %v5887 = vunpack.c.h.b16 %v5128
    %v5888 = vunpack.c.l.b16 %v5129
    %v5889 = vunpack.c.h.b16 %v5129
    %v5890 = vunpack.c.l.b16 %v5130
    %v5891 = vunpack.c.h.b16 %v5130
    %v5892 = vunpack.c.l.b16 %v5131
    %v5893 = vunpack.c.h.b16 %v5131
    %v5894 = vunpack.c.l.b16 %v5132
    %v5895 = vunpack.c.h.b16 %v5132
    %v5896 = vunpack.c.l.b16 %v5133
    %v5897 = vunpack.c.h.b16 %v5133
    %v5898 = vunpack.c.l.b16 %v5134
    %v5899 = vunpack.c.h.b16 %v5134
    %v5900 = vunpack.c.l.b16 %v5135
    %v5901 = vunpack.c.h.b16 %v5135
    %v5902 = vunpack.c.l.b16 %v5136
    %v5903 = vunpack.c.h.b16 %v5136
    %v5904 = vunpack.c.l.b16 %v5137
    %v5905 = vunpack.c.h.b16 %v5137
    %v5906 = vpack.c.b16 %v5402, %v5394
    %v5907 = vpack.c.b16 %v5403, %v5395
    %v5908 = vpack.c.b16 %v5404, %v5396
    %v5909 = vpack.c.b16 %v5405, %v5397
    %v5910 = vpack.c.b16 %v5406, %v5398
    %v5911 = vpack.c.b16 %v5407, %v5399
    %v5912 = vpack.c.b16 %v5408, %v5400
    %v5913 = vpack.c.b16 %v5409, %v5401
    %v5914 = vpack.c.b16 %v5418, %v5410
    %v5915 = vpack.c.b16 %v5419, %v5411
    %v5916 = vpack.c.b16 %v5420, %v5412
    %v5917 = vpack.c.b16 %v5421, %v5413
    %v5918 = vpack.c.b16 %v5422, %v5414
    %v5919 = vpack.c.b16 %v5423, %v5415
    %v5920 = vpack.c.b16 %v5424, %v5416
    %v5921 = vpack.c.b16 %v5425, %v5417
    %v5922 = vpack.c.b16 %v5434, %v5426
    %v5923 = vpack.c.b16 %v5435, %v5427
    %v5924 = vpack.c.b16 %v5436, %v5428
    %v5925 = vpack.c.b16 %v5437, %v5429
    %v5926 = vpack.c.b16 %v5438, %v5430
    %v5927 = vpack.c.b16 %v5439, %v5431
    %v5928 = vpack.c.b16 %v5440, %v5432
    %v5929 = vpack.c.b16 %v5441, %v5433
    %v5930 = vpack.c.b16 %v5450, %v5442
    %v5931 = vpack.c.b16 %v5451, %v5443
    %v5932 = vpack.c.b16 %v5452, %v5444
    %v5933 = vpack.c.b16 %v5453, %v5445
    %v5934 = vpack.c.b16 %v5454, %v5446
    %v5935 = vpack.c.b16 %v5455, %v5447
    %v5936 = vpack.c.b16 %v5456, %v5448
    %v5937 = vpack.c.b16 %v5457, %v5449
    %v5938 = vpack.c.b16 %v5466, %v5458
    %v5939 = vpack.c.b16 %v5467, %v5459
    %v5940 = vpack.c.b16 %v5468, %v5460
    %v5941 = vpack.c.b16 %v5469, %v5461
    %v5942 = vpack.c.b16 %v5470, %v5462
    %v5943 = vpack.c.b16 %v5471, %v5463
    %v5944 = vpack.c.b16 %v5472, %v5464
    %v5945 = vpack.c.b16 %v5473, %v5465
    %v5946 = vpack.c.b16 %v5482, %v5474
    %v5947 = vpack.c.b16 %v5483, %v5475
    %v5948 = vpack.c.b16 %v5484, %v5476
    %v5949 = vpack.c.b16 %v5485, %v5477
    %v5950 = vpack.c.b16 %v5486, %v5478
    %v5951 = vpack.c.b16 %v5487, %v5479
    %v5952 = vpack.c.b16 %v5488, %v5480
    %v5953 = vpack.c.b16 %v5489, %v5481
    %v5954 = vpack.c.b16 %v5498, %v5490
    %v5955 = vpack.c.b16 %v5499, %v5491
    %v5956 = vpack.c.b16 %v5500, %v5492
    %v5957 = vpack.c.b16 %v5501, %v5493
    %v5958 = vpack.c.b16 %v5502, %v5494
    %v5959 = vpack.c.b16 %v5503, %v5495
    %v5960 = vpack.c.b16 %v5504, %v5496
    %v5961 = vpack.c.b16 %v5505, %v5497
    %v5962 = vpack.c.b16 %v5514, %v5506
    %v5963 = vpack.c.b16 %v5515, %v5507
    %v5964 = vpack.c.b16 %v5516, %v5508
    %v5965 = vpack.c.b16 %v5517, %v5509
    %v5966 = vpack.c.b16 %v5518, %v5510
    %v5967 = vpack.c.b16 %v5519, %v5511
    %v5968 = vpack.c.b16 %v5520, %v5512
    %v5969 = vpack.c.b16 %v5521, %v5513
    %v5970 = vpack.c.b16 %v5530, %v5522
    %v5971 = vpack.c.b16 %v5531, %v5523
    %v5972 = vpack.c.b16 %v5532, %v5524
    %v5973 = vpack.c.b16 %v5533, %v5525
    %v5974 = vpack.c.b16 %v5534, %v5526
    %v5975 = vpack.c.b16 %v5535, %v5527
    %v5976 = vpack.c.b16 %v5536, %v5528
    %v5977 = vpack.c.b16 %v5537, %v5529
    %v5978 = vpack.c.b16 %v5546, %v5538
    %v5979 = vpack.c.b16 %v5547, %v5539
    %v5980 = vpack.c.b16 %v5548, %v5540
    %v5981 = vpack.c.b16 %v5549, %v5541
    %v5982 = vpack.c.b16 %v5550, %v5542
    %v5983 = vpack.c.b16 %v5551, %v5543
    %v5984 = vpack.c.b16 %v5552, %v5544
    %v5985 = vpack.c.b16 %v5553, %v5545
    %v5986 = vpack.c.b16 %v5562, %v5554
    %v5987 = vpack.c.b16 %v5563, %v5555
    %v5988 = vpack.c.b16 %v5564, %v5556
    %v5989 = vpack.c.b16 %v5565, %v5557
    %v5990 = vpack.c.b16 %v5566, %v5558
    %v5991 = vpack.c.b16 %v5567, %v5559
    %v5992 = vpack.c.b16 %v5568, %v5560
    %v5993 = vpack.c.b16 %v5569, %v5561
    %v5994 = vpack.c.b16 %v5578, %v5570
    %v5995 = vpack.c.b16 %v5579, %v5571
    %v5996 = vpack.c.b16 %v5580, %v5572
    %v5997 = vpack.c.b16 %v5581, %v5573
    %v5998 = vpack.c.b16 %v5582, %v5574
    %v5999 = vpack.c.b16 %v5583, %v5575
    %v6000 = vpack.c.b16 %v5584, %v5576
    %v6001 = vpack.c.b16 %v5585, %v5577
    %v6002 = vpack.c.b16 %v5594, %v5586
    %v6003 = vpack.c.b16 %v5595, %v5587
    %v6004 = vpack.c.b16 %v5596, %v5588
    %v6005 = vpack.c.b16 %v5597, %v5589
    %v6006 = vpack.c.b16 %v5598, %v5590
    %v6007 = vpack.c.b16 %v5599, %v5591
    %v6008 = vpack.c.b16 %v5600, %v5592
    %v6009 = vpack.c.b16 %v5601, %v5593
    %v6010 = vpack.c.b16 %v5610, %v5602
    %v6011 = vpack.c.b16 %v5611, %v5603
    %v6012 = vpack.c.b16 %v5612, %v5604
    %v6013 = vpack.c.b16 %v5613, %v5605
    %v6014 = vpack.c.b16 %v5614, %v5606
    %v6015 = vpack.c.b16 %v5615, %v5607
    %v6016 = vpack.c.b16 %v5616, %v5608
    %v6017 = vpack.c.b16 %v5617, %v5609
    %v6018 = vpack.c.b16 %v5626, %v5618
    %v6019 = vpack.c.b16 %v5627, %v5619
    %v6020 = vpack.c.b16 %v5628, %v5620
    %v6021 = vpack.c.b16 %v5629, %v5621
    %v6022 = vpack.c.b16 %v5630, %v5622
    %v6023 = vpack.c.b16 %v5631, %v5623
    %v6024 = vpack.c.b16 %v5632, %v5624
    %v6025 = vpack.c.b16 %v5633, %v5625
    %v6026 = vpack.c.b16 %v5642, %v5634
    %v6027 = vpack.c.b16 %v5643, %v5635
    %v6028 = vpack.c.b16 %v5644, %v5636
    %v6029 = vpack.c.b16 %v5645, %v5637
    %v6030 = vpack.c.b16 %v5646, %v5638
    %v6031 = vpack.c.b16 %v5647, %v5639
    %v6032 = vpack.c.b16 %v5648, %v5640
    %v6033 = vpack.c.b16 %v5649, %v5641
    %v6034 = vpack.c.b16 %v5658, %v5650
    %v6035 = vpack.c.b16 %v5659, %v5651
    %v6036 = vpack.c.b16 %v5660, %v5652
    %v6037 = vpack.c.b16 %v5661, %v5653
    %v6038 = vpack.c.b16 %v5662, %v5654
    %v6039 = vpack.c.b16 %v5663, %v5655
    %v6040 = vpack.c.b16 %v5664, %v5656
    %v6041 = vpack.c.b16 %v5665, %v5657
    %v6042 = vpack.c.b16 %v5674, %v5666
    %v6043 = vpack.c.b16 %v5675, %v5667
    %v6044 = vpack.c.b16 %v5676, %v5668
    %v6045 = vpack.c.b16 %v5677, %v5669
    %v6046 = vpack.c.b16 %v5678, %v5670
    %v6047 = vpack.c.b16 %v5679, %v5671
    %v6048 = vpack.c.b16 %v5680, %v5672
    %v6049 = vpack.c.b16 %v5681, %v5673
    %v6050 = vpack.c.b16 %v5690, %v5682
    %v6051 = vpack.c.b16 %v5691, %v5683
    %v6052 = vpack.c.b16 %v5692, %v5684
    %v6053 = vpack.c.b16 %v5693, %v5685
    %v6054 = vpack.c.b16 %v5694, %v5686
    %v6055 = vpack.c.b16 %v5695, %v5687
    %v6056 = vpack.c.b16 %v5696, %v5688
    %v6057 = vpack.c.b16 %v5697, %v5689
    %v6058 = vpack.c.b16 %v5706, %v5698
    %v6059 = vpack.c.b16 %v5707, %v5699
    %v6060 = vpack.c.b16 %v5708, %v5700
    %v6061 = vpack.c.b16 %v5709, %v5701
    %v6062 = vpack.c.b16 %v5710, %v5702
    %v6063 = vpack.c.b16 %v5711, %v5703
    %v6064 = vpack.c.b16 %v5712, %v5704
    %v6065 = vpack.c.b16 %v5713, %v5705
    %v6066 = vpack.c.b16 %v5722, %v5714
    %v6067 = vpack.c.b16 %v5723, %v5715
    %v6068 = vpack.c.b16 %v5724, %v5716
    %v6069 = vpack.c.b16 %v5725, %v5717
    %v6070 = vpack.c.b16 %v5726, %v5718
    %v6071 = vpack.c.b16 %v5727, %v5719
    %v6072 = vpack.c.b16 %v5728, %v5720
    %v6073 = vpack.c.b16 %v5729, %v5721
    %v6074 = vpack.c.b16 %v5738, %v5730
    %v6075 = vpack.c.b16 %v5739, %v5731
    %v6076 = vpack.c.b16 %v5740, %v5732
    %v6077 = vpack.c.b16 %v5741, %v5733
    %v6078 = vpack.c.b16 %v5742, %v5734
    %v6079 = vpack.c.b16 %v5743, %v5735
    %v6080 = vpack.c.b16 %v5744, %v5736
    %v6081 = vpack.c.b16 %v5745, %v5737
    %v6082 = vpack.c.b16 %v5754, %v5746
    %v6083 = vpack.c.b16 %v5755, %v5747
    %v6084 = vpack.c.b16 %v5756, %v5748
    %v6085 = vpack.c.b16 %v5757, %v5749
    %v6086 = vpack.c.b16 %v5758, %v5750
    %v6087 = vpack.c.b16 %v5759, %v5751
    %v6088 = vpack.c.b16 %v5760, %v5752
    %v6089 = vpack.c.b16 %v5761, %v5753
    %v6090 = vpack.c.b16 %v5770, %v5762
    %v6091 = vpack.c.b16 %v5771, %v5763
    %v6092 = vpack.c.b16 %v5772, %v5764
    %v6093 = vpack.c.b16 %v5773, %v5765
    %v6094 = vpack.c.b16 %v5774, %v5766
    %v6095 = vpack.c.b16 %v5775, %v5767
    %v6096 = vpack.c.b16 %v5776, %v5768
    %v6097 = vpack.c.b16 %v5777, %v5769
    %v6098 = vpack.c.b16 %v5786, %v5778
    %v6099 = vpack.c.b16 %v5787, %v5779
    %v6100 = vpack.c.b16 %v5788, %v5780
    %v6101 = vpack.c.b16 %v5789, %v5781
    %v6102 = vpack.c.b16 %v5790, %v5782
    %v6103 = vpack.c.b16 %v5791, %v5783
    %v6104 = vpack.c.b16 %v5792, %v5784
    %v6105 = vpack.c.b16 %v5793, %v5785
    %v6106 = vpack.c.b16 %v5802, %v5794
    %v6107 = vpack.c.b16 %v5803, %v5795
    %v6108 = vpack.c.b16 %v5804, %v5796
    %v6109 = vpack.c.b16 %v5805, %v5797
    %v6110 = vpack.c.b16 %v5806, %v5798
    %v6111 = vpack.c.b16 %v5807, %v5799
    %v6112 = vpack.c.b16 %v5808, %v5800
    %v6113 = vpack.c.b16 %v5809, %v5801
    %v6114 = vpack.c.b16 %v5818, %v5810
    %v6115 = vpack.c.b16 %v5819, %v5811
    %v6116 = vpack.c.b16 %v5820, %v5812
    %v6117 = vpack.c.b16 %v5821, %v5813
    %v6118 = vpack.c.b16 %v5822, %v5814
    %v6119 = vpack.c.b16 %v5823, %v5815
    %v6120 = vpack.c.b16 %v5824, %v5816
    %v6121 = vpack.c.b16 %v5825, %v5817
    %v6122 = vpack.c.b16 %v5834, %v5826
    %v6123 = vpack.c.b16 %v5835, %v5827
    %v6124 = vpack.c.b16 %v5836, %v5828
    %v6125 = vpack.c.b16 %v5837, %v5829
    %v6126 = vpack.c.b16 %v5838, %v5830
    %v6127 = vpack.c.b16 %v5839, %v5831
    %v6128 = vpack.c.b16 %v5840, %v5832
    %v6129 = vpack.c.b16 %v5841, %v5833
    %v6130 = vpack.c.b16 %v5850, %v5842
    %v6131 = vpack.c.b16 %v5851, %v5843
    %v6132 = vpack.c.b16 %v5852, %v5844
    %v6133 = vpack.c.b16 %v5853, %v5845
    %v6134 = vpack.c.b16 %v5854, %v5846
    %v6135 = vpack.c.b16 %v5855, %v5847
    %v6136 = vpack.c.b16 %v5856, %v5848
    %v6137 = vpack.c.b16 %v5857, %v5849
    %v6138 = vpack.c.b16 %v5866, %v5858
    %v6139 = vpack.c.b16 %v5867, %v5859
    %v6140 = vpack.c.b16 %v5868, %v5860
    %v6141 = vpack.c.b16 %v5869, %v5861
    %v6142 = vpack.c.b16 %v5870, %v5862
    %v6143 = vpack.c.b16 %v5871, %v5863
    %v6144 = vpack.c.b16 %v5872, %v5864
    %v6145 = vpack.c.b16 %v5873, %v5865
    %v6146 = vpack.c.b16 %v5882, %v5874
    %v6147 = vpack.c.b16 %v5883, %v5875
    %v6148 = vpack.c.b16 %v5884, %v5876
    %v6149 = vpack.c.b16 %v5885, %v5877
    %v6150 = vpack.c.b16 %v5886, %v5878
    %v6151 = vpack.c.b16 %v5887, %v5879
    %v6152 = vpack.c.b16 %v5888, %v5880
    %v6153 = vpack.c.b16 %v5889, %v5881
    %v6154 = vpack.c.b16 %v5898, %v5890
    %v6155 = vpack.c.b16 %v5899, %v5891
    %v6156 = vpack.c.b16 %v5900, %v5892
    %v6157 = vpack.c.b16 %v5901, %v5893
    %v6158 = vpack.c.b16 %v5902, %v5894
    %v6159 = vpack.c.b16 %v5903, %v5895
    %v6160 = vpack.c.b16 %v5904, %v5896
    %v6161 = vpack.c.b16 %v5905, %v5897
    %6418 = vmatprep.subr.bf16.mxu0 %v5907
    %6419 = vmatpush1.bf16.msra.mxu0 %v5906
    %6420 = vmatprep.subr.bf16.mxu0 %v5915
    %6421 = vmatpush1.bf16.msra.mxu0 %v5914
    %6422 = vmatprep.subr.bf16.mxu0 %v5923
    %6423 = vmatpush1.bf16.msra.mxu0 %v5922
    %6424 = vmatprep.subr.bf16.mxu0 %v5931
    %6425 = vmatpush1.bf16.msra.mxu0 %v5930
    %6426 = vmatprep.subr.bf16.mxu0 %v5939
    %6427 = vmatpush1.bf16.msra.mxu0 %v5938
    %6428 = vmatprep.subr.bf16.mxu0 %v5947
    %6429 = vmatpush1.bf16.msra.mxu0 %v5946
    %6430 = vmatprep.subr.bf16.mxu0 %v5955
    %6431 = vmatpush1.bf16.msra.mxu0 %v5954
    %6432 = vmatprep.subr.bf16.mxu0 %v5963
    %6433 = vmatpush1.bf16.msra.mxu0 %v5962
    %6434 = vmatprep.subr.bf16.mxu0 %v5971
    %6435 = vmatpush1.bf16.msra.mxu0 %v5970
    %6436 = vmatprep.subr.bf16.mxu0 %v5979
    %6437 = vmatpush1.bf16.msra.mxu0 %v5978
    %6438 = vmatprep.subr.bf16.mxu0 %v5987
    %6439 = vmatpush1.bf16.msra.mxu0 %v5986
    %6440 = vmatprep.subr.bf16.mxu0 %v5995
    %6441 = vmatpush1.bf16.msra.mxu0 %v5994
    %6442 = vmatprep.subr.bf16.mxu0 %v6003
    %6443 = vmatpush1.bf16.msra.mxu0 %v6002
    %6444 = vmatprep.subr.bf16.mxu0 %v6011
    %6445 = vmatpush1.bf16.msra.mxu0 %v6010
    %6446 = vmatprep.subr.bf16.mxu0 %v6019
    %6447 = vmatpush1.bf16.msra.mxu0 %v6018
    %6448 = vmatprep.subr.bf16.mxu0 %v6027
    %6449 = vmatpush1.bf16.msra.mxu0 %v6026
    %6450 = vmatprep.mubr.bf16.mxu0 %v4879
    %6451 = vmatmul.mubr.bf16.gmra.mrb[0].mxu0 %v4878
    %v6452 = vpop.f32.mrb[0].mxu0
    %v6453 = vadd.f32 0.0, %v6452
    %v6454 = vpop.f32.mrb[0].mxu0
    %v6455 = vadd.f32 0.0, %v6454
    %v6456 = vpop.f32.mrb[0].mxu0
    %v6457 = vpop.f32.mrb[0].mxu0
    %6458 = vdwg.mxu0
    %6459 = vmatprep.subr.bf16.mxu0 %v6035
    %6460 = vmatpush1.bf16.msra.mxu0 %v6034
    %6461 = vmatprep.subr.bf16.mxu0 %v6043
    %6462 = vmatpush1.bf16.msra.mxu0 %v6042
    %6463 = vmatprep.subr.bf16.mxu0 %v6051
    %6464 = vmatpush1.bf16.msra.mxu0 %v6050
    %6465 = vmatprep.subr.bf16.mxu0 %v6059
    %6466 = vmatpush1.bf16.msra.mxu0 %v6058
    %6467 = vmatprep.subr.bf16.mxu0 %v6067
    %6468 = vmatpush1.bf16.msra.mxu0 %v6066
    %6469 = vmatprep.subr.bf16.mxu0 %v6075
    %6470 = vmatpush1.bf16.msra.mxu0 %v6074
    %6471 = vmatprep.subr.bf16.mxu0 %v6083
    %6472 = vmatpush1.bf16.msra.mxu0 %v6082
    %6473 = vmatprep.subr.bf16.mxu0 %v6091
    %6474 = vmatpush1.bf16.msra.mxu0 %v6090
    %6475 = vmatprep.subr.bf16.mxu0 %v6099
    %6476 = vmatpush1.bf16.msra.mxu0 %v6098
    %6477 = vmatprep.subr.bf16.mxu0 %v6107
    %6478 = vmatpush1.bf16.msra.mxu0 %v6106
    %6479 = vmatprep.subr.bf16.mxu0 %v6115
    %6480 = vmatpush1.bf16.msra.mxu0 %v6114
    %6481 = vmatprep.subr.bf16.mxu0 %v6123
    %6482 = vmatpush1.bf16.msra.mxu0 %v6122
    %6483 = vmatprep.subr.bf16.mxu0 %v6131
    %6484 = vmatpush1.bf16.msra.mxu0 %v6130
    %6485 = vmatprep.subr.bf16.mxu0 %v6139
    %6486 = vmatpush1.bf16.msra.mxu0 %v6138
    %6487 = vmatprep.subr.bf16.mxu0 %v6147
    %6488 = vmatpush1.bf16.msra.mxu0 %v6146
    %6489 = vmatprep.subr.bf16.mxu0 %v6155
    %6490 = vmatpush1.bf16.msra.mxu0 %v6154
    %6491 = vmatprep.mubr.bf16.mxu0 %v4881
    %6492 = vmatmul.mubr.bf16.gmra.mrb[0].mxu0 %v4880
    %v6493 = vpop.f32.mrb[0].mxu0
    %v6494 = vadd.f32 %v6453, %v6493
    %v6495 = vpop.f32.mrb[0].mxu0
    %v6496 = vadd.f32 %v6455, %v6495
    %v6497 = vpop.f32.mrb[0].mxu0
    %v6498 = vpop.f32.mrb[0].mxu0
    %6499 = vdwg.mxu0
    %6500 = vmatprep.subr.bf16.mxu0 %v5909
    %6501 = vmatpush1.bf16.msra.mxu0 %v5908
    %6502 = vmatprep.subr.bf16.mxu0 %v5917
    %6503 = vmatpush1.bf16.msra.mxu0 %v5916
    %6504 = vmatprep.subr.bf16.mxu0 %v5925
    %6505 = vmatpush1.bf16.msra.mxu0 %v5924
    %6506 = vmatprep.subr.bf16.mxu0 %v5933
    %6507 = vmatpush1.bf16.msra.mxu0 %v5932
    %6508 = vmatprep.subr.bf16.mxu0 %v5941
    %6509 = vmatpush1.bf16.msra.mxu0 %v5940
    %6510 = vmatprep.subr.bf16.mxu0 %v5949
    %6511 = vmatpush1.bf16.msra.mxu0 %v5948
    %6512 = vmatprep.subr.bf16.mxu0 %v5957
    %6513 = vmatpush1.bf16.msra.mxu0 %v5956
    %6514 = vmatprep.subr.bf16.mxu0 %v5965
    %6515 = vmatpush1.bf16.msra.mxu0 %v5964
    %6516 = vmatprep.subr.bf16.mxu0 %v5973
    %6517 = vmatpush1.bf16.msra.mxu0 %v5972
    %6518 = vmatprep.subr.bf16.mxu0 %v5981
    %6519 = vmatpush1.bf16.msra.mxu0 %v5980
    %6520 = vmatprep.subr.bf16.mxu0 %v5989
    %6521 = vmatpush1.bf16.msra.mxu0 %v5988
    %6522 = vmatprep.subr.bf16.mxu0 %v5997
    %6523 = vmatpush1.bf16.msra.mxu0 %v5996
    %6524 = vmatprep.subr.bf16.mxu0 %v6005
    %6525 = vmatpush1.bf16.msra.mxu0 %v6004
    %6526 = vmatprep.subr.bf16.mxu0 %v6013
    %6527 = vmatpush1.bf16.msra.mxu0 %v6012
    %6528 = vmatprep.subr.bf16.mxu0 %v6021
    %6529 = vmatpush1.bf16.msra.mxu0 %v6020
    %6530 = vmatprep.subr.bf16.mxu0 %v6029
    %6531 = vmatpush1.bf16.msra.mxu0 %v6028
    %6532 = vmatprep.mubr.bf16.mxu0 %v4879
    %6533 = vmatmul.mubr.bf16.gmra.mrb[0].mxu0 %v4878
    %v6534 = vpop.f32.mrb[0].mxu0
    %v6535 = vadd.f32 0.0, %v6534
    %v6536 = vpop.f32.mrb[0].mxu0
    %v6537 = vadd.f32 0.0, %v6536
    %v6538 = vpop.f32.mrb[0].mxu0
    %v6539 = vpop.f32.mrb[0].mxu0
    %6540 = vdwg.mxu0
    %6541 = vmatprep.subr.bf16.mxu0 %v6037
    %6542 = vmatpush1.bf16.msra.mxu0 %v6036
    %6543 = vmatprep.subr.bf16.mxu0 %v6045
    %6544 = vmatpush1.bf16.msra.mxu0 %v6044
    %6545 = vmatprep.subr.bf16.mxu0 %v6053
    %6546 = vmatpush1.bf16.msra.mxu0 %v6052
    %6547 = vmatprep.subr.bf16.mxu0 %v6061
    %6548 = vmatpush1.bf16.msra.mxu0 %v6060
    %6549 = vmatprep.subr.bf16.mxu0 %v6069
    %6550 = vmatpush1.bf16.msra.mxu0 %v6068
    %6551 = vmatprep.subr.bf16.mxu0 %v6077
    %6552 = vmatpush1.bf16.msra.mxu0 %v6076
    %6553 = vmatprep.subr.bf16.mxu0 %v6085
    %6554 = vmatpush1.bf16.msra.mxu0 %v6084
    %6555 = vmatprep.subr.bf16.mxu0 %v6093
    %6556 = vmatpush1.bf16.msra.mxu0 %v6092
    %6557 = vmatprep.subr.bf16.mxu0 %v6101
    %6558 = vmatpush1.bf16.msra.mxu0 %v6100
    %6559 = vmatprep.subr.bf16.mxu0 %v6109
    %6560 = vmatpush1.bf16.msra.mxu0 %v6108
    %6561 = vmatprep.subr.bf16.mxu0 %v6117
    %6562 = vmatpush1.bf16.msra.mxu0 %v6116
    %6563 = vmatprep.subr.bf16.mxu0 %v6125
    %6564 = vmatpush1.bf16.msra.mxu0 %v6124
    %6565 = vmatprep.subr.bf16.mxu0 %v6133
    %6566 = vmatpush1.bf16.msra.mxu0 %v6132
    %6567 = vmatprep.subr.bf16.mxu0 %v6141
    %6568 = vmatpush1.bf16.msra.mxu0 %v6140
    %6569 = vmatprep.subr.bf16.mxu0 %v6149
    %6570 = vmatpush1.bf16.msra.mxu0 %v6148
    %6571 = vmatprep.subr.bf16.mxu0 %v6157
    %6572 = vmatpush1.bf16.msra.mxu0 %v6156
    %6573 = vmatprep.mubr.bf16.mxu0 %v4881
    %6574 = vmatmul.mubr.bf16.gmra.mrb[0].mxu0 %v4880
    %v6575 = vpop.f32.mrb[0].mxu0
    %v6576 = vadd.f32 %v6535, %v6575
    %v6577 = vpop.f32.mrb[0].mxu0
    %v6578 = vadd.f32 %v6537, %v6577
    %v6579 = vpop.f32.mrb[0].mxu0
    %v6580 = vpop.f32.mrb[0].mxu0
    %6581 = vdwg.mxu0
    %6582 = vmatprep.subr.bf16.mxu0 %v5911
    %6583 = vmatpush1.bf16.msra.mxu0 %v5910
    %6584 = vmatprep.subr.bf16.mxu0 %v5919
    %6585 = vmatpush1.bf16.msra.mxu0 %v5918
    %6586 = vmatprep.subr.bf16.mxu0 %v5927
    %6587 = vmatpush1.bf16.msra.mxu0 %v5926
    %6588 = vmatprep.subr.bf16.mxu0 %v5935
    %6589 = vmatpush1.bf16.msra.mxu0 %v5934
    %6590 = vmatprep.subr.bf16.mxu0 %v5943
    %6591 = vmatpush1.bf16.msra.mxu0 %v5942
    %6592 = vmatprep.subr.bf16.mxu0 %v5951
    %6593 = vmatpush1.bf16.msra.mxu0 %v5950
    %6594 = vmatprep.subr.bf16.mxu0 %v5959
    %6595 = vmatpush1.bf16.msra.mxu0 %v5958
    %6596 = vmatprep.subr.bf16.mxu0 %v5967
    %6597 = vmatpush1.bf16.msra.mxu0 %v5966
    %6598 = vmatprep.subr.bf16.mxu0 %v5975
    %6599 = vmatpush1.bf16.msra.mxu0 %v5974
    %6600 = vmatprep.subr.bf16.mxu0 %v5983
    %6601 = vmatpush1.bf16.msra.mxu0 %v5982
    %6602 = vmatprep.subr.bf16.mxu0 %v5991
    %6603 = vmatpush1.bf16.msra.mxu0 %v5990
    %6604 = vmatprep.subr.bf16.mxu0 %v5999
    %6605 = vmatpush1.bf16.msra.mxu0 %v5998
    %6606 = vmatprep.subr.bf16.mxu0 %v6007
    %6607 = vmatpush1.bf16.msra.mxu0 %v6006
    %6608 = vmatprep.subr.bf16.mxu0 %v6015
    %6609 = vmatpush1.bf16.msra.mxu0 %v6014
    %6610 = vmatprep.subr.bf16.mxu0 %v6023
    %6611 = vmatpush1.bf16.msra.mxu0 %v6022
    %6612 = vmatprep.subr.bf16.mxu0 %v6031
    %6613 = vmatpush1.bf16.msra.mxu0 %v6030
    %6614 = vmatprep.mubr.bf16.mxu0 %v4879
    %6615 = vmatmul.mubr.bf16.gmra.mrb[0].mxu0 %v4878
    %v6616 = vpop.f32.mrb[0].mxu0
    %v6617 = vadd.f32 0.0, %v6616
    %v6618 = vpop.f32.mrb[0].mxu0
    %v6619 = vadd.f32 0.0, %v6618
    %v6620 = vpop.f32.mrb[0].mxu0
    %v6621 = vpop.f32.mrb[0].mxu0
    %6622 = vdwg.mxu0
    %6623 = vmatprep.subr.bf16.mxu0 %v6039
    %6624 = vmatpush1.bf16.msra.mxu0 %v6038
    %6625 = vmatprep.subr.bf16.mxu0 %v6047
    %6626 = vmatpush1.bf16.msra.mxu0 %v6046
    %6627 = vmatprep.subr.bf16.mxu0 %v6055
    %6628 = vmatpush1.bf16.msra.mxu0 %v6054
    %6629 = vmatprep.subr.bf16.mxu0 %v6063
    %6630 = vmatpush1.bf16.msra.mxu0 %v6062
    %6631 = vmatprep.subr.bf16.mxu0 %v6071
    %6632 = vmatpush1.bf16.msra.mxu0 %v6070
    %6633 = vmatprep.subr.bf16.mxu0 %v6079
    %6634 = vmatpush1.bf16.msra.mxu0 %v6078
    %6635 = vmatprep.subr.bf16.mxu0 %v6087
    %6636 = vmatpush1.bf16.msra.mxu0 %v6086
    %6637 = vmatprep.subr.bf16.mxu0 %v6095
    %6638 = vmatpush1.bf16.msra.mxu0 %v6094
    %6639 = vmatprep.subr.bf16.mxu0 %v6103
    %6640 = vmatpush1.bf16.msra.mxu0 %v6102
    %6641 = vmatprep.subr.bf16.mxu0 %v6111
    %6642 = vmatpush1.bf16.msra.mxu0 %v6110
    %6643 = vmatprep.subr.bf16.mxu0 %v6119
    %6644 = vmatpush1.bf16.msra.mxu0 %v6118
    %6645 = vmatprep.subr.bf16.mxu0 %v6127
    %6646 = vmatpush1.bf16.msra.mxu0 %v6126
    %6647 = vmatprep.subr.bf16.mxu0 %v6135
    %6648 = vmatpush1.bf16.msra.mxu0 %v6134
    %6649 = vmatprep.subr.bf16.mxu0 %v6143
    %6650 = vmatpush1.bf16.msra.mxu0 %v6142
    %6651 = vmatprep.subr.bf16.mxu0 %v6151
    %6652 = vmatpush1.bf16.msra.mxu0 %v6150
    %6653 = vmatprep.subr.bf16.mxu0 %v6159
    %6654 = vmatpush1.bf16.msra.mxu0 %v6158
    %6655 = vmatprep.mubr.bf16.mxu0 %v4881
    %6656 = vmatmul.mubr.bf16.gmra.mrb[0].mxu0 %v4880
    %v6657 = vpop.f32.mrb[0].mxu0
    %v6658 = vadd.f32 %v6617, %v6657
    %v6659 = vpop.f32.mrb[0].mxu0
    %v6660 = vadd.f32 %v6619, %v6659
    %v6661 = vpop.f32.mrb[0].mxu0
    %v6662 = vpop.f32.mrb[0].mxu0
    %6663 = vdwg.mxu0
    %6664 = vmatprep.subr.bf16.mxu0 %v5913
    %6665 = vmatpush1.bf16.msra.mxu0 %v5912
    %6666 = vmatprep.subr.bf16.mxu0 %v5921
    %6667 = vmatpush1.bf16.msra.mxu0 %v5920
    %6668 = vmatprep.subr.bf16.mxu0 %v5929
    %6669 = vmatpush1.bf16.msra.mxu0 %v5928
    %6670 = vmatprep.subr.bf16.mxu0 %v5937
    %6671 = vmatpush1.bf16.msra.mxu0 %v5936
    %6672 = vmatprep.subr.bf16.mxu0 %v5945
    %6673 = vmatpush1.bf16.msra.mxu0 %v5944
    %6674 = vmatprep.subr.bf16.mxu0 %v5953
    %6675 = vmatpush1.bf16.msra.mxu0 %v5952
    %6676 = vmatprep.subr.bf16.mxu0 %v5961
    %6677 = vmatpush1.bf16.msra.mxu0 %v5960
    %6678 = vmatprep.subr.bf16.mxu0 %v5969
    %6679 = vmatpush1.bf16.msra.mxu0 %v5968
    %6680 = vmatprep.subr.bf16.mxu0 %v5977
    %6681 = vmatpush1.bf16.msra.mxu0 %v5976
    %6682 = vmatprep.subr.bf16.mxu0 %v5985
    %6683 = vmatpush1.bf16.msra.mxu0 %v5984
    %6684 = vmatprep.subr.bf16.mxu0 %v5993
    %6685 = vmatpush1.bf16.msra.mxu0 %v5992
    %6686 = vmatprep.subr.bf16.mxu0 %v6001
    %6687 = vmatpush1.bf16.msra.mxu0 %v6000
    %6688 = vmatprep.subr.bf16.mxu0 %v6009
    %6689 = vmatpush1.bf16.msra.mxu0 %v6008
    %6690 = vmatprep.subr.bf16.mxu0 %v6017
    %6691 = vmatpush1.bf16.msra.mxu0 %v6016
    %6692 = vmatprep.subr.bf16.mxu0 %v6025
    %6693 = vmatpush1.bf16.msra.mxu0 %v6024
    %6694 = vmatprep.subr.bf16.mxu0 %v6033
    %6695 = vmatpush1.bf16.msra.mxu0 %v6032
    %6696 = vmatprep.mubr.bf16.mxu0 %v4879
    %6697 = vmatmul.mubr.bf16.gmra.mrb[0].mxu0 %v4878
    %v6698 = vpop.f32.mrb[0].mxu0
    %v6699 = vadd.f32 0.0, %v6698
    %v6700 = vpop.f32.mrb[0].mxu0
    %v6701 = vadd.f32 0.0, %v6700
    %v6702 = vpop.f32.mrb[0].mxu0
    %v6703 = vpop.f32.mrb[0].mxu0
    %6704 = vdwg.mxu0
    %6705 = vmatprep.subr.bf16.mxu0 %v6041
    %6706 = vmatpush1.bf16.msra.mxu0 %v6040
    %6707 = vmatprep.subr.bf16.mxu0 %v6049
    %6708 = vmatpush1.bf16.msra.mxu0 %v6048
    %6709 = vmatprep.subr.bf16.mxu0 %v6057
    %6710 = vmatpush1.bf16.msra.mxu0 %v6056
    %6711 = vmatprep.subr.bf16.mxu0 %v6065
    %6712 = vmatpush1.bf16.msra.mxu0 %v6064
    %6713 = vmatprep.subr.bf16.mxu0 %v6073
    %6714 = vmatpush1.bf16.msra.mxu0 %v6072
    %6715 = vmatprep.subr.bf16.mxu0 %v6081
    %6716 = vmatpush1.bf16.msra.mxu0 %v6080
    %6717 = vmatprep.subr.bf16.mxu0 %v6089
    %6718 = vmatpush1.bf16.msra.mxu0 %v6088
    %6719 = vmatprep.subr.bf16.mxu0 %v6097
    %6720 = vmatpush1.bf16.msra.mxu0 %v6096
    %6721 = vmatprep.subr.bf16.mxu0 %v6105
    %6722 = vmatpush1.bf16.msra.mxu0 %v6104
    %6723 = vmatprep.subr.bf16.mxu0 %v6113
    %6724 = vmatpush1.bf16.msra.mxu0 %v6112
    %6725 = vmatprep.subr.bf16.mxu0 %v6121
    %6726 = vmatpush1.bf16.msra.mxu0 %v6120
    %6727 = vmatprep.subr.bf16.mxu0 %v6129
    %6728 = vmatpush1.bf16.msra.mxu0 %v6128
    %6729 = vmatprep.subr.bf16.mxu0 %v6137
    %6730 = vmatpush1.bf16.msra.mxu0 %v6136
    %6731 = vmatprep.subr.bf16.mxu0 %v6145
    %6732 = vmatpush1.bf16.msra.mxu0 %v6144
    %6733 = vmatprep.subr.bf16.mxu0 %v6153
    %6734 = vmatpush1.bf16.msra.mxu0 %v6152
    %6735 = vmatprep.subr.bf16.mxu0 %v6161
    %6736 = vmatpush1.bf16.msra.mxu0 %v6160
    %6737 = vmatprep.mubr.bf16.mxu0 %v4881
    %6738 = vmatmul.mubr.bf16.gmra.mrb[0].mxu0 %v4880
    %v6739 = vpop.f32.mrb[0].mxu0
    %v6740 = vadd.f32 %v6699, %v6739
    %v6741 = vpop.f32.mrb[0].mxu0
    %v6742 = vadd.f32 %v6701, %v6741
    %v6743 = vpop.f32.mrb[0].mxu0
    %v6744 = vpop.f32.mrb[0].mxu0
    %6745 = vdwg.mxu0
    %v6746 = vtanh.pop %v6494
    %v6747 = vtanh.pop %v6496
    %v6748 = vtanh.pop %v6576
    %v6749 = vtanh.pop %v6578
    %v6750 = vtanh.pop %v6658
    %v6751 = vtanh.pop %v6660
    %v6752 = vtanh.pop %v6740
    %v6753 = vtanh.pop %v6742
    %v6762 = vcombine.low %v6746, %v6747
    %v6763 = vcombine.low %v6748, %v6749
    %v6765 = vunpack.c.l.s4 1983009808
    %v6766 = vunpack.c.0.s8 %v6765
    %v6767 = vlaneseq
    %v6768 = vshrl.u32 %v6767, 7
    %v6769 = vsub.s32 %v6766, %v6768
    %v6770 = vrot.slane %v6762, %v6769
    %v6772 = vunpack.c.l.s4 1983009808
    %v6773 = vunpack.c.0.s8 %v6772
    %v6774 = vlaneseq
    %v6775 = vshrl.u32 %v6774, 7
    %v6776 = vsub.s32 %v6773, %v6775
    %v6777 = vrot.slane %v6763, %v6776
    %v6778 = vcombine.low %v6770, %v6777
    %v6779 = vcombine.low %v6750, %v6751
    %v6780 = vcombine.low %v6752, %v6753
    %v6782 = vunpack.c.l.s4 1983009808
    %v6783 = vunpack.c.0.s8 %v6782
    %v6784 = vlaneseq
    %v6785 = vshrl.u32 %v6784, 7
    %v6786 = vsub.s32 %v6783, %v6785
    %v6787 = vrot.slane %v6779, %v6786
    %v6789 = vunpack.c.l.s4 1983009808
    %v6790 = vunpack.c.0.s8 %v6789
    %v6791 = vlaneseq
    %v6792 = vshrl.u32 %v6791, 7
    %v6793 = vsub.s32 %v6790, %v6792
    %v6794 = vrot.slane %v6780, %v6793
    %v6795 = vcombine.low %v6787, %v6794
    %6798 = vst [vmem:[#allocation18] sm:$0xff] %v6778
    %6799 = vst [vmem:[#allocation18 + $0x8] sm:$0xff] %v6795
    // Predicated region
    $region114: #{tpu_custom_call.1} parent=1 // pred_check
      _
    $region115: #{tpu_custom_call.1} parent=1 // pred_check_branch
      %6801 = sbr.rel (0) target = $region117
    $region116: #{tpu_custom_call.1} parent=1 // pred_region
      %s6803 = ssub.s32 32, 32
      %6804 = vsyncadd [#allocation4], %s6803
      %s6806 = sshll.u32 [#allocation17], 4
      %s6807 = int_to_ptr.vmem [resolvable:$true] %s6806
      %6809 = dma.vmem_to_hbm [thread:$0]  %s6807, 32, %s19, [#allocation4]
    $region117: #{tpu_custom_call.1} parent=1 // pred_fallthru
      _
    // Predicated region
    $region118: #{tpu_custom_call.1} parent=1 // pred_check
      _
    $region119: #{tpu_custom_call.1} parent=1 // pred_check_branch
      %6811 = sbr.rel (0) target = $region121
    $region120: #{tpu_custom_call.1} parent=1 // pred_region
      %s6813 = ssub.s32 256, 256
      %6814 = vsyncadd [#allocation19], %s6813
      %s6816 = sshll.u32 [#allocation18], 4
      %s6817 = int_to_ptr.vmem [resolvable:$true] %s6816
      %6819 = dma.vmem_to_hbm [thread:$0]  %s6817, 256, %s20, [#allocation19]
    $region121: #{tpu_custom_call.1} parent=1 // pred_fallthru
      _
    // Predicated region
    $region122: #{tpu_custom_call.1} parent=1 // pred_check
      _
    $region123: #{tpu_custom_call.1} parent=1 // pred_check_branch
      %6821 = sbr.rel (0) target = $region125
    $region124: #{tpu_custom_call.1} parent=1 // pred_region
      %6822 = dma.done [#allocation4], 32
    $region125: #{tpu_custom_call.1} parent=1 // pred_fallthru
      _
    // Predicated region
    $region126: #{tpu_custom_call.1} parent=1 // pred_check
      _
    $region127: #{tpu_custom_call.1} parent=1 // pred_check_branch
      %6824 = sbr.rel (0) target = $region129
    $region128: #{tpu_custom_call.1} parent=1 // pred_region
      %6825 = dma.done [#allocation19], 256
    $region129: #{tpu_custom_call.1} parent=1 // pred_fallthru
      _
    %6826 = vsyncpa [#allocation3], 1
    %6827 = vsyncpa [#allocation6], 1
    %6828 = vsyncpa [#allocation9], 1
    %6829 = vsyncpa [#allocation12], 1
    %6830 = vsyncpa [#allocation15], 1
    %6831 = vsyncpa [#allocation4], 1
    %6832 = vsyncpa [#allocation19], 1

</llo_original>
